<compile_context>
chip_gen: v6e
topology: v6e:2x2x1
jax: 0.10.0
libtpu: 0.0.40
codegen_flags: <defaults>
</compile_context>

<pallas_src>
import functools

import jax
import jax.numpy as jnp
import numpy as np
from jax import lax
from jax.experimental import pallas as pl
from jax.experimental.pallas import tpu as pltpu

BN_EPS = 1e-5


def _resblock_kernel(x_ref, w_ref, pc_ref, cmul_ref, out_ref, apad_ref, col_ref,
                     *, H, W, pad, bt, neg_slope):
    """Fused residual block for a block of `bt` batch elements.

    x_ref    : (bt, C, H*W)              input activations, spatial flattened into lanes
    w_ref    : (2, C, 9*C)               conv_1 (BN2-folded) / conv_2 weights, im2col layout
    pc_ref   : (4, C, 1)                 [bn1_scale, bn1_shift, bias1_folded, bias2]
    cmul_ref : (2, 1, H*W)               column-validity masks for dx = -1 / +1
    out_ref  : (bt, C, H*W)              output
    apad_ref : (C, pad + H*W + pad) f32  zero-edged flat scratch (one image at a time)
    col_ref  : (9*C, bt*H*W)             im2col operand scratch (matmul dtype)
    """
    C = x_ref.shape[1]
    HW = H * W

    def act(v):
        if neg_slope == 0.0:
            return jnp.maximum(v, 0.0)
        return jnp.where(v >= 0.0, v, neg_slope * v)

    # Zero the left/right halo strips once; every image and both convs reuse them.
    zpad = jnp.zeros((C, pad), jnp.float32)
    apad_ref[:, 0:pad] = zpad
    apad_ref[:, pad + HW:pad + HW + pad] = zpad

    cmul_m = cmul_ref[0]        # (1, HW) mask for dx = -1
    cmul_p = cmul_ref[1]        # (1, HW) mask for dx = +1

    def stage(a_img, b):
        """im2col-stage one (C, HW) f32 activation into columns [b*HW, (b+1)*HW)."""
        # Lane-aligned staging into the zero-edged scratch; the 9 taps are plain
        # shifted-window reads from it (zero halo covers the row wrap, the column
        # masks kill the horizontal wrap while writing the operand).
        apad_ref[:, pad:pad + HW] = a_img
        t = 0
        for dy in (-1, 0, 1):
            for dx in (-1, 0, 1):
                s = dy * W + dx
                win = apad_ref[:, pad + s:pad + s + HW]          # (C, HW) f32
                if dx == -1:
                    win = win * cmul_m
                elif dx == 1:
                    win = win * cmul_p
                col_ref[t * C:(t + 1) * C, b * HW:(b + 1) * HW] = win.astype(col_ref.dtype)
                t += 1

    def conv(idx, bias):
        # Single fused (C x 9C) @ (9C x bt*HW) MXU matmul, f32 accumulate, bias add.
        return jnp.dot(w_ref[idx], col_ref[...],
                       preferred_element_type=jnp.float32) + bias

    s1, t1 = pc_ref[0], pc_ref[1]            # (C, 1) folded BN1 scale / shift
    b1f, b2 = pc_ref[2], pc_ref[3]           # (C, 1) folded conv_1 bias (incl. BN2), conv_2 bias

    # ---- BN1 (folded) + activation -> im2col staging, per image ----
    for b in range(bt):
        a_b = act(x_ref[b].astype(jnp.float32) * s1 + t1)
        stage(a_b, b)
    h = conv(0, b1f)                          # conv_1 with BN2 folded in: (C, bt*HW) f32

    # ---- activation -> im2col staging -> conv_2 ----
    g = act(h)
    for b in range(bt):
        stage(g[:, b * HW:(b + 1) * HW], b)
    y = conv(1, b2)                           # (C, bt*HW) f32

    # ---- identity shortcut, lane-dense per-image stores ----
    for b in range(bt):
        out_ref[b] = (x_ref[b].astype(jnp.float32)
                      + y[:, b * HW:(b + 1) * HW]).astype(out_ref.dtype)


def residual_block_pallas(x_nchw, params, *, activate="relu",
                          matmul_dtype=jnp.bfloat16, batch_tile=None):
    """Forward pass of ResidualBlockClass (resample=None, output_dim == input_dim)."""
    B, C, H, W = x_nchw.shape
    HW = H * W
    pad = pl.cdiv(W + 1, 128) * 128       # lane-aligned halo covering the widest tap shift

    # Batch tile: amortize per-grid-step overhead, but keep >= 4 grid steps
    # (>= 2 per TensorCore on v7x) so DMA stays pipelined.
    if batch_tile is None:
        batch_tile = 1
        for bt in (8, 4, 2):
            if B % bt == 0 and B // bt >= 4:
                batch_tile = bt
                break
    assert B % batch_tile == 0, "batch_tile must divide the batch size"
    nblk = B // batch_tile

    # Fold inference-mode BatchNorm into per-channel scale / shift.
    s1 = params["bn1_gamma"] / jnp.sqrt(params["bn1_var"] + BN_EPS)
    t1 = params["bn1_beta"] - params["bn1_mean"] * s1
    s2 = params["bn2_gamma"] / jnp.sqrt(params["bn2_var"] + BN_EPS)
    t2 = params["bn2_beta"] - params["bn2_mean"] * s2

    # Fold BN2 into conv_1 (affine o linear is exact): w1' = s2*w1, b1' = s2*b1 + t2.
    w1f = params["w1"] * s2[:, None, None, None]
    b1f = s2 * params["b1"] + t2

    pc = jnp.stack([s1, t1, b1f, params["b2"]], axis=0)[:, :, None].astype(jnp.float32)

    # (Cout, Cin, 3, 3) -> (Cout, 9*Cin), tap-major in (ky, kx) order to match the
    # im2col row layout (row = t*C + ci with t = ky*3 + kx).
    def flat(w):
        co, ci, kh, kw = w.shape
        return jnp.transpose(w, (0, 2, 3, 1)).reshape(co, kh * kw * ci)

    w_stack = jnp.stack([flat(w1f), flat(params["w2"])], axis=0).astype(matmul_dtype)

    # Column-validity masks for horizontal tap offsets dx = -1 / +1 (kill row wrap).
    col = np.arange(W)
    cmul = np.stack([np.tile((col >= 1).astype(np.float32), H),
                     np.tile((col <= W - 2).astype(np.float32), H)])[:, None, :]
    cmul = jnp.asarray(cmul)                                          # (2, 1, HW) f32

    x_flat = x_nchw.reshape(B, C, HW)

    kernel = functools.partial(
        _resblock_kernel, H=H, W=W, pad=pad, bt=batch_tile,
        neg_slope=0.0 if activate == "relu" else 0.01)

    out_flat = pl.pallas_call(
        kernel,
        out_shape=jax.ShapeDtypeStruct((B, C, HW), x_nchw.dtype),
        grid_spec=pltpu.PrefetchScalarGridSpec(
            num_scalar_prefetch=0,
            grid=(nblk,),
            in_specs=[
                pl.BlockSpec((batch_tile, C, HW), lambda i: (i, 0, 0)),
                pl.BlockSpec((2, C, 9 * C), lambda i: (0, 0, 0)),     # VMEM-resident
                pl.BlockSpec((4, C, 1), lambda i: (0, 0, 0)),         # VMEM-resident
                pl.BlockSpec((2, 1, HW), lambda i: (0, 0, 0)),        # VMEM-resident
            ],
            out_specs=pl.BlockSpec((batch_tile, C, HW), lambda i: (i, 0, 0)),
            scratch_shapes=[
                pltpu.VMEM((C, pad + HW + pad), jnp.float32),          # padded activation
                pltpu.VMEM((9 * C, batch_tile * HW), matmul_dtype),    # im2col operand
            ],
        ),
        compiler_params=pltpu.CompilerParams(
            dimension_semantics=("parallel",)),
    )(x_flat, w_stack, pc, cmul)

    return out_flat.reshape(B, C, H, W)


def _reference(x, params, *, activate="relu"):
    """Pure-JAX reference (lax conv + inference BN) for correctness checking."""
    def bn(v, prefix):
        g = params[f"{prefix}_gamma"][None, :, None, None]
        b = params[f"{prefix}_beta"][None, :, None, None]
        m = params[f"{prefix}_mean"][None, :, None, None]
        var = params[f"{prefix}_var"][None, :, None, None]
        return (v - m) / jnp.sqrt(var + BN_EPS) * g + b

    def conv(v, w, b):
        y = lax.conv_general_dilated(
            v, w, window_strides=(1, 1), padding=[(1, 1), (1, 1)],
            dimension_numbers=("NCHW", "OIHW", "NCHW"),
            precision=lax.Precision.HIGHEST)
        return y + b[None, :, None, None]

    if activate == "relu":
        f = lambda v: jnp.maximum(v, 0.0)
    else:
        f = lambda v: jnp.where(v >= 0.0, v, 0.01 * v)

    h = f(bn(x, "bn1"))
    h = conv(h, params["w1"], params["b1"])
    h = f(bn(h, "bn2"))
    h = conv(h, params["w2"], params["b2"])
    return x + h


def init_params(key, dim):
    """Deterministic synthetic init matching nn.Conv2d / nn.BatchNorm2d shapes."""
    params = {}
    bound = 1.0 / np.sqrt(dim * 3 * 3)
    for name, shape in (("w1", (dim, dim, 3, 3)), ("w2", (dim, dim, 3, 3)),
                        ("b1", (dim,)), ("b2", (dim,))):
        key, k = jax.random.split(key)
        params[name] = jax.random.uniform(k, shape, jnp.float32, -bound, bound)
    for i in ("bn1", "bn2"):
        key, kg, kb, km, kv = jax.random.split(key, 5)
        params[f"{i}_gamma"] = jax.random.uniform(kg, (dim,), jnp.float32, 0.5, 1.5)
        params[f"{i}_beta"] = 0.1 * jax.random.normal(kb, (dim,), jnp.float32)
        params[f"{i}_mean"] = 0.1 * jax.random.normal(km, (dim,), jnp.float32)
        params[f"{i}_var"] = jax.random.uniform(kv, (dim,), jnp.float32, 0.5, 1.5)
    return params


if __name__ == "__main__":
    key = jax.random.PRNGKey(0)
    B, C, H, W = 8, 16, 16, 16          # input_dim == output_dim == 16, identity shortcut

    key, kx = jax.random.split(key)
    x = jax.random.normal(kx, (B, C, H, W), jnp.float32)   # NCHW, like the PyTorch module
    params = init_params(key, C)

    # Default path: bf16 MXU operands, f32 accumulate (loosened tolerance vs HIGHEST ref).
    for activate in ("relu", "leaky_relu"):
        out = jax.block_until_ready(residual_block_pallas(x, params, activate=activate))
        ref = jax.block_until_ready(_reference(x, params, activate=activate))
        np.testing.assert_allclose(np.asarray(out), np.asarray(ref), rtol=5e-2, atol=5e-2)

    # f32 MXU-operand path: tight check of the fused im2col / BN-folding logic.
    out = jax.block_until_ready(
        residual_block_pallas(x, params, activate="relu", matmul_dtype=jnp.float32))
    ref = jax.block_until_ready(_reference(x, params, activate="relu"))
    np.testing.assert_allclose(np.asarray(out), np.asarray(ref), rtol=1e-3, atol=1e-3)

    print("KERNEL_OK")
</pallas_src>

<mosaic_0001>
module attributes {stable_mosaic.version = 11 : i64} {
  func.func @_resblock_kernel(%arg0: i32, %arg1: memref<2x16x256xf32, #tpu.memory_space<vmem>>, %arg2: memref<2x16x144xbf16, #tpu.memory_space<vmem>>, %arg3: memref<4x16x1xf32, #tpu.memory_space<vmem>>, %arg4: memref<2x1x256xf32, #tpu.memory_space<vmem>>, %arg5: memref<2x16x256xf32, #tpu.memory_space<vmem>>, %arg6: memref<16x512xf32, #tpu.memory_space<vmem>>, %arg7: memref<144x512xbf16, #tpu.memory_space<vmem>>) attributes {dimension_semantics = [#tpu.dimension_semantics<parallel>], iteration_bounds = array<i64: 4>, scalar_prefetch = 0 : i64, scratch_operands = 2 : i64, tpu.core_type = #tpu.core_type<tc>, window_params = [{transform_indices = @transform_0, window_bounds = array<i64: 2, 16, 256>}, {pipeline_mode = #tpu.pipeline_mode<synchronous>, transform_indices = @transform_1, window_bounds = array<i64: 2, 16, 144>}, {pipeline_mode = #tpu.pipeline_mode<synchronous>, transform_indices = @transform_2, window_bounds = array<i64: 4, 16, 1>}, {pipeline_mode = #tpu.pipeline_mode<synchronous>, transform_indices = @transform_3, window_bounds = array<i64: 2, 1, 256>}, {transform_indices = @transform_4, window_bounds = array<i64: 2, 16, 256>}]} {
    %cst = arith.constant 0.000000e+00 : f32
    %0 = vector.broadcast %cst : f32 to vector<16x128xf32>
    %c0 = arith.constant 0 : index
    %c0_0 = arith.constant 0 : index
    %1 = vector.load %arg6[%c0, %c0_0] : memref<16x512xf32, #tpu.memory_space<vmem>>, vector<16x128xf32>
    tpu.vector_store %arg6[%c0, %c0_0], %0 {strides = array<i32>} : memref<16x512xf32, #tpu.memory_space<vmem>>, vector<16x128xf32>,
    %c0_1 = arith.constant 0 : index
    %c384 = arith.constant 384 : index
    %2 = vector.load %arg6[%c0_1, %c384] : memref<16x512xf32, #tpu.memory_space<vmem>>, vector<16x128xf32>
    tpu.vector_store %arg6[%c0_1, %c384], %0 {strides = array<i32>} : memref<16x512xf32, #tpu.memory_space<vmem>>, vector<16x128xf32>,
    %c0_2 = arith.constant 0 : index
    %c0_3 = arith.constant 0 : index
    %c0_4 = arith.constant 0 : index
    %3 = vector.load %arg4[%c0_2, %c0_3, %c0_4] : memref<2x1x256xf32, #tpu.memory_space<vmem>>, vector<1x1x256xf32>
    %4 = vector.shape_cast %3 : vector<1x1x256xf32> to vector<1x256xf32>
    %c1 = arith.constant 1 : index
    %c0_5 = arith.constant 0 : index
    %c0_6 = arith.constant 0 : index
    %5 = vector.load %arg4[%c1, %c0_5, %c0_6] : memref<2x1x256xf32, #tpu.memory_space<vmem>>, vector<1x1x256xf32>
    %6 = vector.shape_cast %5 : vector<1x1x256xf32> to vector<1x256xf32>
    %c0_7 = arith.constant 0 : index
    %c0_8 = arith.constant 0 : index
    %c0_9 = arith.constant 0 : index
    %7 = vector.load %arg3[%c0_7, %c0_8, %c0_9] : memref<4x16x1xf32, #tpu.memory_space<vmem>>, vector<1x16x1xf32>
    %8 = vector.shape_cast %7 : vector<1x16x1xf32> to vector<16x1xf32>
    %c1_10 = arith.constant 1 : index
    %c0_11 = arith.constant 0 : index
    %c0_12 = arith.constant 0 : index
    %9 = vector.load %arg3[%c1_10, %c0_11, %c0_12] : memref<4x16x1xf32, #tpu.memory_space<vmem>>, vector<1x16x1xf32>
    %10 = vector.shape_cast %9 : vector<1x16x1xf32> to vector<16x1xf32>
    %c2 = arith.constant 2 : index
    %c0_13 = arith.constant 0 : index
    %c0_14 = arith.constant 0 : index
    %11 = vector.load %arg3[%c2, %c0_13, %c0_14] : memref<4x16x1xf32, #tpu.memory_space<vmem>>, vector<1x16x1xf32>
    %12 = vector.shape_cast %11 : vector<1x16x1xf32> to vector<16x1xf32>
    %c3 = arith.constant 3 : index
    %c0_15 = arith.constant 0 : index
    %c0_16 = arith.constant 0 : index
    %13 = vector.load %arg3[%c3, %c0_15, %c0_16] : memref<4x16x1xf32, #tpu.memory_space<vmem>>, vector<1x16x1xf32>
    %14 = vector.shape_cast %13 : vector<1x16x1xf32> to vector<16x1xf32>
    %c0_17 = arith.constant 0 : index
    %c0_18 = arith.constant 0 : index
    %c0_19 = arith.constant 0 : index
    %15 = vector.load %arg1[%c0_17, %c0_18, %c0_19] : memref<2x16x256xf32, #tpu.memory_space<vmem>>, vector<1x16x256xf32>
    %16 = vector.shape_cast %15 : vector<1x16x256xf32> to vector<16x256xf32>
    %17 = vector.broadcast %8 : vector<16x1xf32> to vector<16x256xf32>
    %18 = arith.mulf %16, %17 : vector<16x256xf32>
    %19 = vector.broadcast %10 : vector<16x1xf32> to vector<16x256xf32>
    %20 = arith.addf %18, %19 : vector<16x256xf32>
    %cst_20 = arith.constant 0.000000e+00 : f32
    %21 = vector.broadcast %cst_20 : f32 to vector<16x256xf32>
    %22 = arith.maximumf %20, %21 : vector<16x256xf32>
    %c0_21 = arith.constant 0 : index
    %c128 = arith.constant 128 : index
    %23 = vector.load %arg6[%c0_21, %c128] : memref<16x512xf32, #tpu.memory_space<vmem>>, vector<16x256xf32>
    tpu.vector_store %arg6[%c0_21, %c128], %22 {strides = array<i32>} : memref<16x512xf32, #tpu.memory_space<vmem>>, vector<16x256xf32>,
    %c0_22 = arith.constant 0 : index
    %c111 = arith.constant 111 : index
    %24 = vector.load %arg6[%c0_22, %c111] : memref<16x512xf32, #tpu.memory_space<vmem>>, vector<16x256xf32>
    %25 = vector.broadcast %4 : vector<1x256xf32> to vector<16x256xf32>
    %26 = arith.mulf %24, %25 : vector<16x256xf32>
    %27 = arith.truncf %26 : vector<16x256xf32> to vector<16x256xbf16>
    %c0_23 = arith.constant 0 : index
    %c0_24 = arith.constant 0 : index
    %28 = vector.load %arg7[%c0_23, %c0_24] : memref<144x512xbf16, #tpu.memory_space<vmem>>, vector<16x256xbf16>
    tpu.vector_store %arg7[%c0_23, %c0_24], %27 {strides = array<i32>} : memref<144x512xbf16, #tpu.memory_space<vmem>>, vector<16x256xbf16>,
    %c0_25 = arith.constant 0 : index
    %c112 = arith.constant 112 : index
    %29 = vector.load %arg6[%c0_25, %c112] : memref<16x512xf32, #tpu.memory_space<vmem>>, vector<16x256xf32>
    %30 = arith.truncf %29 : vector<16x256xf32> to vector<16x256xbf16>
    %c16 = arith.constant 16 : index
    %c0_26 = arith.constant 0 : index
    %31 = vector.load %arg7[%c16, %c0_26] : memref<144x512xbf16, #tpu.memory_space<vmem>>, vector<16x256xbf16>
    tpu.vector_store %arg7[%c16, %c0_26], %30 {strides = array<i32>} : memref<144x512xbf16, #tpu.memory_space<vmem>>, vector<16x256xbf16>,
    %c0_27 = arith.constant 0 : index
    %c113 = arith.constant 113 : index
    %32 = vector.load %arg6[%c0_27, %c113] : memref<16x512xf32, #tpu.memory_space<vmem>>, vector<16x256xf32>
    %33 = vector.broadcast %6 : vector<1x256xf32> to vector<16x256xf32>
    %34 = arith.mulf %32, %33 : vector<16x256xf32>
    %35 = arith.truncf %34 : vector<16x256xf32> to vector<16x256xbf16>
    %c32 = arith.constant 32 : index
    %c0_28 = arith.constant 0 : index
    %36 = vector.load %arg7[%c32, %c0_28] : memref<144x512xbf16, #tpu.memory_space<vmem>>, vector<16x256xbf16>
    tpu.vector_store %arg7[%c32, %c0_28], %35 {strides = array<i32>} : memref<144x512xbf16, #tpu.memory_space<vmem>>, vector<16x256xbf16>,
    %c0_29 = arith.constant 0 : index
    %c127 = arith.constant 127 : index
    %37 = vector.load %arg6[%c0_29, %c127] : memref<16x512xf32, #tpu.memory_space<vmem>>, vector<16x256xf32>
    %38 = vector.broadcast %4 : vector<1x256xf32> to vector<16x256xf32>
    %39 = arith.mulf %37, %38 : vector<16x256xf32>
    %40 = arith.truncf %39 : vector<16x256xf32> to vector<16x256xbf16>
    %c48 = arith.constant 48 : index
    %c0_30 = arith.constant 0 : index
    %41 = vector.load %arg7[%c48, %c0_30] : memref<144x512xbf16, #tpu.memory_space<vmem>>, vector<16x256xbf16>
    tpu.vector_store %arg7[%c48, %c0_30], %40 {strides = array<i32>} : memref<144x512xbf16, #tpu.memory_space<vmem>>, vector<16x256xbf16>,
    %c0_31 = arith.constant 0 : index
    %c128_32 = arith.constant 128 : index
    %42 = vector.load %arg6[%c0_31, %c128_32] : memref<16x512xf32, #tpu.memory_space<vmem>>, vector<16x256xf32>
    %43 = arith.truncf %42 : vector<16x256xf32> to vector<16x256xbf16>
    %c64 = arith.constant 64 : index
    %c0_33 = arith.constant 0 : index
    %44 = vector.load %arg7[%c64, %c0_33] : memref<144x512xbf16, #tpu.memory_space<vmem>>, vector<16x256xbf16>
    tpu.vector_store %arg7[%c64, %c0_33], %43 {strides = array<i32>} : memref<144x512xbf16, #tpu.memory_space<vmem>>, vector<16x256xbf16>,
    %c0_34 = arith.constant 0 : index
    %c129 = arith.constant 129 : index
    %45 = vector.load %arg6[%c0_34, %c129] : memref<16x512xf32, #tpu.memory_space<vmem>>, vector<16x256xf32>
    %46 = vector.broadcast %6 : vector<1x256xf32> to vector<16x256xf32>
    %47 = arith.mulf %45, %46 : vector<16x256xf32>
    %48 = arith.truncf %47 : vector<16x256xf32> to vector<16x256xbf16>
    %c80 = arith.constant 80 : index
    %c0_35 = arith.constant 0 : index
    %49 = vector.load %arg7[%c80, %c0_35] : memref<144x512xbf16, #tpu.memory_space<vmem>>, vector<16x256xbf16>
    tpu.vector_store %arg7[%c80, %c0_35], %48 {strides = array<i32>} : memref<144x512xbf16, #tpu.memory_space<vmem>>, vector<16x256xbf16>,
    %c0_36 = arith.constant 0 : index
    %c143 = arith.constant 143 : index
    %50 = vector.load %arg6[%c0_36, %c143] : memref<16x512xf32, #tpu.memory_space<vmem>>, vector<16x256xf32>
    %51 = vector.broadcast %4 : vector<1x256xf32> to vector<16x256xf32>
    %52 = arith.mulf %50, %51 : vector<16x256xf32>
    %53 = arith.truncf %52 : vector<16x256xf32> to vector<16x256xbf16>
    %c96 = arith.constant 96 : index
    %c0_37 = arith.constant 0 : index
    %54 = vector.load %arg7[%c96, %c0_37] : memref<144x512xbf16, #tpu.memory_space<vmem>>, vector<16x256xbf16>
    tpu.vector_store %arg7[%c96, %c0_37], %53 {strides = array<i32>} : memref<144x512xbf16, #tpu.memory_space<vmem>>, vector<16x256xbf16>,
    %c0_38 = arith.constant 0 : index
    %c144 = arith.constant 144 : index
    %55 = vector.load %arg6[%c0_38, %c144] : memref<16x512xf32, #tpu.memory_space<vmem>>, vector<16x256xf32>
    %56 = arith.truncf %55 : vector<16x256xf32> to vector<16x256xbf16>
    %c112_39 = arith.constant 112 : index
    %c0_40 = arith.constant 0 : index
    %57 = vector.load %arg7[%c112_39, %c0_40] : memref<144x512xbf16, #tpu.memory_space<vmem>>, vector<16x256xbf16>
    tpu.vector_store %arg7[%c112_39, %c0_40], %56 {strides = array<i32>} : memref<144x512xbf16, #tpu.memory_space<vmem>>, vector<16x256xbf16>,
    %c0_41 = arith.constant 0 : index
    %c145 = arith.constant 145 : index
    %58 = vector.load %arg6[%c0_41, %c145] : memref<16x512xf32, #tpu.memory_space<vmem>>, vector<16x256xf32>
    %59 = vector.broadcast %6 : vector<1x256xf32> to vector<16x256xf32>
    %60 = arith.mulf %58, %59 : vector<16x256xf32>
    %61 = arith.truncf %60 : vector<16x256xf32> to vector<16x256xbf16>
    %c128_42 = arith.constant 128 : index
    %c0_43 = arith.constant 0 : index
    %62 = vector.load %arg7[%c128_42, %c0_43] : memref<144x512xbf16, #tpu.memory_space<vmem>>, vector<16x256xbf16>
    tpu.vector_store %arg7[%c128_42, %c0_43], %61 {strides = array<i32>} : memref<144x512xbf16, #tpu.memory_space<vmem>>, vector<16x256xbf16>,
    %c1_44 = arith.constant 1 : index
    %c0_45 = arith.constant 0 : index
    %c0_46 = arith.constant 0 : index
    %63 = vector.load %arg1[%c1_44, %c0_45, %c0_46] : memref<2x16x256xf32, #tpu.memory_space<vmem>>, vector<1x16x256xf32>
    %64 = vector.shape_cast %63 : vector<1x16x256xf32> to vector<16x256xf32>
    %65 = vector.broadcast %8 : vector<16x1xf32> to vector<16x256xf32>
    %66 = arith.mulf %64, %65 : vector<16x256xf32>
    %67 = vector.broadcast %10 : vector<16x1xf32> to vector<16x256xf32>
    %68 = arith.addf %66, %67 : vector<16x256xf32>
    %cst_47 = arith.constant 0.000000e+00 : f32
    %69 = vector.broadcast %cst_47 : f32 to vector<16x256xf32>
    %70 = arith.maximumf %68, %69 : vector<16x256xf32>
    %c0_48 = arith.constant 0 : index
    %c128_49 = arith.constant 128 : index
    %71 = vector.load %arg6[%c0_48, %c128_49] : memref<16x512xf32, #tpu.memory_space<vmem>>, vector<16x256xf32>
    tpu.vector_store %arg6[%c0_48, %c128_49], %70 {strides = array<i32>} : memref<16x512xf32, #tpu.memory_space<vmem>>, vector<16x256xf32>,
    %c0_50 = arith.constant 0 : index
    %c111_51 = arith.constant 111 : index
    %72 = vector.load %arg6[%c0_50, %c111_51] : memref<16x512xf32, #tpu.memory_space<vmem>>, vector<16x256xf32>
    %73 = vector.broadcast %4 : vector<1x256xf32> to vector<16x256xf32>
    %74 = arith.mulf %72, %73 : vector<16x256xf32>
    %75 = arith.truncf %74 : vector<16x256xf32> to vector<16x256xbf16>
    %c0_52 = arith.constant 0 : index
    %c256 = arith.constant 256 : index
    %76 = vector.load %arg7[%c0_52, %c256] : memref<144x512xbf16, #tpu.memory_space<vmem>>, vector<16x256xbf16>
    tpu.vector_store %arg7[%c0_52, %c256], %75 {strides = array<i32>} : memref<144x512xbf16, #tpu.memory_space<vmem>>, vector<16x256xbf16>,
    %c0_53 = arith.constant 0 : index
    %c112_54 = arith.constant 112 : index
    %77 = vector.load %arg6[%c0_53, %c112_54] : memref<16x512xf32, #tpu.memory_space<vmem>>, vector<16x256xf32>
    %78 = arith.truncf %77 : vector<16x256xf32> to vector<16x256xbf16>
    %c16_55 = arith.constant 16 : index
    %c256_56 = arith.constant 256 : index
    %79 = vector.load %arg7[%c16_55, %c256_56] : memref<144x512xbf16, #tpu.memory_space<vmem>>, vector<16x256xbf16>
    tpu.vector_store %arg7[%c16_55, %c256_56], %78 {strides = array<i32>} : memref<144x512xbf16, #tpu.memory_space<vmem>>, vector<16x256xbf16>,
    %c0_57 = arith.constant 0 : index
    %c113_58 = arith.constant 113 : index
    %80 = vector.load %arg6[%c0_57, %c113_58] : memref<16x512xf32, #tpu.memory_space<vmem>>, vector<16x256xf32>
    %81 = vector.broadcast %6 : vector<1x256xf32> to vector<16x256xf32>
    %82 = arith.mulf %80, %81 : vector<16x256xf32>
    %83 = arith.truncf %82 : vector<16x256xf32> to vector<16x256xbf16>
    %c32_59 = arith.constant 32 : index
    %c256_60 = arith.constant 256 : index
    %84 = vector.load %arg7[%c32_59, %c256_60] : memref<144x512xbf16, #tpu.memory_space<vmem>>, vector<16x256xbf16>
    tpu.vector_store %arg7[%c32_59, %c256_60], %83 {strides = array<i32>} : memref<144x512xbf16, #tpu.memory_space<vmem>>, vector<16x256xbf16>,
    %c0_61 = arith.constant 0 : index
    %c127_62 = arith.constant 127 : index
    %85 = vector.load %arg6[%c0_61, %c127_62] : memref<16x512xf32, #tpu.memory_space<vmem>>, vector<16x256xf32>
    %86 = vector.broadcast %4 : vector<1x256xf32> to vector<16x256xf32>
    %87 = arith.mulf %85, %86 : vector<16x256xf32>
    %88 = arith.truncf %87 : vector<16x256xf32> to vector<16x256xbf16>
    %c48_63 = arith.constant 48 : index
    %c256_64 = arith.constant 256 : index
    %89 = vector.load %arg7[%c48_63, %c256_64] : memref<144x512xbf16, #tpu.memory_space<vmem>>, vector<16x256xbf16>
    tpu.vector_store %arg7[%c48_63, %c256_64], %88 {strides = array<i32>} : memref<144x512xbf16, #tpu.memory_space<vmem>>, vector<16x256xbf16>,
    %c0_65 = arith.constant 0 : index
    %c128_66 = arith.constant 128 : index
    %90 = vector.load %arg6[%c0_65, %c128_66] : memref<16x512xf32, #tpu.memory_space<vmem>>, vector<16x256xf32>
    %91 = arith.truncf %90 : vector<16x256xf32> to vector<16x256xbf16>
    %c64_67 = arith.constant 64 : index
    %c256_68 = arith.constant 256 : index
    %92 = vector.load %arg7[%c64_67, %c256_68] : memref<144x512xbf16, #tpu.memory_space<vmem>>, vector<16x256xbf16>
    tpu.vector_store %arg7[%c64_67, %c256_68], %91 {strides = array<i32>} : memref<144x512xbf16, #tpu.memory_space<vmem>>, vector<16x256xbf16>,
    %c0_69 = arith.constant 0 : index
    %c129_70 = arith.constant 129 : index
    %93 = vector.load %arg6[%c0_69, %c129_70] : memref<16x512xf32, #tpu.memory_space<vmem>>, vector<16x256xf32>
    %94 = vector.broadcast %6 : vector<1x256xf32> to vector<16x256xf32>
    %95 = arith.mulf %93, %94 : vector<16x256xf32>
    %96 = arith.truncf %95 : vector<16x256xf32> to vector<16x256xbf16>
    %c80_71 = arith.constant 80 : index
    %c256_72 = arith.constant 256 : index
    %97 = vector.load %arg7[%c80_71, %c256_72] : memref<144x512xbf16, #tpu.memory_space<vmem>>, vector<16x256xbf16>
    tpu.vector_store %arg7[%c80_71, %c256_72], %96 {strides = array<i32>} : memref<144x512xbf16, #tpu.memory_space<vmem>>, vector<16x256xbf16>,
    %c0_73 = arith.constant 0 : index
    %c143_74 = arith.constant 143 : index
    %98 = vector.load %arg6[%c0_73, %c143_74] : memref<16x512xf32, #tpu.memory_space<vmem>>, vector<16x256xf32>
    %99 = vector.broadcast %4 : vector<1x256xf32> to vector<16x256xf32>
    %100 = arith.mulf %98, %99 : vector<16x256xf32>
    %101 = arith.truncf %100 : vector<16x256xf32> to vector<16x256xbf16>
    %c96_75 = arith.constant 96 : index
    %c256_76 = arith.constant 256 : index
    %102 = vector.load %arg7[%c96_75, %c256_76] : memref<144x512xbf16, #tpu.memory_space<vmem>>, vector<16x256xbf16>
    tpu.vector_store %arg7[%c96_75, %c256_76], %101 {strides = array<i32>} : memref<144x512xbf16, #tpu.memory_space<vmem>>, vector<16x256xbf16>,
    %c0_77 = arith.constant 0 : index
    %c144_78 = arith.constant 144 : index
    %103 = vector.load %arg6[%c0_77, %c144_78] : memref<16x512xf32, #tpu.memory_space<vmem>>, vector<16x256xf32>
    %104 = arith.truncf %103 : vector<16x256xf32> to vector<16x256xbf16>
    %c112_79 = arith.constant 112 : index
    %c256_80 = arith.constant 256 : index
    %105 = vector.load %arg7[%c112_79, %c256_80] : memref<144x512xbf16, #tpu.memory_space<vmem>>, vector<16x256xbf16>
    tpu.vector_store %arg7[%c112_79, %c256_80], %104 {strides = array<i32>} : memref<144x512xbf16, #tpu.memory_space<vmem>>, vector<16x256xbf16>,
    %c0_81 = arith.constant 0 : index
    %c145_82 = arith.constant 145 : index
    %106 = vector.load %arg6[%c0_81, %c145_82] : memref<16x512xf32, #tpu.memory_space<vmem>>, vector<16x256xf32>
    %107 = vector.broadcast %6 : vector<1x256xf32> to vector<16x256xf32>
    %108 = arith.mulf %106, %107 : vector<16x256xf32>
    %109 = arith.truncf %108 : vector<16x256xf32> to vector<16x256xbf16>
    %c128_83 = arith.constant 128 : index
    %c256_84 = arith.constant 256 : index
    %110 = vector.load %arg7[%c128_83, %c256_84] : memref<144x512xbf16, #tpu.memory_space<vmem>>, vector<16x256xbf16>
    tpu.vector_store %arg7[%c128_83, %c256_84], %109 {strides = array<i32>} : memref<144x512xbf16, #tpu.memory_space<vmem>>, vector<16x256xbf16>,
    %c0_85 = arith.constant 0 : index
    %c0_86 = arith.constant 0 : index
    %c0_87 = arith.constant 0 : index
    %111 = vector.load %arg2[%c0_85, %c0_86, %c0_87] : memref<2x16x144xbf16, #tpu.memory_space<vmem>>, vector<1x16x144xbf16>
    %112 = vector.shape_cast %111 : vector<1x16x144xbf16> to vector<16x144xbf16>
    %c0_88 = arith.constant 0 : index
    %c0_89 = arith.constant 0 : index
    %113 = vector.load %arg7[%c0_88, %c0_89] : memref<144x512xbf16, #tpu.memory_space<vmem>>, vector<144x512xbf16>
    %cst_90 = arith.constant dense<0.000000e+00> : vector<16x512xf32>
    %114 = tpu.matmul %112, %113, %cst_90 {dimension_numbers = #tpu.dot_dimension_numbers<[1], [0], [0], [1], [0, 0, 1, 1], [], []>} : vector<16x144xbf16>, vector<144x512xbf16>, vector<16x512xf32> -> vector<16x512xf32>
    %115 = vector.broadcast %12 : vector<16x1xf32> to vector<16x512xf32>
    %116 = arith.addf %114, %115 : vector<16x512xf32>
    %cst_91 = arith.constant 0.000000e+00 : f32
    %117 = vector.broadcast %cst_91 : f32 to vector<16x512xf32>
    %118 = arith.maximumf %116, %117 : vector<16x512xf32>
    %119 = vector.extract_strided_slice %118 {offsets = [0, 0], sizes = [16, 256], strides = [1, 1]} : vector<16x512xf32> to vector<16x256xf32>
    %c0_92 = arith.constant 0 : index
    %c128_93 = arith.constant 128 : index
    %120 = vector.load %arg6[%c0_92, %c128_93] : memref<16x512xf32, #tpu.memory_space<vmem>>, vector<16x256xf32>
    tpu.vector_store %arg6[%c0_92, %c128_93], %119 {strides = array<i32>} : memref<16x512xf32, #tpu.memory_space<vmem>>, vector<16x256xf32>,
    %c0_94 = arith.constant 0 : index
    %c111_95 = arith.constant 111 : index
    %121 = vector.load %arg6[%c0_94, %c111_95] : memref<16x512xf32, #tpu.memory_space<vmem>>, vector<16x256xf32>
    %122 = vector.broadcast %4 : vector<1x256xf32> to vector<16x256xf32>
    %123 = arith.mulf %121, %122 : vector<16x256xf32>
    %124 = arith.truncf %123 : vector<16x256xf32> to vector<16x256xbf16>
    %c0_96 = arith.constant 0 : index
    %c0_97 = arith.constant 0 : index
    %125 = vector.load %arg7[%c0_96, %c0_97] : memref<144x512xbf16, #tpu.memory_space<vmem>>, vector<16x256xbf16>
    tpu.vector_store %arg7[%c0_96, %c0_97], %124 {strides = array<i32>} : memref<144x512xbf16, #tpu.memory_space<vmem>>, vector<16x256xbf16>,
    %c0_98 = arith.constant 0 : index
    %c112_99 = arith.constant 112 : index
    %126 = vector.load %arg6[%c0_98, %c112_99] : memref<16x512xf32, #tpu.memory_space<vmem>>, vector<16x256xf32>
    %127 = arith.truncf %126 : vector<16x256xf32> to vector<16x256xbf16>
    %c16_100 = arith.constant 16 : index
    %c0_101 = arith.constant 0 : index
    %128 = vector.load %arg7[%c16_100, %c0_101] : memref<144x512xbf16, #tpu.memory_space<vmem>>, vector<16x256xbf16>
    tpu.vector_store %arg7[%c16_100, %c0_101], %127 {strides = array<i32>} : memref<144x512xbf16, #tpu.memory_space<vmem>>, vector<16x256xbf16>,
    %c0_102 = arith.constant 0 : index
    %c113_103 = arith.constant 113 : index
    %129 = vector.load %arg6[%c0_102, %c113_103] : memref<16x512xf32, #tpu.memory_space<vmem>>, vector<16x256xf32>
    %130 = vector.broadcast %6 : vector<1x256xf32> to vector<16x256xf32>
    %131 = arith.mulf %129, %130 : vector<16x256xf32>
    %132 = arith.truncf %131 : vector<16x256xf32> to vector<16x256xbf16>
    %c32_104 = arith.constant 32 : index
    %c0_105 = arith.constant 0 : index
    %133 = vector.load %arg7[%c32_104, %c0_105] : memref<144x512xbf16, #tpu.memory_space<vmem>>, vector<16x256xbf16>
    tpu.vector_store %arg7[%c32_104, %c0_105], %132 {strides = array<i32>} : memref<144x512xbf16, #tpu.memory_space<vmem>>, vector<16x256xbf16>,
    %c0_106 = arith.constant 0 : index
    %c127_107 = arith.constant 127 : index
    %134 = vector.load %arg6[%c0_106, %c127_107] : memref<16x512xf32, #tpu.memory_space<vmem>>, vector<16x256xf32>
    %135 = vector.broadcast %4 : vector<1x256xf32> to vector<16x256xf32>
    %136 = arith.mulf %134, %135 : vector<16x256xf32>
    %137 = arith.truncf %136 : vector<16x256xf32> to vector<16x256xbf16>
    %c48_108 = arith.constant 48 : index
    %c0_109 = arith.constant 0 : index
    %138 = vector.load %arg7[%c48_108, %c0_109] : memref<144x512xbf16, #tpu.memory_space<vmem>>, vector<16x256xbf16>
    tpu.vector_store %arg7[%c48_108, %c0_109], %137 {strides = array<i32>} : memref<144x512xbf16, #tpu.memory_space<vmem>>, vector<16x256xbf16>,
    %c0_110 = arith.constant 0 : index
    %c128_111 = arith.constant 128 : index
    %139 = vector.load %arg6[%c0_110, %c128_111] : memref<16x512xf32, #tpu.memory_space<vmem>>, vector<16x256xf32>
    %140 = arith.truncf %139 : vector<16x256xf32> to vector<16x256xbf16>
    %c64_112 = arith.constant 64 : index
    %c0_113 = arith.constant 0 : index
    %141 = vector.load %arg7[%c64_112, %c0_113] : memref<144x512xbf16, #tpu.memory_space<vmem>>, vector<16x256xbf16>
    tpu.vector_store %arg7[%c64_112, %c0_113], %140 {strides = array<i32>} : memref<144x512xbf16, #tpu.memory_space<vmem>>, vector<16x256xbf16>,
    %c0_114 = arith.constant 0 : index
    %c129_115 = arith.constant 129 : index
    %142 = vector.load %arg6[%c0_114, %c129_115] : memref<16x512xf32, #tpu.memory_space<vmem>>, vector<16x256xf32>
    %143 = vector.broadcast %6 : vector<1x256xf32> to vector<16x256xf32>
    %144 = arith.mulf %142, %143 : vector<16x256xf32>
    %145 = arith.truncf %144 : vector<16x256xf32> to vector<16x256xbf16>
    %c80_116 = arith.constant 80 : index
    %c0_117 = arith.constant 0 : index
    %146 = vector.load %arg7[%c80_116, %c0_117] : memref<144x512xbf16, #tpu.memory_space<vmem>>, vector<16x256xbf16>
    tpu.vector_store %arg7[%c80_116, %c0_117], %145 {strides = array<i32>} : memref<144x512xbf16, #tpu.memory_space<vmem>>, vector<16x256xbf16>,
    %c0_118 = arith.constant 0 : index
    %c143_119 = arith.constant 143 : index
    %147 = vector.load %arg6[%c0_118, %c143_119] : memref<16x512xf32, #tpu.memory_space<vmem>>, vector<16x256xf32>
    %148 = vector.broadcast %4 : vector<1x256xf32> to vector<16x256xf32>
    %149 = arith.mulf %147, %148 : vector<16x256xf32>
    %150 = arith.truncf %149 : vector<16x256xf32> to vector<16x256xbf16>
    %c96_120 = arith.constant 96 : index
    %c0_121 = arith.constant 0 : index
    %151 = vector.load %arg7[%c96_120, %c0_121] : memref<144x512xbf16, #tpu.memory_space<vmem>>, vector<16x256xbf16>
    tpu.vector_store %arg7[%c96_120, %c0_121], %150 {strides = array<i32>} : memref<144x512xbf16, #tpu.memory_space<vmem>>, vector<16x256xbf16>,
    %c0_122 = arith.constant 0 : index
    %c144_123 = arith.constant 144 : index
    %152 = vector.load %arg6[%c0_122, %c144_123] : memref<16x512xf32, #tpu.memory_space<vmem>>, vector<16x256xf32>
    %153 = arith.truncf %152 : vector<16x256xf32> to vector<16x256xbf16>
    %c112_124 = arith.constant 112 : index
    %c0_125 = arith.constant 0 : index
    %154 = vector.load %arg7[%c112_124, %c0_125] : memref<144x512xbf16, #tpu.memory_space<vmem>>, vector<16x256xbf16>
    tpu.vector_store %arg7[%c112_124, %c0_125], %153 {strides = array<i32>} : memref<144x512xbf16, #tpu.memory_space<vmem>>, vector<16x256xbf16>,
    %c0_126 = arith.constant 0 : index
    %c145_127 = arith.constant 145 : index
    %155 = vector.load %arg6[%c0_126, %c145_127] : memref<16x512xf32, #tpu.memory_space<vmem>>, vector<16x256xf32>
    %156 = vector.broadcast %6 : vector<1x256xf32> to vector<16x256xf32>
    %157 = arith.mulf %155, %156 : vector<16x256xf32>
    %158 = arith.truncf %157 : vector<16x256xf32> to vector<16x256xbf16>
    %c128_128 = arith.constant 128 : index
    %c0_129 = arith.constant 0 : index
    %159 = vector.load %arg7[%c128_128, %c0_129] : memref<144x512xbf16, #tpu.memory_space<vmem>>, vector<16x256xbf16>
    tpu.vector_store %arg7[%c128_128, %c0_129], %158 {strides = array<i32>} : memref<144x512xbf16, #tpu.memory_space<vmem>>, vector<16x256xbf16>,
    %160 = vector.extract_strided_slice %118 {offsets = [0, 256], sizes = [16, 256], strides = [1, 1]} : vector<16x512xf32> to vector<16x256xf32>
    %c0_130 = arith.constant 0 : index
    %c128_131 = arith.constant 128 : index
    %161 = vector.load %arg6[%c0_130, %c128_131] : memref<16x512xf32, #tpu.memory_space<vmem>>, vector<16x256xf32>
    tpu.vector_store %arg6[%c0_130, %c128_131], %160 {strides = array<i32>} : memref<16x512xf32, #tpu.memory_space<vmem>>, vector<16x256xf32>,
    %c0_132 = arith.constant 0 : index
    %c111_133 = arith.constant 111 : index
    %162 = vector.load %arg6[%c0_132, %c111_133] : memref<16x512xf32, #tpu.memory_space<vmem>>, vector<16x256xf32>
    %163 = vector.broadcast %4 : vector<1x256xf32> to vector<16x256xf32>
    %164 = arith.mulf %162, %163 : vector<16x256xf32>
    %165 = arith.truncf %164 : vector<16x256xf32> to vector<16x256xbf16>
    %c0_134 = arith.constant 0 : index
    %c256_135 = arith.constant 256 : index
    %166 = vector.load %arg7[%c0_134, %c256_135] : memref<144x512xbf16, #tpu.memory_space<vmem>>, vector<16x256xbf16>
    tpu.vector_store %arg7[%c0_134, %c256_135], %165 {strides = array<i32>} : memref<144x512xbf16, #tpu.memory_space<vmem>>, vector<16x256xbf16>,
    %c0_136 = arith.constant 0 : index
    %c112_137 = arith.constant 112 : index
    %167 = vector.load %arg6[%c0_136, %c112_137] : memref<16x512xf32, #tpu.memory_space<vmem>>, vector<16x256xf32>
    %168 = arith.truncf %167 : vector<16x256xf32> to vector<16x256xbf16>
    %c16_138 = arith.constant 16 : index
    %c256_139 = arith.constant 256 : index
    %169 = vector.load %arg7[%c16_138, %c256_139] : memref<144x512xbf16, #tpu.memory_space<vmem>>, vector<16x256xbf16>
    tpu.vector_store %arg7[%c16_138, %c256_139], %168 {strides = array<i32>} : memref<144x512xbf16, #tpu.memory_space<vmem>>, vector<16x256xbf16>,
    %c0_140 = arith.constant 0 : index
    %c113_141 = arith.constant 113 : index
    %170 = vector.load %arg6[%c0_140, %c113_141] : memref<16x512xf32, #tpu.memory_space<vmem>>, vector<16x256xf32>
    %171 = vector.broadcast %6 : vector<1x256xf32> to vector<16x256xf32>
    %172 = arith.mulf %170, %171 : vector<16x256xf32>
    %173 = arith.truncf %172 : vector<16x256xf32> to vector<16x256xbf16>
    %c32_142 = arith.constant 32 : index
    %c256_143 = arith.constant 256 : index
    %174 = vector.load %arg7[%c32_142, %c256_143] : memref<144x512xbf16, #tpu.memory_space<vmem>>, vector<16x256xbf16>
    tpu.vector_store %arg7[%c32_142, %c256_143], %173 {strides = array<i32>} : memref<144x512xbf16, #tpu.memory_space<vmem>>, vector<16x256xbf16>,
    %c0_144 = arith.constant 0 : index
    %c127_145 = arith.constant 127 : index
    %175 = vector.load %arg6[%c0_144, %c127_145] : memref<16x512xf32, #tpu.memory_space<vmem>>, vector<16x256xf32>
    %176 = vector.broadcast %4 : vector<1x256xf32> to vector<16x256xf32>
    %177 = arith.mulf %175, %176 : vector<16x256xf32>
    %178 = arith.truncf %177 : vector<16x256xf32> to vector<16x256xbf16>
    %c48_146 = arith.constant 48 : index
    %c256_147 = arith.constant 256 : index
    %179 = vector.load %arg7[%c48_146, %c256_147] : memref<144x512xbf16, #tpu.memory_space<vmem>>, vector<16x256xbf16>
    tpu.vector_store %arg7[%c48_146, %c256_147], %178 {strides = array<i32>} : memref<144x512xbf16, #tpu.memory_space<vmem>>, vector<16x256xbf16>,
    %c0_148 = arith.constant 0 : index
    %c128_149 = arith.constant 128 : index
    %180 = vector.load %arg6[%c0_148, %c128_149] : memref<16x512xf32, #tpu.memory_space<vmem>>, vector<16x256xf32>
    %181 = arith.truncf %180 : vector<16x256xf32> to vector<16x256xbf16>
    %c64_150 = arith.constant 64 : index
    %c256_151 = arith.constant 256 : index
    %182 = vector.load %arg7[%c64_150, %c256_151] : memref<144x512xbf16, #tpu.memory_space<vmem>>, vector<16x256xbf16>
    tpu.vector_store %arg7[%c64_150, %c256_151], %181 {strides = array<i32>} : memref<144x512xbf16, #tpu.memory_space<vmem>>, vector<16x256xbf16>,
    %c0_152 = arith.constant 0 : index
    %c129_153 = arith.constant 129 : index
    %183 = vector.load %arg6[%c0_152, %c129_153] : memref<16x512xf32, #tpu.memory_space<vmem>>, vector<16x256xf32>
    %184 = vector.broadcast %6 : vector<1x256xf32> to vector<16x256xf32>
    %185 = arith.mulf %183, %184 : vector<16x256xf32>
    %186 = arith.truncf %185 : vector<16x256xf32> to vector<16x256xbf16>
    %c80_154 = arith.constant 80 : index
    %c256_155 = arith.constant 256 : index
    %187 = vector.load %arg7[%c80_154, %c256_155] : memref<144x512xbf16, #tpu.memory_space<vmem>>, vector<16x256xbf16>
    tpu.vector_store %arg7[%c80_154, %c256_155], %186 {strides = array<i32>} : memref<144x512xbf16, #tpu.memory_space<vmem>>, vector<16x256xbf16>,
    %c0_156 = arith.constant 0 : index
    %c143_157 = arith.constant 143 : index
    %188 = vector.load %arg6[%c0_156, %c143_157] : memref<16x512xf32, #tpu.memory_space<vmem>>, vector<16x256xf32>
    %189 = vector.broadcast %4 : vector<1x256xf32> to vector<16x256xf32>
    %190 = arith.mulf %188, %189 : vector<16x256xf32>
    %191 = arith.truncf %190 : vector<16x256xf32> to vector<16x256xbf16>
    %c96_158 = arith.constant 96 : index
    %c256_159 = arith.constant 256 : index
    %192 = vector.load %arg7[%c96_158, %c256_159] : memref<144x512xbf16, #tpu.memory_space<vmem>>, vector<16x256xbf16>
    tpu.vector_store %arg7[%c96_158, %c256_159], %191 {strides = array<i32>} : memref<144x512xbf16, #tpu.memory_space<vmem>>, vector<16x256xbf16>,
    %c0_160 = arith.constant 0 : index
    %c144_161 = arith.constant 144 : index
    %193 = vector.load %arg6[%c0_160, %c144_161] : memref<16x512xf32, #tpu.memory_space<vmem>>, vector<16x256xf32>
    %194 = arith.truncf %193 : vector<16x256xf32> to vector<16x256xbf16>
    %c112_162 = arith.constant 112 : index
    %c256_163 = arith.constant 256 : index
    %195 = vector.load %arg7[%c112_162, %c256_163] : memref<144x512xbf16, #tpu.memory_space<vmem>>, vector<16x256xbf16>
    tpu.vector_store %arg7[%c112_162, %c256_163], %194 {strides = array<i32>} : memref<144x512xbf16, #tpu.memory_space<vmem>>, vector<16x256xbf16>,
    %c0_164 = arith.constant 0 : index
    %c145_165 = arith.constant 145 : index
    %196 = vector.load %arg6[%c0_164, %c145_165] : memref<16x512xf32, #tpu.memory_space<vmem>>, vector<16x256xf32>
    %197 = vector.broadcast %6 : vector<1x256xf32> to vector<16x256xf32>
    %198 = arith.mulf %196, %197 : vector<16x256xf32>
    %199 = arith.truncf %198 : vector<16x256xf32> to vector<16x256xbf16>
    %c128_166 = arith.constant 128 : index
    %c256_167 = arith.constant 256 : index
    %200 = vector.load %arg7[%c128_166, %c256_167] : memref<144x512xbf16, #tpu.memory_space<vmem>>, vector<16x256xbf16>
    tpu.vector_store %arg7[%c128_166, %c256_167], %199 {strides = array<i32>} : memref<144x512xbf16, #tpu.memory_space<vmem>>, vector<16x256xbf16>,
    %c1_168 = arith.constant 1 : index
    %c0_169 = arith.constant 0 : index
    %c0_170 = arith.constant 0 : index
    %201 = vector.load %arg2[%c1_168, %c0_169, %c0_170] : memref<2x16x144xbf16, #tpu.memory_space<vmem>>, vector<1x16x144xbf16>
    %202 = vector.shape_cast %201 : vector<1x16x144xbf16> to vector<16x144xbf16>
    %c0_171 = arith.constant 0 : index
    %c0_172 = arith.constant 0 : index
    %203 = vector.load %arg7[%c0_171, %c0_172] : memref<144x512xbf16, #tpu.memory_space<vmem>>, vector<144x512xbf16>
    %cst_173 = arith.constant dense<0.000000e+00> : vector<16x512xf32>
    %204 = tpu.matmul %202, %203, %cst_173 {dimension_numbers = #tpu.dot_dimension_numbers<[1], [0], [0], [1], [0, 0, 1, 1], [], []>} : vector<16x144xbf16>, vector<144x512xbf16>, vector<16x512xf32> -> vector<16x512xf32>
    %205 = vector.broadcast %14 : vector<16x1xf32> to vector<16x512xf32>
    %206 = arith.addf %204, %205 : vector<16x512xf32>
    %c0_174 = arith.constant 0 : index
    %c0_175 = arith.constant 0 : index
    %c0_176 = arith.constant 0 : index
    %207 = vector.load %arg1[%c0_174, %c0_175, %c0_176] : memref<2x16x256xf32, #tpu.memory_space<vmem>>, vector<1x16x256xf32>
    %208 = vector.shape_cast %207 : vector<1x16x256xf32> to vector<16x256xf32>
    %209 = vector.extract_strided_slice %206 {offsets = [0, 0], sizes = [16, 256], strides = [1, 1]} : vector<16x512xf32> to vector<16x256xf32>
    %210 = arith.addf %208, %209 : vector<16x256xf32>
    %c0_177 = arith.constant 0 : index
    %c0_178 = arith.constant 0 : index
    %c0_179 = arith.constant 0 : index
    %211 = vector.load %arg5[%c0_177, %c0_178, %c0_179] : memref<2x16x256xf32, #tpu.memory_space<vmem>>, vector<1x16x256xf32>
    %212 = vector.shape_cast %211 : vector<1x16x256xf32> to vector<16x256xf32>
    %213 = vector.shape_cast %210 : vector<16x256xf32> to vector<1x16x256xf32>
    tpu.vector_store %arg5[%c0_177, %c0_178, %c0_179], %213 {strides = array<i32>} : memref<2x16x256xf32, #tpu.memory_space<vmem>>, vector<1x16x256xf32>,
    %c1_180 = arith.constant 1 : index
    %c0_181 = arith.constant 0 : index
    %c0_182 = arith.constant 0 : index
    %214 = vector.load %arg1[%c1_180, %c0_181, %c0_182] : memref<2x16x256xf32, #tpu.memory_space<vmem>>, vector<1x16x256xf32>
    %215 = vector.shape_cast %214 : vector<1x16x256xf32> to vector<16x256xf32>
    %216 = vector.extract_strided_slice %206 {offsets = [0, 256], sizes = [16, 256], strides = [1, 1]} : vector<16x512xf32> to vector<16x256xf32>
    %217 = arith.addf %215, %216 : vector<16x256xf32>
    %c1_183 = arith.constant 1 : index
    %c0_184 = arith.constant 0 : index
    %c0_185 = arith.constant 0 : index
    %218 = vector.load %arg5[%c1_183, %c0_184, %c0_185] : memref<2x16x256xf32, #tpu.memory_space<vmem>>, vector<1x16x256xf32>
    %219 = vector.shape_cast %218 : vector<1x16x256xf32> to vector<16x256xf32>
    %220 = vector.shape_cast %217 : vector<16x256xf32> to vector<1x16x256xf32>
    tpu.vector_store %arg5[%c1_183, %c0_184, %c0_185], %220 {strides = array<i32>} : memref<2x16x256xf32, #tpu.memory_space<vmem>>, vector<1x16x256xf32>,
    return
  }
  func.func @transform_0(%arg0: i32) -> (i32, i32, i32) {
    %c0_i32 = arith.constant 0 : i32
    %c0_i32_0 = arith.constant 0 : i32
    %c0_i32_1 = arith.constant 0 : i32
    return %arg0, %c0_i32, %c0_i32_0 : i32, i32, i32
  }
  func.func @transform_1(%arg0: i32) -> (i32, i32, i32) {
    %c0_i32 = arith.constant 0 : i32
    %c0_i32_0 = arith.constant 0 : i32
    %c0_i32_1 = arith.constant 0 : i32
    %c0_i32_2 = arith.constant 0 : i32
    return %c0_i32, %c0_i32_0, %c0_i32_1 : i32, i32, i32
  }
  func.func @transform_2(%arg0: i32) -> (i32, i32, i32) {
    %c0_i32 = arith.constant 0 : i32
    %c0_i32_0 = arith.constant 0 : i32
    %c0_i32_1 = arith.constant 0 : i32
    %c0_i32_2 = arith.constant 0 : i32
    return %c0_i32, %c0_i32_0, %c0_i32_1 : i32, i32, i32
  }
  func.func @transform_3(%arg0: i32) -> (i32, i32, i32) {
    %c0_i32 = arith.constant 0 : i32
    %c0_i32_0 = arith.constant 0 : i32
    %c0_i32_1 = arith.constant 0 : i32
    %c0_i32_2 = arith.constant 0 : i32
    return %c0_i32, %c0_i32_0, %c0_i32_1 : i32, i32, i32
  }
  func.func @transform_4(%arg0: i32) -> (i32, i32, i32) {
    %c0_i32 = arith.constant 0 : i32
    %c0_i32_0 = arith.constant 0 : i32
    %c0_i32_1 = arith.constant 0 : i32
    return %arg0, %c0_i32, %c0_i32_0 : i32, i32, i32
  }
}

</mosaic_0001>

<llo_original>
// kernel: tpu_custom_call.1
$region0: #{tpu_custom_call.1}
  #allocation0 [shape = 'u32[]', space=smem, size = 0x4, offset = 0x4, fixed_abs, tag = 'smem constant byte address 0x4 - core index']
  #allocation1 [shape = 'u32[144,128]{1,0:T(1,128)}', space=vmem, size = 0x12000, scoped, tag = 'internal scratch']
  #allocation2 [shape = 'f32[16,512]{1,0:T(8,128)}', space=vmem, size = 0x8000, scoped, tag = 'scratch operand']
  #allocation3 [shape = 'bf16[144,512]{1,0:T(8,128)(2,1)}', space=vmem, size = 0x24000, scoped, tag = 'scratch operand']
  %s0 = inlined_call_operand.hbm [shape: f32[8,16,256], index: 0, kind: input, shape index: {}]
  %s1 = inlined_call_operand.vmem [shape: bf16[2,16,144], index: 1, kind: input, shape index: {}]
  %s2 = inlined_call_operand.vmem [shape: f32[4,16,1], index: 2, kind: input, shape index: {}]
  %s3 = inlined_call_operand.vmem [shape: f32[2,1,256], index: 3, kind: input, shape index: {}]
  %s4 = inlined_call_operand.hbm [shape: f32[8,16,256], index: 4, kind: output, shape index: {}]
  %s5 = sld [smem:[#allocation0]]
  $region53: #{tpu_custom_call.1} parent=0
    _
  %s7 = ssub.s32 1, %s5
  %s8 = scalar_select 0, %s7, %s5
  $region1: #{tpu_custom_call.1} parent=0
    #allocation4 [shape = 'u8[65536]{0}', space=vmem, size = 0x10000, scoped, tag = 'input window, operand 0']
    #allocation5 [shape = 's32[2]{0}', space=sflag, size = 0x8, scoped, tag = 'scoped memory for tpu_custom_call.1']
    #allocation6 [shape = 's32[2]{0}', space=sflag, size = 0x8, scoped, tag = 'scoped memory for tpu_custom_call.1']
    #allocation7 [shape = 'u8[65536]{0}', space=vmem, size = 0x10000, scoped, tag = 'output window, operand 0']
    %9 = vsyncpa [#allocation5], 0
    %s10 = scalar_lea.sflag [#allocation5], 1
    %11 = vsyncpa %s10, 0
    %12 = vsyncpa [#allocation6], 0
    %s13 = scalar_lea.sflag [#allocation6], 1
    %14 = vsyncpa %s13, 0
    loop: start=0, step=1, limit=6
    $region2: #{tpu_custom_call.1} parent=1 // loop_pre_header
      _
    $region3: #{tpu_custom_call.1} parent=1 // loop_header
      %s16 = sphi 0, %s20
      %p17 = scmp.ge.s32.totalorder %s16, 6
      %s26 = sphi 0, %s28
      %s29 = sphi 0, %s26
      %s30 = sphi 0, %s29
      %s46 = sphi 0, %s30
      %s50 = sphi 0, %s50
      %s52 = sphi 0, %s50
      %s53 = sphi 0, %s52
      %s67 = sphi 0, %s53
      %s71 = sphi 0, %s71
      %s73 = sphi 0, %s71
      %s74 = sphi 0, %s73
      %s88 = sphi 0, %s74
      %s92 = sphi 0, %s92
      %s94 = sphi 0, %s92
      %s95 = sphi 0, %s94
      %s109 = sphi 0, %s95
      %s115 = sphi 0, %s117
      %s118 = sphi 0, %s115
      %s119 = sphi 0, %s118
      %s135 = sphi 0, %s119
    $region4: #{tpu_custom_call.1} parent=1 // loop_header_branch
      %19 = sbr.rel (%p17) target = $region8
    $region5: #{tpu_custom_call.1} parent=1 // loop_body
      %s21 = ssub.s32 %s16, 1
      %s22 = ssub.s32 %s16, 2
      %s23 = sadd.s32 %s16, 1
      %s24 = ssub.s32 %s16, %s23
      %p25 = scmp.eq.s32.totalorder %s24, 0
      %s27 = sadd.s32 %s26, 1
      %s28 = scalar_select %p25, %s26, %s27
      %p31 = pneg %p25
      %p32 = scmp.eq.s32.totalorder %s16, 3
      %p33 = por %p31, %p32
      %p34 = scmp.ne.s32.totalorder %s26, %s29
      %p35 = scmp.eq.s32.totalorder %s16, 0
      %p36 = por %p34, %p35
      %p37 = scmp.ne.s32.totalorder %s26, %s29
      %p38 = scmp.eq.s32.totalorder %s21, 3
      %p39 = por %p37, %p38
      %p40 = scmp.ne.s32.totalorder %s29, %s30
      %p41 = scmp.eq.s32.totalorder %s21, 0
      %p42 = por %p40, %p41
      %p43 = scmp.ne.s32.totalorder %s29, %s30
      %p44 = scmp.eq.s32.totalorder %s22, 3
      %p45 = por %p43, %p44
      %p47 = scmp.ne.s32.totalorder %s30, %s46
      %p48 = scmp.eq.s32.totalorder %s22, 0
      %p49 = por %p47, %p48
      %s51 = sadd.s32 %s50, 1
      %p54 = scmp.eq.s32.totalorder %s16, 3
      %p55 = scmp.ne.s32.totalorder %s50, %s52
      %p56 = scmp.eq.s32.totalorder %s16, 0
      %p57 = por %p55, %p56
      %p58 = scmp.ne.s32.totalorder %s50, %s52
      %p59 = scmp.eq.s32.totalorder %s21, 3
      %p60 = por %p58, %p59
      %p61 = scmp.ne.s32.totalorder %s52, %s53
      %p62 = scmp.eq.s32.totalorder %s21, 0
      %p63 = por %p61, %p62
      %p64 = scmp.ne.s32.totalorder %s52, %s53
      %p65 = scmp.eq.s32.totalorder %s22, 3
      %p66 = por %p64, %p65
      %p68 = scmp.ne.s32.totalorder %s53, %s67
      %p69 = scmp.eq.s32.totalorder %s22, 0
      %p70 = por %p68, %p69
      %s72 = sadd.s32 %s71, 1
      %p75 = scmp.eq.s32.totalorder %s16, 3
      %p76 = scmp.ne.s32.totalorder %s71, %s73
      %p77 = scmp.eq.s32.totalorder %s16, 0
      %p78 = por %p76, %p77
      %p79 = scmp.ne.s32.totalorder %s71, %s73
      %p80 = scmp.eq.s32.totalorder %s21, 3
      %p81 = por %p79, %p80
      %p82 = scmp.ne.s32.totalorder %s73, %s74
      %p83 = scmp.eq.s32.totalorder %s21, 0
      %p84 = por %p82, %p83
      %p85 = scmp.ne.s32.totalorder %s73, %s74
      %p86 = scmp.eq.s32.totalorder %s22, 3
      %p87 = por %p85, %p86
      %p89 = scmp.ne.s32.totalorder %s74, %s88
      %p90 = scmp.eq.s32.totalorder %s22, 0
      %p91 = por %p89, %p90
      %s93 = sadd.s32 %s92, 1
      %p96 = scmp.eq.s32.totalorder %s16, 3
      %p97 = scmp.ne.s32.totalorder %s92, %s94
      %p98 = scmp.eq.s32.totalorder %s16, 0
      %p99 = por %p97, %p98
      %p100 = scmp.ne.s32.totalorder %s92, %s94
      %p101 = scmp.eq.s32.totalorder %s21, 3
      %p102 = por %p100, %p101
      %p103 = scmp.ne.s32.totalorder %s94, %s95
      %p104 = scmp.eq.s32.totalorder %s21, 0
      %p105 = por %p103, %p104
      %p106 = scmp.ne.s32.totalorder %s94, %s95
      %p107 = scmp.eq.s32.totalorder %s22, 3
      %p108 = por %p106, %p107
      %p110 = scmp.ne.s32.totalorder %s95, %s109
      %p111 = scmp.eq.s32.totalorder %s22, 0
      %p112 = por %p110, %p111
      %s113 = ssub.s32 %s16, %s23
      %p114 = scmp.eq.s32.totalorder %s113, 0
      %s116 = sadd.s32 %s115, 1
      %s117 = scalar_select %p114, %s115, %s116
      %p120 = pneg %p114
      %p121 = scmp.eq.s32.totalorder %s16, 3
      %p122 = por %p120, %p121
      %p123 = scmp.ne.s32.totalorder %s115, %s118
      %p124 = scmp.eq.s32.totalorder %s16, 0
      %p125 = por %p123, %p124
      %p126 = scmp.ne.s32.totalorder %s115, %s118
      %p127 = scmp.eq.s32.totalorder %s21, 3
      %p128 = por %p126, %p127
      %p129 = scmp.ne.s32.totalorder %s118, %s119
      %p130 = scmp.eq.s32.totalorder %s21, 0
      %p131 = por %p129, %p130
      %p132 = scmp.ne.s32.totalorder %s118, %s119
      %p133 = scmp.eq.s32.totalorder %s22, 3
      %p134 = por %p132, %p133
      %p136 = scmp.ne.s32.totalorder %s119, %s135
      %p137 = scmp.eq.s32.totalorder %s22, 0
      %p138 = por %p136, %p137
      %p139 = scmp.le.s32.totalorder 1, %s16
      %p140 = scmp.lt.s32.totalorder %s16, 5
      %p141 = pnand %p139, %p140
      %p142 = pneg %p141
      // Predicated region
      $region9: #{tpu_custom_call.1} parent=5 // pred_check
        _
      $region10: #{tpu_custom_call.1} parent=5 // pred_check_branch
        %144 = sbr.rel (%p141) target = $region12
      $region11: #{tpu_custom_call.1} parent=5 // pred_region
        %s145 = ssub.s32 %s16, 1
        // Predicated region
        $region13: #{tpu_custom_call.1} parent=11 // pred_check
          %p146 = pneg %p63
        $region14: #{tpu_custom_call.1} parent=11 // pred_check_branch
          %148 = sbr.rel (%p146) target = $region16
        $region15: #{tpu_custom_call.1} parent=11 // pred_region
          _
        $region16: #{tpu_custom_call.1} parent=11 // pred_fallthru
          _
        // Predicated region
        $region17: #{tpu_custom_call.1} parent=11 // pred_check
          %p149 = pneg %p84
        $region18: #{tpu_custom_call.1} parent=11 // pred_check_branch
          %151 = sbr.rel (%p149) target = $region20
        $region19: #{tpu_custom_call.1} parent=11 // pred_region
          _
        $region20: #{tpu_custom_call.1} parent=11 // pred_fallthru
          _
        // Predicated region
        $region21: #{tpu_custom_call.1} parent=11 // pred_check
          %p152 = pneg %p105
        $region22: #{tpu_custom_call.1} parent=11 // pred_check_branch
          %154 = sbr.rel (%p152) target = $region24
        $region23: #{tpu_custom_call.1} parent=11 // pred_region
          _
        $region24: #{tpu_custom_call.1} parent=11 // pred_fallthru
          _
      $region12: #{tpu_custom_call.1} parent=5 // pred_fallthru
        _
      %p155 = scmp.lt.s32.totalorder %s16, 4
      // Predicated region
      $region25: #{tpu_custom_call.1} parent=5 // pred_check
        %p156 = pneg %p155
      $region26: #{tpu_custom_call.1} parent=5 // pred_check_branch
        %158 = sbr.rel (%p156) target = $region28
      $region27: #{tpu_custom_call.1} parent=5 // pred_region
        // Predicated region
        $region29: #{tpu_custom_call.1} parent=27 // pred_check
          %p159 = pneg %p36
        $region30: #{tpu_custom_call.1} parent=27 // pred_check_branch
          %161 = sbr.rel (%p159) target = $region32
        $region31: #{tpu_custom_call.1} parent=27 // pred_region
          %s162 = sand.u32 %s26, 1
          %s163 = scalar_lea.sflag [#allocation5], %s162
          %s164 = sand.u32 %s26, 1
          %s165 = smul.addr %s164, 64
          %s166 = scalar_lea.vmem [#allocation4], %s165
          %s167 = smul.u32 2, %s16
          %s169 = ssub.s32 1024, 1024
          %170 = vsyncadd %s163, %s169
          %s171 = smul.addr %s167, 4
          %s172 = smul.addr %s171, 128
          %s173 = scalar_lea.hbm %s0, %s172
          %s174 = sshll.u32 %s166, 4
          %s175 = int_to_ptr.vmem [resolvable:$true] %s174
          %180 = dma.hbm_to_vmem [thread:$0]  %s173, 1024, %s175, %s163, 256, 256, 16
        $region32: #{tpu_custom_call.1} parent=27 // pred_fallthru
          _
      $region28: #{tpu_custom_call.1} parent=5 // pred_fallthru
        _
      %p181 = scmp.le.s32.totalorder 1, %s16
      %p182 = scmp.lt.s32.totalorder %s16, 5
      %p183 = pnand %p181, %p182
      %p184 = pneg %p183
      // Predicated region
      $region33: #{tpu_custom_call.1} parent=5 // pred_check
        _
      $region34: #{tpu_custom_call.1} parent=5 // pred_check_branch
        %186 = sbr.rel (%p183) target = $region36
      $region35: #{tpu_custom_call.1} parent=5 // pred_region
        %s187 = ssub.s32 %s16, 1
        %s188 = sand.u32 %s29, 1
        %s189 = scalar_lea.sflag [#allocation5], %s188
        %s190 = sand.u32 %s29, 1
        %s191 = smul.addr %s190, 64
        %s192 = scalar_lea.vmem [#allocation4], %s191
        // Predicated region
        $region37: #{tpu_custom_call.1} parent=35 // pred_check
          %p193 = pneg %p42
        $region38: #{tpu_custom_call.1} parent=35 // pred_check_branch
          %195 = sbr.rel (%p193) target = $region40
        $region39: #{tpu_custom_call.1} parent=35 // pred_region
          %196 = dma.done %s189, 1024
        $region40: #{tpu_custom_call.1} parent=35 // pred_fallthru
          _
        %s197 = sand.u32 %s29, 1
        %s198 = scalar_lea.sflag [#allocation5], %s197
        %s199 = sand.u32 %s29, 1
        %s200 = smul.addr %s199, 64
        %s201 = scalar_lea.vmem [#allocation4], %s200
        %p202 = pneg %p42
        %p203 = pneg %p39
        %p204 = pneg %p63
        %p205 = pneg %p60
        %p206 = pneg %p84
        %p207 = pneg %p81
        %p208 = pneg %p105
        %p209 = pneg %p102
        %p210 = pneg %p131
        %p211 = pneg %p128
        %s212 = sand.u32 %s118, 1
        %s213 = scalar_lea.sflag [#allocation6], %s212
        %s214 = sand.u32 %s118, 1
        %s215 = smul.addr %s214, 64
        %s216 = scalar_lea.vmem [#allocation7], %s215
        %s217 = smul.u32 2, %s21
        %s218 = smul.u32 2, %s21
        %220 = vst [vmem:[#allocation2] sm:$0xff] 0.0
        %221 = vst [vmem:[#allocation2 + $0x20] sm:$0xff] 0.0
        %222 = vst [vmem:[#allocation2 + $0x18] sm:$0xff] 0.0
        %223 = vst [vmem:[#allocation2 + $0x38] sm:$0xff] 0.0
        %v224 = vld [vmem:[%s3] sm:$0x3]
        %s225 = scalar_lea.vmem %s3, 2
        %v226 = vld [vmem:[%s225] sm:$0x3]
        %v227 = vld [vmem:[%s2] sm:$0xff]
        %v228 = vld [vmem:[%s2 + $0x8] sm:$0xff]
        %s229 = scalar_lea.vmem %s2, 16
        %v230 = vld [vmem:[%s229] sm:$0xff]
        %v231 = vld [vmem:[%s229 + $0x8] sm:$0xff]
        %s232 = scalar_lea.vmem %s2, 32
        %v233 = vld [vmem:[%s232] sm:$0xff]
        %v234 = vld [vmem:[%s232 + $0x8] sm:$0xff]
        %s235 = scalar_lea.vmem %s2, 48
        %v236 = vld [vmem:[%s235] sm:$0xff]
        %v237 = vld [vmem:[%s235 + $0x8] sm:$0xff]
        %v238 = vld [vmem:[%s192] sm:$0xff]
        %v239 = vld [vmem:[%s192 + $0x8] sm:$0xff]
        %v240 = vld [vmem:[%s192 + $0x10] sm:$0xff]
        %v241 = vld [vmem:[%s192 + $0x18] sm:$0xff]
        %243 = vset.pattern.permute.xlu0 0
        %244 = vperm.xlu0 %243, %v227
        %v245 = vpop.permute.xlu0 %244
        %248 = vset.pattern.permute.xlu0 0
        %249 = vperm.xlu0 %248, %v228
        %v250 = vpop.permute.xlu0 %249
        %v252 = vmul.f32 %v238, %v245
        %v253 = vmul.f32 %v239, %v245
        %v254 = vmul.f32 %v240, %v250
        %v255 = vmul.f32 %v241, %v250
        %257 = vset.pattern.permute.xlu0 0
        %258 = vperm.xlu0 %257, %v230
        %v259 = vpop.permute.xlu0 %258
        %262 = vset.pattern.permute.xlu0 0
        %263 = vperm.xlu0 %262, %v231
        %v264 = vpop.permute.xlu0 %263
        %v266 = vadd.f32 %v252, %v259
        %v267 = vadd.f32 %v253, %v259
        %v268 = vadd.f32 %v254, %v264
        %v269 = vadd.f32 %v255, %v264
        %v270 = vmax.f32 %v266, 0.0
        %v271 = vmax.f32 %v267, 0.0
        %v272 = vmax.f32 %v268, 0.0
        %v273 = vmax.f32 %v269, 0.0
        %274 = vst [vmem:[#allocation2 + $0x8] sm:$0xff] %v270
        %275 = vst [vmem:[#allocation2 + $0x10] sm:$0xff] %v271
        %276 = vst [vmem:[#allocation2 + $0x28] sm:$0xff] %v272
        %277 = vst [vmem:[#allocation2 + $0x30] sm:$0xff] %v273
        %v278 = vld [vmem:[#allocation2] sm:$0xff]
        %v279 = vld [vmem:[#allocation2 + $0x8] sm:$0xff]
        %v280 = vld [vmem:[#allocation2 + $0x10] sm:$0xff]
        %v281 = vld [vmem:[#allocation2 + $0x20] sm:$0xff]
        %v282 = vld [vmem:[#allocation2 + $0x28] sm:$0xff]
        %v283 = vld [vmem:[#allocation2 + $0x30] sm:$0xff]
        %v285 = vlaneseq
        %v286 = vshrl.u32 %v285, 7
        %v287 = vsub.s32 0, %v286
        %v288 = vrot.slane %v224, %v287
        %v289 = vlaneseq
        %v290 = vshrl.u32 %v289, 7
        %v291 = vsub.s32 1, %v290
        %v292 = vrot.slane %v224, %v291
        %293 = vrot.lane.b32.xlu0 %v288, 111
        %v294 = vpop.permute.xlu0 %293
        %295 = vrot.lane.b32.xlu0 %v292, 111
        %v296 = vpop.permute.xlu0 %295
        %vm297 = vcmask 908288
        %v298 = vsel %vm297, %v294, %v296
        %v302 = vmul.f32 %v278, %v294
        %v303 = vmul.f32 %v279, %v298
        %v304 = vmul.f32 %v280, %v296
        %v305 = vmul.f32 %v281, %v294
        %v306 = vmul.f32 %v282, %v298
        %v307 = vmul.f32 %v283, %v296
        %v308 = vpack.c.bf16 %v305, %v302
        %v309 = vpack.c.bf16 %v306, %v303
        %v310 = vpack.c.bf16 %v307, %v304
        %v314 = vunpack.c.l.b16 %v308
        %v315 = vunpack.c.l.b16 %v309
        %v316 = vunpack.c.l.b16 %v310
        %v317 = vunpack.c.h.b16 %v308
        %v318 = vunpack.c.h.b16 %v309
        %v319 = vunpack.c.h.b16 %v310
        %v320 = vpack.c.b16 %v315, %v314
        %v321 = vpack.c.b16 %v316, %v316
        %v322 = vpack.c.b16 %v318, %v317
        %v323 = vpack.c.b16 %v319, %v319
        %324 = vrot.lane.b32.xlu0 %v320, 17
        %v325 = vpop.permute.xlu0 %324
        %326 = vrot.lane.b32.xlu0 %v321, 17
        %v327 = vpop.permute.xlu0 %326
        %328 = vrot.lane.b32.xlu0 %v322, 17
        %v329 = vpop.permute.xlu0 %328
        %330 = vrot.lane.b32.xlu0 %v323, 17
        %v331 = vpop.permute.xlu0 %330
        %v332 = vrot.slane %v325, 4
        %v333 = vrot.slane %v327, 4
        %v334 = vrot.slane %v329, 4
        %v335 = vrot.slane %v331, 4
        %vm336 = vcmask 1043456
        %v337 = vsel %vm336, %v332, %v333
        %vm338 = vcmask 138240
        %v339 = vsel %vm338, %v325, %v337
        %v340 = vsel %vm336, %v334, %v335
        %v341 = vsel %vm338, %v329, %v340
        %344 = vst [vmem:[#allocation3] sm:$0xff] %v339
        %345 = vst [vmem:[#allocation3 + $0x10] sm:$0xff] %v341
        %v346 = vld [vmem:[#allocation2] sm:$0xff]
        %v347 = vld [vmem:[#allocation2 + $0x8] sm:$0xff]
        %v348 = vld [vmem:[#allocation2 + $0x10] sm:$0xff]
        %v349 = vld [vmem:[#allocation2 + $0x20] sm:$0xff]
        %v350 = vld [vmem:[#allocation2 + $0x28] sm:$0xff]
        %v351 = vld [vmem:[#allocation2 + $0x30] sm:$0xff]
        %v352 = vpack.c.bf16 %v349, %v346
        %v353 = vpack.c.bf16 %v350, %v347
        %v354 = vpack.c.bf16 %v351, %v348
        %v358 = vunpack.c.l.b16 %v352
        %v359 = vunpack.c.l.b16 %v353
        %v360 = vunpack.c.l.b16 %v354
        %v361 = vunpack.c.h.b16 %v352
        %v362 = vunpack.c.h.b16 %v353
        %v363 = vunpack.c.h.b16 %v354
        %v364 = vpack.c.b16 %v359, %v358
        %v365 = vpack.c.b16 %v360, %v360
        %v366 = vpack.c.b16 %v362, %v361
        %v367 = vpack.c.b16 %v363, %v363
        %368 = vrot.lane.b32.xlu0 %v364, 16
        %v369 = vpop.permute.xlu0 %368
        %370 = vrot.lane.b32.xlu0 %v365, 16
        %v371 = vpop.permute.xlu0 %370
        %372 = vrot.lane.b32.xlu0 %v366, 16
        %v373 = vpop.permute.xlu0 %372
        %374 = vrot.lane.b32.xlu0 %v367, 16
        %v375 = vpop.permute.xlu0 %374
        %v376 = vrot.slane %v369, 4
        %v377 = vrot.slane %v371, 4
        %v378 = vrot.slane %v373, 4
        %v379 = vrot.slane %v375, 4
        %v380 = vsel %vm336, %v376, %v377
        %vm381 = vcmask 130048
        %v382 = vsel %vm381, %v369, %v380
        %v383 = vsel %vm336, %v378, %v379
        %v384 = vsel %vm381, %v373, %v383
        %387 = vst [vmem:[#allocation3 + $0x20] sm:$0xff] %v382
        %388 = vst [vmem:[#allocation3 + $0x30] sm:$0xff] %v384
        %v389 = vld [vmem:[#allocation2] sm:$0xff]
        %v390 = vld [vmem:[#allocation2 + $0x8] sm:$0xff]
        %v391 = vld [vmem:[#allocation2 + $0x10] sm:$0xff]
        %v392 = vld [vmem:[#allocation2 + $0x20] sm:$0xff]
        %v393 = vld [vmem:[#allocation2 + $0x28] sm:$0xff]
        %v394 = vld [vmem:[#allocation2 + $0x30] sm:$0xff]
        %v396 = vlaneseq
        %v397 = vshrl.u32 %v396, 7
        %v398 = vsub.s32 0, %v397
        %v399 = vrot.slane %v226, %v398
        %v400 = vlaneseq
        %v401 = vshrl.u32 %v400, 7
        %v402 = vsub.s32 1, %v401
        %v403 = vrot.slane %v226, %v402
        %404 = vrot.lane.b32.xlu0 %v399, 113
        %v405 = vpop.permute.xlu0 %404
        %406 = vrot.lane.b32.xlu0 %v403, 113
        %v407 = vpop.permute.xlu0 %406
        %vm408 = vcmask 924672
        %v409 = vsel %vm408, %v405, %v407
        %v413 = vmul.f32 %v389, %v405
        %v414 = vmul.f32 %v390, %v409
        %v415 = vmul.f32 %v391, %v407
        %v416 = vmul.f32 %v392, %v405
        %v417 = vmul.f32 %v393, %v409
        %v418 = vmul.f32 %v394, %v407
        %v419 = vpack.c.bf16 %v416, %v413
        %v420 = vpack.c.bf16 %v417, %v414
        %v421 = vpack.c.bf16 %v418, %v415
        %v425 = vunpack.c.l.b16 %v419
        %v426 = vunpack.c.l.b16 %v420
        %v427 = vunpack.c.l.b16 %v421
        %v428 = vunpack.c.h.b16 %v419
        %v429 = vunpack.c.h.b16 %v420
        %v430 = vunpack.c.h.b16 %v421
        %v431 = vpack.c.b16 %v426, %v425
        %v432 = vpack.c.b16 %v427, %v427
        %v433 = vpack.c.b16 %v429, %v428
        %v434 = vpack.c.b16 %v430, %v430
        %435 = vrot.lane.b32.xlu0 %v431, 15
        %v436 = vpop.permute.xlu0 %435
        %437 = vrot.lane.b32.xlu0 %v432, 15
        %v438 = vpop.permute.xlu0 %437
        %439 = vrot.lane.b32.xlu0 %v433, 15
        %v440 = vpop.permute.xlu0 %439
        %441 = vrot.lane.b32.xlu0 %v434, 15
        %v442 = vpop.permute.xlu0 %441
        %v443 = vrot.slane %v436, 4
        %v444 = vrot.slane %v438, 4
        %v445 = vrot.slane %v440, 4
        %v446 = vrot.slane %v442, 4
        %v447 = vsel %vm336, %v443, %v444
        %vm448 = vcmask 121856
        %v449 = vsel %vm448, %v436, %v447
        %v450 = vsel %vm336, %v445, %v446
        %v451 = vsel %vm448, %v440, %v450
        %454 = vst [vmem:[#allocation3 + $0x40] sm:$0xff] %v449
        %455 = vst [vmem:[#allocation3 + $0x50] sm:$0xff] %v451
        %v456 = vld [vmem:[#allocation2] sm:$0xff]
        %v457 = vld [vmem:[#allocation2 + $0x8] sm:$0xff]
        %v458 = vld [vmem:[#allocation2 + $0x10] sm:$0xff]
        %v459 = vld [vmem:[#allocation2 + $0x20] sm:$0xff]
        %v460 = vld [vmem:[#allocation2 + $0x28] sm:$0xff]
        %v461 = vld [vmem:[#allocation2 + $0x30] sm:$0xff]
        %462 = vrot.lane.b32.xlu0 %v288, 127
        %v463 = vpop.permute.xlu0 %462
        %464 = vrot.lane.b32.xlu0 %v292, 127
        %v465 = vpop.permute.xlu0 %464
        %vm466 = vcmask 1039360
        %v467 = vsel %vm466, %v463, %v465
        %v471 = vmul.f32 %v456, %v463
        %v472 = vmul.f32 %v457, %v467
        %v473 = vmul.f32 %v458, %v465
        %v474 = vmul.f32 %v459, %v463
        %v475 = vmul.f32 %v460, %v467
        %v476 = vmul.f32 %v461, %v465
        %v477 = vpack.c.bf16 %v474, %v471
        %v478 = vpack.c.bf16 %v475, %v472
        %v479 = vpack.c.bf16 %v476, %v473
        %v483 = vunpack.c.l.b16 %v477
        %v484 = vunpack.c.l.b16 %v478
        %v485 = vunpack.c.l.b16 %v479
        %v486 = vunpack.c.h.b16 %v477
        %v487 = vunpack.c.h.b16 %v478
        %v488 = vunpack.c.h.b16 %v479
        %v489 = vpack.c.b16 %v484, %v483
        %v490 = vpack.c.b16 %v485, %v485
        %v491 = vpack.c.b16 %v487, %v486
        %v492 = vpack.c.b16 %v488, %v488
        %493 = vrot.lane.b32.xlu0 %v489, 1
        %v494 = vpop.permute.xlu0 %493
        %495 = vrot.lane.b32.xlu0 %v490, 1
        %v496 = vpop.permute.xlu0 %495
        %497 = vrot.lane.b32.xlu0 %v491, 1
        %v498 = vpop.permute.xlu0 %497
        %499 = vrot.lane.b32.xlu0 %v492, 1
        %v500 = vpop.permute.xlu0 %499
        %v501 = vrot.slane %v494, 4
        %v502 = vrot.slane %v496, 4
        %v503 = vrot.slane %v498, 4
        %v504 = vrot.slane %v500, 4
        %v505 = vsel %vm336, %v501, %v502
        %vm506 = vcmask 7168
        %v507 = vsel %vm506, %v494, %v505
        %v508 = vsel %vm336, %v503, %v504
        %v509 = vsel %vm506, %v498, %v508
        %512 = vst [vmem:[#allocation3 + $0x60] sm:$0xff] %v507
        %513 = vst [vmem:[#allocation3 + $0x70] sm:$0xff] %v509
        %v514 = vld [vmem:[#allocation2 + $0x8] sm:$0xff]
        %v515 = vld [vmem:[#allocation2 + $0x10] sm:$0xff]
        %v516 = vld [vmem:[#allocation2 + $0x28] sm:$0xff]
        %v517 = vld [vmem:[#allocation2 + $0x30] sm:$0xff]
        %v518 = vpack.c.bf16 %v516, %v514
        %v519 = vpack.c.bf16 %v517, %v515
        %v522 = vunpack.c.l.b16 %v518
        %v523 = vunpack.c.l.b16 %v519
        %v524 = vunpack.c.h.b16 %v518
        %v525 = vunpack.c.h.b16 %v519
        %v526 = vpack.c.b16 %v523, %v522
        %v527 = vpack.c.b16 %v525, %v524
        %530 = vst [vmem:[#allocation3 + $0x80] sm:$0xff] %v526
        %531 = vst [vmem:[#allocation3 + $0x90] sm:$0xff] %v527
        %v532 = vld [vmem:[#allocation2 + $0x8] sm:$0xff]
        %v533 = vld [vmem:[#allocation2 + $0x10] sm:$0xff]
        %v534 = vld [vmem:[#allocation2 + $0x18] sm:$0xff]
        %v535 = vld [vmem:[#allocation2 + $0x28] sm:$0xff]
        %v536 = vld [vmem:[#allocation2 + $0x30] sm:$0xff]
        %v537 = vld [vmem:[#allocation2 + $0x38] sm:$0xff]
        %538 = vrot.lane.b32.xlu0 %v399, 1
        %v539 = vpop.permute.xlu0 %538
        %540 = vrot.lane.b32.xlu0 %v403, 1
        %v541 = vpop.permute.xlu0 %540
        %vm542 = vcmask 7168
        %v543 = vsel %vm542, %v539, %v541
        %v547 = vmul.f32 %v532, %v539
        %v548 = vmul.f32 %v533, %v543
        %v549 = vmul.f32 %v534, %v541
        %v550 = vmul.f32 %v535, %v539
        %v551 = vmul.f32 %v536, %v543
        %v552 = vmul.f32 %v537, %v541
        %v553 = vpack.c.bf16 %v550, %v547
        %v554 = vpack.c.bf16 %v551, %v548
        %v555 = vpack.c.bf16 %v552, %v549
        %v559 = vunpack.c.l.b16 %v553
        %v560 = vunpack.c.l.b16 %v554
        %v561 = vunpack.c.l.b16 %v555
        %v562 = vunpack.c.h.b16 %v553
        %v563 = vunpack.c.h.b16 %v554
        %v564 = vunpack.c.h.b16 %v555
        %v565 = vpack.c.b16 %v560, %v559
        %v566 = vpack.c.b16 %v561, %v561
        %v567 = vpack.c.b16 %v563, %v562
        %v568 = vpack.c.b16 %v564, %v564
        %569 = vrot.lane.b32.xlu0 %v565, 127
        %v570 = vpop.permute.xlu0 %569
        %571 = vrot.lane.b32.xlu0 %v566, 127
        %v572 = vpop.permute.xlu0 %571
        %573 = vrot.lane.b32.xlu0 %v567, 127
        %v574 = vpop.permute.xlu0 %573
        %575 = vrot.lane.b32.xlu0 %v568, 127
        %v576 = vpop.permute.xlu0 %575
        %v577 = vrot.slane %v570, 4
        %v578 = vrot.slane %v572, 4
        %v579 = vrot.slane %v574, 4
        %v580 = vrot.slane %v576, 4
        %v581 = vsel %vm336, %v577, %v578
        %vm582 = vcmask 1039360
        %v583 = vsel %vm582, %v570, %v581
        %v584 = vsel %vm336, %v579, %v580
        %v585 = vsel %vm582, %v574, %v584
        %588 = vst [vmem:[#allocation3 + $0xa0] sm:$0xff] %v583
        %589 = vst [vmem:[#allocation3 + $0xb0] sm:$0xff] %v585
        %v590 = vld [vmem:[#allocation2 + $0x8] sm:$0xff]
        %v591 = vld [vmem:[#allocation2 + $0x10] sm:$0xff]
        %v592 = vld [vmem:[#allocation2 + $0x18] sm:$0xff]
        %v593 = vld [vmem:[#allocation2 + $0x28] sm:$0xff]
        %v594 = vld [vmem:[#allocation2 + $0x30] sm:$0xff]
        %v595 = vld [vmem:[#allocation2 + $0x38] sm:$0xff]
        %596 = vrot.lane.b32.xlu0 %v288, 15
        %v597 = vpop.permute.xlu0 %596
        %598 = vrot.lane.b32.xlu0 %v292, 15
        %v599 = vpop.permute.xlu0 %598
        %vm600 = vcmask 121856
        %v601 = vsel %vm600, %v597, %v599
        %v605 = vmul.f32 %v590, %v597
        %v606 = vmul.f32 %v591, %v601
        %v607 = vmul.f32 %v592, %v599
        %v608 = vmul.f32 %v593, %v597
        %v609 = vmul.f32 %v594, %v601
        %v610 = vmul.f32 %v595, %v599
        %v611 = vpack.c.bf16 %v608, %v605
        %v612 = vpack.c.bf16 %v609, %v606
        %v613 = vpack.c.bf16 %v610, %v607
        %v617 = vunpack.c.l.b16 %v611
        %v618 = vunpack.c.l.b16 %v612
        %v619 = vunpack.c.l.b16 %v613
        %v620 = vunpack.c.h.b16 %v611
        %v621 = vunpack.c.h.b16 %v612
        %v622 = vunpack.c.h.b16 %v613
        %v623 = vpack.c.b16 %v618, %v617
        %v624 = vpack.c.b16 %v619, %v619
        %v625 = vpack.c.b16 %v621, %v620
        %v626 = vpack.c.b16 %v622, %v622
        %627 = vrot.lane.b32.xlu0 %v623, 113
        %v628 = vpop.permute.xlu0 %627
        %629 = vrot.lane.b32.xlu0 %v624, 113
        %v630 = vpop.permute.xlu0 %629
        %631 = vrot.lane.b32.xlu0 %v625, 113
        %v632 = vpop.permute.xlu0 %631
        %633 = vrot.lane.b32.xlu0 %v626, 113
        %v634 = vpop.permute.xlu0 %633
        %v635 = vrot.slane %v628, 4
        %v636 = vrot.slane %v630, 4
        %v637 = vrot.slane %v632, 4
        %v638 = vrot.slane %v634, 4
        %v639 = vsel %vm336, %v635, %v636
        %vm640 = vcmask 924672
        %v641 = vsel %vm640, %v628, %v639
        %v642 = vsel %vm336, %v637, %v638
        %v643 = vsel %vm640, %v632, %v642
        %646 = vst [vmem:[#allocation3 + $0xc0] sm:$0xff] %v641
        %647 = vst [vmem:[#allocation3 + $0xd0] sm:$0xff] %v643
        %v648 = vld [vmem:[#allocation2 + $0x8] sm:$0xff]
        %v649 = vld [vmem:[#allocation2 + $0x10] sm:$0xff]
        %v650 = vld [vmem:[#allocation2 + $0x18] sm:$0xff]
        %v651 = vld [vmem:[#allocation2 + $0x28] sm:$0xff]
        %v652 = vld [vmem:[#allocation2 + $0x30] sm:$0xff]
        %v653 = vld [vmem:[#allocation2 + $0x38] sm:$0xff]
        %v654 = vpack.c.bf16 %v651, %v648
        %v655 = vpack.c.bf16 %v652, %v649
        %v656 = vpack.c.bf16 %v653, %v650
        %v660 = vunpack.c.l.b16 %v654
        %v661 = vunpack.c.l.b16 %v655
        %v662 = vunpack.c.l.b16 %v656
        %v663 = vunpack.c.h.b16 %v654
        %v664 = vunpack.c.h.b16 %v655
        %v665 = vunpack.c.h.b16 %v656
        %v666 = vpack.c.b16 %v661, %v660
        %v667 = vpack.c.b16 %v662, %v662
        %v668 = vpack.c.b16 %v664, %v663
        %v669 = vpack.c.b16 %v665, %v665
        %670 = vrot.lane.b32.xlu0 %v666, 112
        %v671 = vpop.permute.xlu0 %670
        %672 = vrot.lane.b32.xlu0 %v667, 112
        %v673 = vpop.permute.xlu0 %672
        %674 = vrot.lane.b32.xlu0 %v668, 112
        %v675 = vpop.permute.xlu0 %674
        %676 = vrot.lane.b32.xlu0 %v669, 112
        %v677 = vpop.permute.xlu0 %676
        %v678 = vrot.slane %v671, 4
        %v679 = vrot.slane %v673, 4
        %v680 = vrot.slane %v675, 4
        %v681 = vrot.slane %v677, 4
        %v682 = vsel %vm336, %v678, %v679
        %vm683 = vcmask 916480
        %v684 = vsel %vm683, %v671, %v682
        %v685 = vsel %vm336, %v680, %v681
        %v686 = vsel %vm683, %v675, %v685
        %689 = vst [vmem:[#allocation3 + $0xe0] sm:$0xff] %v684
        %690 = vst [vmem:[#allocation3 + $0xf0] sm:$0xff] %v686
        %v691 = vld [vmem:[#allocation2 + $0x8] sm:$0xff]
        %v692 = vld [vmem:[#allocation2 + $0x10] sm:$0xff]
        %v693 = vld [vmem:[#allocation2 + $0x18] sm:$0xff]
        %v694 = vld [vmem:[#allocation2 + $0x28] sm:$0xff]
        %v695 = vld [vmem:[#allocation2 + $0x30] sm:$0xff]
        %v696 = vld [vmem:[#allocation2 + $0x38] sm:$0xff]
        %697 = vrot.lane.b32.xlu0 %v399, 17
        %v698 = vpop.permute.xlu0 %697
        %699 = vrot.lane.b32.xlu0 %v403, 17
        %v700 = vpop.permute.xlu0 %699
        %vm701 = vcmask 138240
        %v702 = vsel %vm701, %v698, %v700
        %v706 = vmul.f32 %v691, %v698
        %v707 = vmul.f32 %v692, %v702
        %v708 = vmul.f32 %v693, %v700
        %v709 = vmul.f32 %v694, %v698
        %v710 = vmul.f32 %v695, %v702
        %v711 = vmul.f32 %v696, %v700
        %v712 = vpack.c.bf16 %v709, %v706
        %v713 = vpack.c.bf16 %v710, %v707
        %v714 = vpack.c.bf16 %v711, %v708
        %v718 = vunpack.c.l.b16 %v712
        %v719 = vunpack.c.l.b16 %v713
        %v720 = vunpack.c.l.b16 %v714
        %v721 = vunpack.c.h.b16 %v712
        %v722 = vunpack.c.h.b16 %v713
        %v723 = vunpack.c.h.b16 %v714
        %v724 = vpack.c.b16 %v719, %v718
        %v725 = vpack.c.b16 %v720, %v720
        %v726 = vpack.c.b16 %v722, %v721
        %v727 = vpack.c.b16 %v723, %v723
        %728 = vrot.lane.b32.xlu0 %v724, 111
        %v729 = vpop.permute.xlu0 %728
        %730 = vrot.lane.b32.xlu0 %v725, 111
        %v731 = vpop.permute.xlu0 %730
        %732 = vrot.lane.b32.xlu0 %v726, 111
        %v733 = vpop.permute.xlu0 %732
        %734 = vrot.lane.b32.xlu0 %v727, 111
        %v735 = vpop.permute.xlu0 %734
        %v736 = vrot.slane %v729, 4
        %v737 = vrot.slane %v731, 4
        %v738 = vrot.slane %v733, 4
        %v739 = vrot.slane %v735, 4
        %v740 = vsel %vm336, %v736, %v737
        %vm741 = vcmask 908288
        %v742 = vsel %vm741, %v729, %v740
        %v743 = vsel %vm336, %v738, %v739
        %v744 = vsel %vm741, %v733, %v743
        %747 = vst [vmem:[#allocation3 + $0x100] sm:$0xff] %v742
        %748 = vst [vmem:[#allocation3 + $0x110] sm:$0xff] %v744
        %s749 = scalar_lea.vmem %s192, 32 [#allocation4]
        %v750 = vld [vmem:[%s749] sm:$0xff]
        %v751 = vld [vmem:[%s749 + $0x8] sm:$0xff]
        %v752 = vld [vmem:[%s749 + $0x10] sm:$0xff]
        %v753 = vld [vmem:[%s749 + $0x18] sm:$0xff]
        %v754 = vmul.f32 %v750, %v245
        %v755 = vmul.f32 %v751, %v245
        %v756 = vmul.f32 %v752, %v250
        %v757 = vmul.f32 %v753, %v250
        %v758 = vadd.f32 %v754, %v259
        %v759 = vadd.f32 %v755, %v259
        %v760 = vadd.f32 %v756, %v264
        %v761 = vadd.f32 %v757, %v264
        %v762 = vmax.f32 %v758, 0.0
        %v763 = vmax.f32 %v759, 0.0
        %v764 = vmax.f32 %v760, 0.0
        %v765 = vmax.f32 %v761, 0.0
        %766 = vst [vmem:[#allocation2 + $0x8] sm:$0xff] %v762
        %767 = vst [vmem:[#allocation2 + $0x10] sm:$0xff] %v763
        %768 = vst [vmem:[#allocation2 + $0x28] sm:$0xff] %v764
        %769 = vst [vmem:[#allocation2 + $0x30] sm:$0xff] %v765
        %v770 = vld [vmem:[#allocation2] sm:$0xff]
        %v771 = vld [vmem:[#allocation2 + $0x8] sm:$0xff]
        %v772 = vld [vmem:[#allocation2 + $0x10] sm:$0xff]
        %v773 = vld [vmem:[#allocation2 + $0x20] sm:$0xff]
        %v774 = vld [vmem:[#allocation2 + $0x28] sm:$0xff]
        %v775 = vld [vmem:[#allocation2 + $0x30] sm:$0xff]
        %v776 = vmul.f32 %v770, %v294
        %v777 = vmul.f32 %v771, %v298
        %v778 = vmul.f32 %v772, %v296
        %v779 = vmul.f32 %v773, %v294
        %v780 = vmul.f32 %v774, %v298
        %v781 = vmul.f32 %v775, %v296
        %v782 = vpack.c.bf16 %v779, %v776
        %v783 = vpack.c.bf16 %v780, %v777
        %v784 = vpack.c.bf16 %v781, %v778
        %v788 = vunpack.c.l.b16 %v782
        %v789 = vunpack.c.l.b16 %v783
        %v790 = vunpack.c.l.b16 %v784
        %v791 = vunpack.c.h.b16 %v782
        %v792 = vunpack.c.h.b16 %v783
        %v793 = vunpack.c.h.b16 %v784
        %v794 = vpack.c.b16 %v789, %v788
        %v795 = vpack.c.b16 %v790, %v790
        %v796 = vpack.c.b16 %v792, %v791
        %v797 = vpack.c.b16 %v793, %v793
        %798 = vrot.lane.b32.xlu0 %v794, 17
        %v799 = vpop.permute.xlu0 %798
        %800 = vrot.lane.b32.xlu0 %v795, 17
        %v801 = vpop.permute.xlu0 %800
        %802 = vrot.lane.b32.xlu0 %v796, 17
        %v803 = vpop.permute.xlu0 %802
        %804 = vrot.lane.b32.xlu0 %v797, 17
        %v805 = vpop.permute.xlu0 %804
        %v806 = vrot.slane %v799, 4
        %v807 = vrot.slane %v801, 4
        %v808 = vrot.slane %v803, 4
        %v809 = vrot.slane %v805, 4
        %v810 = vsel %vm336, %v806, %v807
        %v811 = vsel %vm338, %v799, %v810
        %v812 = vsel %vm336, %v808, %v809
        %v813 = vsel %vm338, %v803, %v812
        %816 = vst [vmem:[#allocation3 + $0x8] sm:$0xff] %v811
        %817 = vst [vmem:[#allocation3 + $0x18] sm:$0xff] %v813
        %v818 = vld [vmem:[#allocation2] sm:$0xff]
        %v819 = vld [vmem:[#allocation2 + $0x8] sm:$0xff]
        %v820 = vld [vmem:[#allocation2 + $0x10] sm:$0xff]
        %v821 = vld [vmem:[#allocation2 + $0x20] sm:$0xff]
        %v822 = vld [vmem:[#allocation2 + $0x28] sm:$0xff]
        %v823 = vld [vmem:[#allocation2 + $0x30] sm:$0xff]
        %v824 = vpack.c.bf16 %v821, %v818
        %v825 = vpack.c.bf16 %v822, %v819
        %v826 = vpack.c.bf16 %v823, %v820
        %v830 = vunpack.c.l.b16 %v824
        %v831 = vunpack.c.l.b16 %v825
        %v832 = vunpack.c.l.b16 %v826
        %v833 = vunpack.c.h.b16 %v824
        %v834 = vunpack.c.h.b16 %v825
        %v835 = vunpack.c.h.b16 %v826
        %v836 = vpack.c.b16 %v831, %v830
        %v837 = vpack.c.b16 %v832, %v832
        %v838 = vpack.c.b16 %v834, %v833
        %v839 = vpack.c.b16 %v835, %v835
        %840 = vrot.lane.b32.xlu0 %v836, 16
        %v841 = vpop.permute.xlu0 %840
        %842 = vrot.lane.b32.xlu0 %v837, 16
        %v843 = vpop.permute.xlu0 %842
        %844 = vrot.lane.b32.xlu0 %v838, 16
        %v845 = vpop.permute.xlu0 %844
        %846 = vrot.lane.b32.xlu0 %v839, 16
        %v847 = vpop.permute.xlu0 %846
        %v848 = vrot.slane %v841, 4
        %v849 = vrot.slane %v843, 4
        %v850 = vrot.slane %v845, 4
        %v851 = vrot.slane %v847, 4
        %v852 = vsel %vm336, %v848, %v849
        %v853 = vsel %vm381, %v841, %v852
        %v854 = vsel %vm336, %v850, %v851
        %v855 = vsel %vm381, %v845, %v854
        %858 = vst [vmem:[#allocation3 + $0x28] sm:$0xff] %v853
        %859 = vst [vmem:[#allocation3 + $0x38] sm:$0xff] %v855
        %v860 = vld [vmem:[#allocation2] sm:$0xff]
        %v861 = vld [vmem:[#allocation2 + $0x8] sm:$0xff]
        %v862 = vld [vmem:[#allocation2 + $0x10] sm:$0xff]
        %v863 = vld [vmem:[#allocation2 + $0x20] sm:$0xff]
        %v864 = vld [vmem:[#allocation2 + $0x28] sm:$0xff]
        %v865 = vld [vmem:[#allocation2 + $0x30] sm:$0xff]
        %v866 = vmul.f32 %v860, %v405
        %v867 = vmul.f32 %v861, %v409
        %v868 = vmul.f32 %v862, %v407
        %v869 = vmul.f32 %v863, %v405
        %v870 = vmul.f32 %v864, %v409
        %v871 = vmul.f32 %v865, %v407
        %v872 = vpack.c.bf16 %v869, %v866
        %v873 = vpack.c.bf16 %v870, %v867
        %v874 = vpack.c.bf16 %v871, %v868
        %v878 = vunpack.c.l.b16 %v872
        %v879 = vunpack.c.l.b16 %v873
        %v880 = vunpack.c.l.b16 %v874
        %v881 = vunpack.c.h.b16 %v872
        %v882 = vunpack.c.h.b16 %v873
        %v883 = vunpack.c.h.b16 %v874
        %v884 = vpack.c.b16 %v879, %v878
        %v885 = vpack.c.b16 %v880, %v880
        %v886 = vpack.c.b16 %v882, %v881
        %v887 = vpack.c.b16 %v883, %v883
        %888 = vrot.lane.b32.xlu0 %v884, 15
        %v889 = vpop.permute.xlu0 %888
        %890 = vrot.lane.b32.xlu0 %v885, 15
        %v891 = vpop.permute.xlu0 %890
        %892 = vrot.lane.b32.xlu0 %v886, 15
        %v893 = vpop.permute.xlu0 %892
        %894 = vrot.lane.b32.xlu0 %v887, 15
        %v895 = vpop.permute.xlu0 %894
        %v896 = vrot.slane %v889, 4
        %v897 = vrot.slane %v891, 4
        %v898 = vrot.slane %v893, 4
        %v899 = vrot.slane %v895, 4
        %v900 = vsel %vm336, %v896, %v897
        %v901 = vsel %vm448, %v889, %v900
        %v902 = vsel %vm336, %v898, %v899
        %v903 = vsel %vm448, %v893, %v902
        %906 = vst [vmem:[#allocation3 + $0x48] sm:$0xff] %v901
        %907 = vst [vmem:[#allocation3 + $0x58] sm:$0xff] %v903
        %v908 = vld [vmem:[#allocation2] sm:$0xff]
        %v909 = vld [vmem:[#allocation2 + $0x8] sm:$0xff]
        %v910 = vld [vmem:[#allocation2 + $0x10] sm:$0xff]
        %v911 = vld [vmem:[#allocation2 + $0x20] sm:$0xff]
        %v912 = vld [vmem:[#allocation2 + $0x28] sm:$0xff]
        %v913 = vld [vmem:[#allocation2 + $0x30] sm:$0xff]
        %v914 = vmul.f32 %v908, %v463
        %v915 = vmul.f32 %v909, %v467
        %v916 = vmul.f32 %v910, %v465
        %v917 = vmul.f32 %v911, %v463
        %v918 = vmul.f32 %v912, %v467
        %v919 = vmul.f32 %v913, %v465
        %v920 = vpack.c.bf16 %v917, %v914
        %v921 = vpack.c.bf16 %v918, %v915
        %v922 = vpack.c.bf16 %v919, %v916
        %v926 = vunpack.c.l.b16 %v920
        %v927 = vunpack.c.l.b16 %v921
        %v928 = vunpack.c.l.b16 %v922
        %v929 = vunpack.c.h.b16 %v920
        %v930 = vunpack.c.h.b16 %v921
        %v931 = vunpack.c.h.b16 %v922
        %v932 = vpack.c.b16 %v927, %v926
        %v933 = vpack.c.b16 %v928, %v928
        %v934 = vpack.c.b16 %v930, %v929
        %v935 = vpack.c.b16 %v931, %v931
        %936 = vrot.lane.b32.xlu0 %v932, 1
        %v937 = vpop.permute.xlu0 %936
        %938 = vrot.lane.b32.xlu0 %v933, 1
        %v939 = vpop.permute.xlu0 %938
        %940 = vrot.lane.b32.xlu0 %v934, 1
        %v941 = vpop.permute.xlu0 %940
        %942 = vrot.lane.b32.xlu0 %v935, 1
        %v943 = vpop.permute.xlu0 %942
        %v944 = vrot.slane %v937, 4
        %v945 = vrot.slane %v939, 4
        %v946 = vrot.slane %v941, 4
        %v947 = vrot.slane %v943, 4
        %v948 = vsel %vm336, %v944, %v945
        %v949 = vsel %vm506, %v937, %v948
        %v950 = vsel %vm336, %v946, %v947
        %v951 = vsel %vm506, %v941, %v950
        %954 = vst [vmem:[#allocation3 + $0x68] sm:$0xff] %v949
        %955 = vst [vmem:[#allocation3 + $0x78] sm:$0xff] %v951
        %v956 = vld [vmem:[#allocation2 + $0x8] sm:$0xff]
        %v957 = vld [vmem:[#allocation2 + $0x10] sm:$0xff]
        %v958 = vld [vmem:[#allocation2 + $0x28] sm:$0xff]
        %v959 = vld [vmem:[#allocation2 + $0x30] sm:$0xff]
        %v960 = vpack.c.bf16 %v958, %v956
        %v961 = vpack.c.bf16 %v959, %v957
        %v964 = vunpack.c.l.b16 %v960
        %v965 = vunpack.c.l.b16 %v961
        %v966 = vunpack.c.h.b16 %v960
        %v967 = vunpack.c.h.b16 %v961
        %v968 = vpack.c.b16 %v965, %v964
        %v969 = vpack.c.b16 %v967, %v966
        %972 = vst [vmem:[#allocation3 + $0x88] sm:$0xff] %v968
        %973 = vst [vmem:[#allocation3 + $0x98] sm:$0xff] %v969
        %v974 = vld [vmem:[#allocation2 + $0x8] sm:$0xff]
        %v975 = vld [vmem:[#allocation2 + $0x10] sm:$0xff]
        %v976 = vld [vmem:[#allocation2 + $0x18] sm:$0xff]
        %v977 = vld [vmem:[#allocation2 + $0x28] sm:$0xff]
        %v978 = vld [vmem:[#allocation2 + $0x30] sm:$0xff]
        %v979 = vld [vmem:[#allocation2 + $0x38] sm:$0xff]
        %v980 = vmul.f32 %v974, %v539
        %v981 = vmul.f32 %v975, %v543
        %v982 = vmul.f32 %v976, %v541
        %v983 = vmul.f32 %v977, %v539
        %v984 = vmul.f32 %v978, %v543
        %v985 = vmul.f32 %v979, %v541
        %v986 = vpack.c.bf16 %v983, %v980
        %v987 = vpack.c.bf16 %v984, %v981
        %v988 = vpack.c.bf16 %v985, %v982
        %v992 = vunpack.c.l.b16 %v986
        %v993 = vunpack.c.l.b16 %v987
        %v994 = vunpack.c.l.b16 %v988
        %v995 = vunpack.c.h.b16 %v986
        %v996 = vunpack.c.h.b16 %v987
        %v997 = vunpack.c.h.b16 %v988
        %v998 = vpack.c.b16 %v993, %v992
        %v999 = vpack.c.b16 %v994, %v994
        %v1000 = vpack.c.b16 %v996, %v995
        %v1001 = vpack.c.b16 %v997, %v997
        %1002 = vrot.lane.b32.xlu0 %v998, 127
        %v1003 = vpop.permute.xlu0 %1002
        %1004 = vrot.lane.b32.xlu0 %v999, 127
        %v1005 = vpop.permute.xlu0 %1004
        %1006 = vrot.lane.b32.xlu0 %v1000, 127
        %v1007 = vpop.permute.xlu0 %1006
        %1008 = vrot.lane.b32.xlu0 %v1001, 127
        %v1009 = vpop.permute.xlu0 %1008
        %v1010 = vrot.slane %v1003, 4
        %v1011 = vrot.slane %v1005, 4
        %v1012 = vrot.slane %v1007, 4
        %v1013 = vrot.slane %v1009, 4
        %v1014 = vsel %vm336, %v1010, %v1011
        %v1015 = vsel %vm582, %v1003, %v1014
        %v1016 = vsel %vm336, %v1012, %v1013
        %v1017 = vsel %vm582, %v1007, %v1016
        %1020 = vst [vmem:[#allocation3 + $0xa8] sm:$0xff] %v1015
        %1021 = vst [vmem:[#allocation3 + $0xb8] sm:$0xff] %v1017
        %v1022 = vld [vmem:[#allocation2 + $0x8] sm:$0xff]
        %v1023 = vld [vmem:[#allocation2 + $0x10] sm:$0xff]
        %v1024 = vld [vmem:[#allocation2 + $0x18] sm:$0xff]
        %v1025 = vld [vmem:[#allocation2 + $0x28] sm:$0xff]
        %v1026 = vld [vmem:[#allocation2 + $0x30] sm:$0xff]
        %v1027 = vld [vmem:[#allocation2 + $0x38] sm:$0xff]
        %v1028 = vmul.f32 %v1022, %v597
        %v1029 = vmul.f32 %v1023, %v601
        %v1030 = vmul.f32 %v1024, %v599
        %v1031 = vmul.f32 %v1025, %v597
        %v1032 = vmul.f32 %v1026, %v601
        %v1033 = vmul.f32 %v1027, %v599
        %v1034 = vpack.c.bf16 %v1031, %v1028
        %v1035 = vpack.c.bf16 %v1032, %v1029
        %v1036 = vpack.c.bf16 %v1033, %v1030
        %v1040 = vunpack.c.l.b16 %v1034
        %v1041 = vunpack.c.l.b16 %v1035
        %v1042 = vunpack.c.l.b16 %v1036
        %v1043 = vunpack.c.h.b16 %v1034
        %v1044 = vunpack.c.h.b16 %v1035
        %v1045 = vunpack.c.h.b16 %v1036
        %v1046 = vpack.c.b16 %v1041, %v1040
        %v1047 = vpack.c.b16 %v1042, %v1042
        %v1048 = vpack.c.b16 %v1044, %v1043
        %v1049 = vpack.c.b16 %v1045, %v1045
        %1050 = vrot.lane.b32.xlu0 %v1046, 113
        %v1051 = vpop.permute.xlu0 %1050
        %1052 = vrot.lane.b32.xlu0 %v1047, 113
        %v1053 = vpop.permute.xlu0 %1052
        %1054 = vrot.lane.b32.xlu0 %v1048, 113
        %v1055 = vpop.permute.xlu0 %1054
        %1056 = vrot.lane.b32.xlu0 %v1049, 113
        %v1057 = vpop.permute.xlu0 %1056
        %v1058 = vrot.slane %v1051, 4
        %v1059 = vrot.slane %v1053, 4
        %v1060 = vrot.slane %v1055, 4
        %v1061 = vrot.slane %v1057, 4
        %v1062 = vsel %vm336, %v1058, %v1059
        %v1063 = vsel %vm640, %v1051, %v1062
        %v1064 = vsel %vm336, %v1060, %v1061
        %v1065 = vsel %vm640, %v1055, %v1064
        %1068 = vst [vmem:[#allocation3 + $0xc8] sm:$0xff] %v1063
        %1069 = vst [vmem:[#allocation3 + $0xd8] sm:$0xff] %v1065
        %v1070 = vld [vmem:[#allocation2 + $0x8] sm:$0xff]
        %v1071 = vld [vmem:[#allocation2 + $0x10] sm:$0xff]
        %v1072 = vld [vmem:[#allocation2 + $0x18] sm:$0xff]
        %v1073 = vld [vmem:[#allocation2 + $0x28] sm:$0xff]
        %v1074 = vld [vmem:[#allocation2 + $0x30] sm:$0xff]
        %v1075 = vld [vmem:[#allocation2 + $0x38] sm:$0xff]
        %v1076 = vpack.c.bf16 %v1073, %v1070
        %v1077 = vpack.c.bf16 %v1074, %v1071
        %v1078 = vpack.c.bf16 %v1075, %v1072
        %v1082 = vunpack.c.l.b16 %v1076
        %v1083 = vunpack.c.l.b16 %v1077
        %v1084 = vunpack.c.l.b16 %v1078
        %v1085 = vunpack.c.h.b16 %v1076
        %v1086 = vunpack.c.h.b16 %v1077
        %v1087 = vunpack.c.h.b16 %v1078
        %v1088 = vpack.c.b16 %v1083, %v1082
        %v1089 = vpack.c.b16 %v1084, %v1084
        %v1090 = vpack.c.b16 %v1086, %v1085
        %v1091 = vpack.c.b16 %v1087, %v1087
        %1092 = vrot.lane.b32.xlu0 %v1088, 112
        %v1093 = vpop.permute.xlu0 %1092
        %1094 = vrot.lane.b32.xlu0 %v1089, 112
        %v1095 = vpop.permute.xlu0 %1094
        %1096 = vrot.lane.b32.xlu0 %v1090, 112
        %v1097 = vpop.permute.xlu0 %1096
        %1098 = vrot.lane.b32.xlu0 %v1091, 112
        %v1099 = vpop.permute.xlu0 %1098
        %v1100 = vrot.slane %v1093, 4
        %v1101 = vrot.slane %v1095, 4
        %v1102 = vrot.slane %v1097, 4
        %v1103 = vrot.slane %v1099, 4
        %v1104 = vsel %vm336, %v1100, %v1101
        %v1105 = vsel %vm683, %v1093, %v1104
        %v1106 = vsel %vm336, %v1102, %v1103
        %v1107 = vsel %vm683, %v1097, %v1106
        %1110 = vst [vmem:[#allocation3 + $0xe8] sm:$0xff] %v1105
        %1111 = vst [vmem:[#allocation3 + $0xf8] sm:$0xff] %v1107
        %v1112 = vld [vmem:[#allocation2 + $0x8] sm:$0xff]
        %v1113 = vld [vmem:[#allocation2 + $0x10] sm:$0xff]
        %v1114 = vld [vmem:[#allocation2 + $0x18] sm:$0xff]
        %v1115 = vld [vmem:[#allocation2 + $0x28] sm:$0xff]
        %v1116 = vld [vmem:[#allocation2 + $0x30] sm:$0xff]
        %v1117 = vld [vmem:[#allocation2 + $0x38] sm:$0xff]
        %v1118 = vmul.f32 %v1112, %v698
        %v1119 = vmul.f32 %v1113, %v702
        %v1120 = vmul.f32 %v1114, %v700
        %v1121 = vmul.f32 %v1115, %v698
        %v1122 = vmul.f32 %v1116, %v702
        %v1123 = vmul.f32 %v1117, %v700
        %v1124 = vpack.c.bf16 %v1121, %v1118
        %v1125 = vpack.c.bf16 %v1122, %v1119
        %v1126 = vpack.c.bf16 %v1123, %v1120
        %v1130 = vunpack.c.l.b16 %v1124
        %v1131 = vunpack.c.l.b16 %v1125
        %v1132 = vunpack.c.l.b16 %v1126
        %v1133 = vunpack.c.h.b16 %v1124
        %v1134 = vunpack.c.h.b16 %v1125
        %v1135 = vunpack.c.h.b16 %v1126
        %v1136 = vpack.c.b16 %v1131, %v1130
        %v1137 = vpack.c.b16 %v1132, %v1132
        %v1138 = vpack.c.b16 %v1134, %v1133
        %v1139 = vpack.c.b16 %v1135, %v1135
        %1140 = vrot.lane.b32.xlu0 %v1136, 111
        %v1141 = vpop.permute.xlu0 %1140
        %1142 = vrot.lane.b32.xlu0 %v1137, 111
        %v1143 = vpop.permute.xlu0 %1142
        %1144 = vrot.lane.b32.xlu0 %v1138, 111
        %v1145 = vpop.permute.xlu0 %1144
        %1146 = vrot.lane.b32.xlu0 %v1139, 111
        %v1147 = vpop.permute.xlu0 %1146
        %v1148 = vrot.slane %v1141, 4
        %v1149 = vrot.slane %v1143, 4
        %v1150 = vrot.slane %v1145, 4
        %v1151 = vrot.slane %v1147, 4
        %v1152 = vsel %vm336, %v1148, %v1149
        %v1153 = vsel %vm741, %v1141, %v1152
        %v1154 = vsel %vm336, %v1150, %v1151
        %v1155 = vsel %vm741, %v1145, %v1154
        %1158 = vst [vmem:[#allocation3 + $0x108] sm:$0xff] %v1153
        %1159 = vst [vmem:[#allocation3 + $0x118] sm:$0xff] %v1155
        %v1160 = vld [vmem:[%s1] sm:$0xff]
        %v1161 = vld [vmem:[%s1 + $0x8] sm:$0xff]
        %v1162 = vld [vmem:[#allocation3] sm:$0xff]
        %v1163 = vld [vmem:[#allocation3 + $0x8] sm:$0xff]
        %v1164 = vld [vmem:[#allocation3 + $0x10] sm:$0xff]
        %v1165 = vld [vmem:[#allocation3 + $0x18] sm:$0xff]
        %v1166 = vld [vmem:[#allocation3 + $0x20] sm:$0xff]
        %v1167 = vld [vmem:[#allocation3 + $0x28] sm:$0xff]
        %v1168 = vld [vmem:[#allocation3 + $0x30] sm:$0xff]
        %v1169 = vld [vmem:[#allocation3 + $0x38] sm:$0xff]
        %v1170 = vld [vmem:[#allocation3 + $0x40] sm:$0xff]
        %v1171 = vld [vmem:[#allocation3 + $0x48] sm:$0xff]
        %v1172 = vld [vmem:[#allocation3 + $0x50] sm:$0xff]
        %v1173 = vld [vmem:[#allocation3 + $0x58] sm:$0xff]
        %v1174 = vld [vmem:[#allocation3 + $0x60] sm:$0xff]
        %v1175 = vld [vmem:[#allocation3 + $0x68] sm:$0xff]
        %v1176 = vld [vmem:[#allocation3 + $0x70] sm:$0xff]
        %v1177 = vld [vmem:[#allocation3 + $0x78] sm:$0xff]
        %v1178 = vld [vmem:[#allocation3 + $0x80] sm:$0xff]
        %v1179 = vld [vmem:[#allocation3 + $0x88] sm:$0xff]
        %v1180 = vld [vmem:[#allocation3 + $0x90] sm:$0xff]
        %v1181 = vld [vmem:[#allocation3 + $0x98] sm:$0xff]
        %v1182 = vld [vmem:[#allocation3 + $0xa0] sm:$0xff]
        %v1183 = vld [vmem:[#allocation3 + $0xa8] sm:$0xff]
        %v1184 = vld [vmem:[#allocation3 + $0xb0] sm:$0xff]
        %v1185 = vld [vmem:[#allocation3 + $0xb8] sm:$0xff]
        %v1186 = vld [vmem:[#allocation3 + $0xc0] sm:$0xff]
        %v1187 = vld [vmem:[#allocation3 + $0xc8] sm:$0xff]
        %v1188 = vld [vmem:[#allocation3 + $0xd0] sm:$0xff]
        %v1189 = vld [vmem:[#allocation3 + $0xd8] sm:$0xff]
        %v1190 = vld [vmem:[#allocation3 + $0xe0] sm:$0xff]
        %v1191 = vld [vmem:[#allocation3 + $0xe8] sm:$0xff]
        %v1192 = vld [vmem:[#allocation3 + $0xf0] sm:$0xff]
        %v1193 = vld [vmem:[#allocation3 + $0xf8] sm:$0xff]
        %v1194 = vld [vmem:[#allocation3 + $0x100] sm:$0xff]
        %v1195 = vld [vmem:[#allocation3 + $0x108] sm:$0xff]
        %v1196 = vld [vmem:[#allocation3 + $0x110] sm:$0xff]
        %v1197 = vld [vmem:[#allocation3 + $0x118] sm:$0xff]
        %1199 = vset.pattern.permute.xlu0 0
        %1200 = vperm.xlu0 %1199, %v233
        %v1201 = vpop.permute.xlu0 %1200
        %1204 = vset.pattern.permute.xlu0 0
        %1205 = vperm.xlu0 %1204, %v234
        %v1206 = vpop.permute.xlu0 %1205
        %v1210 = vunpack.c.l.b16 %v1160
        %v1211 = vunpack.c.h.b16 %v1160
        %v1212 = vunpack.c.l.b16 %v1161
        %v1213 = vunpack.c.h.b16 %v1161
        %v1214 = vpack.c.b16 %v1212, %v1210
        %v1215 = vpack.c.b16 %v1213, %v1211
        %v1253 = vunpack.c.l.b16 %v1162
        %v1254 = vunpack.c.h.b16 %v1162
        %v1255 = vunpack.c.l.b16 %v1163
        %v1256 = vunpack.c.h.b16 %v1163
        %v1257 = vunpack.c.l.b16 %v1164
        %v1258 = vunpack.c.h.b16 %v1164
        %v1259 = vunpack.c.l.b16 %v1165
        %v1260 = vunpack.c.h.b16 %v1165
        %v1261 = vunpack.c.l.b16 %v1166
        %v1262 = vunpack.c.h.b16 %v1166
        %v1263 = vunpack.c.l.b16 %v1167
        %v1264 = vunpack.c.h.b16 %v1167
        %v1265 = vunpack.c.l.b16 %v1168
        %v1266 = vunpack.c.h.b16 %v1168
        %v1267 = vunpack.c.l.b16 %v1169
        %v1268 = vunpack.c.h.b16 %v1169
        %v1269 = vunpack.c.l.b16 %v1170
        %v1270 = vunpack.c.h.b16 %v1170
        %v1271 = vunpack.c.l.b16 %v1171
        %v1272 = vunpack.c.h.b16 %v1171
        %v1273 = vunpack.c.l.b16 %v1172
        %v1274 = vunpack.c.h.b16 %v1172
        %v1275 = vunpack.c.l.b16 %v1173
        %v1276 = vunpack.c.h.b16 %v1173
        %v1277 = vunpack.c.l.b16 %v1174
        %v1278 = vunpack.c.h.b16 %v1174
        %v1279 = vunpack.c.l.b16 %v1175
        %v1280 = vunpack.c.h.b16 %v1175
        %v1281 = vunpack.c.l.b16 %v1176
        %v1282 = vunpack.c.h.b16 %v1176
        %v1283 = vunpack.c.l.b16 %v1177
        %v1284 = vunpack.c.h.b16 %v1177
        %v1285 = vunpack.c.l.b16 %v1178
        %v1286 = vunpack.c.h.b16 %v1178
        %v1287 = vunpack.c.l.b16 %v1179
        %v1288 = vunpack.c.h.b16 %v1179
        %v1289 = vunpack.c.l.b16 %v1180
        %v1290 = vunpack.c.h.b16 %v1180
        %v1291 = vunpack.c.l.b16 %v1181
        %v1292 = vunpack.c.h.b16 %v1181
        %v1293 = vunpack.c.l.b16 %v1182
        %v1294 = vunpack.c.h.b16 %v1182
        %v1295 = vunpack.c.l.b16 %v1183
        %v1296 = vunpack.c.h.b16 %v1183
        %v1297 = vunpack.c.l.b16 %v1184
        %v1298 = vunpack.c.h.b16 %v1184
        %v1299 = vunpack.c.l.b16 %v1185
        %v1300 = vunpack.c.h.b16 %v1185
        %v1301 = vunpack.c.l.b16 %v1186
        %v1302 = vunpack.c.h.b16 %v1186
        %v1303 = vunpack.c.l.b16 %v1187
        %v1304 = vunpack.c.h.b16 %v1187
        %v1305 = vunpack.c.l.b16 %v1188
        %v1306 = vunpack.c.h.b16 %v1188
        %v1307 = vunpack.c.l.b16 %v1189
        %v1308 = vunpack.c.h.b16 %v1189
        %v1309 = vunpack.c.l.b16 %v1190
        %v1310 = vunpack.c.h.b16 %v1190
        %v1311 = vunpack.c.l.b16 %v1191
        %v1312 = vunpack.c.h.b16 %v1191
        %v1313 = vunpack.c.l.b16 %v1192
        %v1314 = vunpack.c.h.b16 %v1192
        %v1315 = vunpack.c.l.b16 %v1193
        %v1316 = vunpack.c.h.b16 %v1193
        %v1317 = vunpack.c.l.b16 %v1194
        %v1318 = vunpack.c.h.b16 %v1194
        %v1319 = vunpack.c.l.b16 %v1195
        %v1320 = vunpack.c.h.b16 %v1195
        %v1321 = vunpack.c.l.b16 %v1196
        %v1322 = vunpack.c.h.b16 %v1196
        %v1323 = vunpack.c.l.b16 %v1197
        %v1324 = vunpack.c.h.b16 %v1197
        %v1325 = vpack.c.b16 %v1257, %v1253
        %v1326 = vpack.c.b16 %v1258, %v1254
        %v1327 = vpack.c.b16 %v1259, %v1255
        %v1328 = vpack.c.b16 %v1260, %v1256
        %v1329 = vpack.c.b16 %v1265, %v1261
        %v1330 = vpack.c.b16 %v1266, %v1262
        %v1331 = vpack.c.b16 %v1267, %v1263
        %v1332 = vpack.c.b16 %v1268, %v1264
        %v1333 = vpack.c.b16 %v1273, %v1269
        %v1334 = vpack.c.b16 %v1274, %v1270
        %v1335 = vpack.c.b16 %v1275, %v1271
        %v1336 = vpack.c.b16 %v1276, %v1272
        %v1337 = vpack.c.b16 %v1281, %v1277
        %v1338 = vpack.c.b16 %v1282, %v1278
        %v1339 = vpack.c.b16 %v1283, %v1279
        %v1340 = vpack.c.b16 %v1284, %v1280
        %v1341 = vpack.c.b16 %v1289, %v1285
        %v1342 = vpack.c.b16 %v1290, %v1286
        %v1343 = vpack.c.b16 %v1291, %v1287
        %v1344 = vpack.c.b16 %v1292, %v1288
        %v1345 = vpack.c.b16 %v1297, %v1293
        %v1346 = vpack.c.b16 %v1298, %v1294
        %v1347 = vpack.c.b16 %v1299, %v1295
        %v1348 = vpack.c.b16 %v1300, %v1296
        %v1349 = vpack.c.b16 %v1305, %v1301
        %v1350 = vpack.c.b16 %v1306, %v1302
        %v1351 = vpack.c.b16 %v1307, %v1303
        %v1352 = vpack.c.b16 %v1308, %v1304
        %v1353 = vpack.c.b16 %v1313, %v1309
        %v1354 = vpack.c.b16 %v1314, %v1310
        %v1355 = vpack.c.b16 %v1315, %v1311
        %v1356 = vpack.c.b16 %v1316, %v1312
        %v1357 = vpack.c.b16 %v1321, %v1317
        %v1358 = vpack.c.b16 %v1322, %v1318
        %v1359 = vpack.c.b16 %v1323, %v1319
        %v1360 = vpack.c.b16 %v1324, %v1320
        %vm1397 = vcmask 130048
        %v1399 = vsel %vm1397, %v1215, 0
        %1401 = vmatprep.subr.bf16.mxu0 %v1354
        %1402 = vmatpush1.bf16.msra.mxu0 %v1353
        %1403 = vmatprep.subr.bf16.mxu0 %v1350
        %1404 = vmatpush1.bf16.msra.mxu0 %v1349
        %1405 = vmatprep.subr.bf16.mxu0 %v1346
        %1406 = vmatpush1.bf16.msra.mxu0 %v1345
        %1407 = vmatprep.subr.bf16.mxu0 %v1342
        %1408 = vmatpush1.bf16.msra.mxu0 %v1341
        %1409 = vmatprep.subr.bf16.mxu0 %v1338
        %1410 = vmatpush1.bf16.msra.mxu0 %v1337
        %1411 = vmatprep.subr.bf16.mxu0 %v1334
        %1412 = vmatpush1.bf16.msra.mxu0 %v1333
        %1413 = vmatprep.subr.bf16.mxu0 %v1330
        %1414 = vmatpush1.bf16.msra.mxu0 %v1329
        %1415 = vmatprep.subr.bf16.mxu0 %v1326
        %1416 = vmatpush1.bf16.msra.mxu0 %v1325
        %1417 = vmatprep.subr.bf16.mxu0 0
        %1418 = vmatpush2.bf16.msra.mxu0 0
        %1419 = vmatprep.subr.bf16.mxu0 0
        %1420 = vmatpush2.bf16.msra.mxu0 0
        %1421 = vmatprep.subr.bf16.mxu0 0
        %1422 = vmatpush2.bf16.msra.mxu0 0
        %1423 = vmatprep.subr.bf16.mxu0 0
        %1424 = vmatpush2.bf16.msra.mxu0 0
        %1425 = vmatprep.subr.bf16.mxu0 0
        %1426 = vmatpush2.bf16.msra.mxu0 0
        %1427 = vmatprep.subr.bf16.mxu0 0
        %1428 = vmatpush2.bf16.msra.mxu0 0
        %1429 = vmatprep.subr.bf16.mxu0 0
        %1430 = vmatpush2.bf16.msra.mxu0 0
        %1431 = vmatprep.subr.bf16.mxu0 %v1358
        %1432 = vmatpush2.bf16.msra.mxu0 %v1357
        %1433 = vmatprep.mubr.bf16.mxu0 %v1399
        %1434 = vmatmul.mubr.bf16.gmra.mxu0 %v1214
        %v1435 = vpop.f32.mrf.mxu0
        %v1436 = vadd.f32 %v1201, %v1435
        %v1437 = vpop.f32.mrf.mxu0
        %v1438 = vadd.f32 %v1201, %v1437
        %v1439 = vpop.f32.mrf.mxu0
        %v1440 = vadd.f32 %v1206, %v1439
        %v1441 = vpop.f32.mrf.mxu0
        %v1442 = vadd.f32 %v1206, %v1441
        %1443 = vdwg.mxu0
        %1444 = vmatprep.subr.bf16.mxu0 %v1356
        %1445 = vmatpush1.bf16.msra.mxu0 %v1355
        %1446 = vmatprep.subr.bf16.mxu0 %v1352
        %1447 = vmatpush1.bf16.msra.mxu0 %v1351
        %1448 = vmatprep.subr.bf16.mxu0 %v1348
        %1449 = vmatpush1.bf16.msra.mxu0 %v1347
        %1450 = vmatprep.subr.bf16.mxu0 %v1344
        %1451 = vmatpush1.bf16.msra.mxu0 %v1343
        %1452 = vmatprep.subr.bf16.mxu0 %v1340
        %1453 = vmatpush1.bf16.msra.mxu0 %v1339
        %1454 = vmatprep.subr.bf16.mxu0 %v1336
        %1455 = vmatpush1.bf16.msra.mxu0 %v1335
        %1456 = vmatprep.subr.bf16.mxu0 %v1332
        %1457 = vmatpush1.bf16.msra.mxu0 %v1331
        %1458 = vmatprep.subr.bf16.mxu0 %v1328
        %1459 = vmatpush1.bf16.msra.mxu0 %v1327
        %1460 = vmatprep.subr.bf16.mxu0 0
        %1461 = vmatpush2.bf16.msra.mxu0 0
        %1462 = vmatprep.subr.bf16.mxu0 0
        %1463 = vmatpush2.bf16.msra.mxu0 0
        %1464 = vmatprep.subr.bf16.mxu0 0
        %1465 = vmatpush2.bf16.msra.mxu0 0
        %1466 = vmatprep.subr.bf16.mxu0 0
        %1467 = vmatpush2.bf16.msra.mxu0 0
        %1468 = vmatprep.subr.bf16.mxu0 0
        %1469 = vmatpush2.bf16.msra.mxu0 0
        %1470 = vmatprep.subr.bf16.mxu0 0
        %1471 = vmatpush2.bf16.msra.mxu0 0
        %1472 = vmatprep.subr.bf16.mxu0 0
        %1473 = vmatpush2.bf16.msra.mxu0 0
        %1474 = vmatprep.subr.bf16.mxu0 %v1360
        %1475 = vmatpush2.bf16.msra.mxu0 %v1359
        %1476 = vmatprep.mubr.bf16.mxu0 %v1399
        %1477 = vmatmul.mubr.bf16.gmra.mxu0 %v1214
        %v1478 = vpop.f32.mrf.mxu0
        %v1479 = vadd.f32 %v1201, %v1478
        %v1480 = vpop.f32.mrf.mxu0
        %v1481 = vadd.f32 %v1201, %v1480
        %v1482 = vpop.f32.mrf.mxu0
        %v1483 = vadd.f32 %v1206, %v1482
        %v1484 = vpop.f32.mrf.mxu0
        %v1485 = vadd.f32 %v1206, %v1484
        %1486 = vdwg.mxu0
        %v1487 = vmax.f32 %v1436, 0.0
        %v1488 = vmax.f32 %v1438, 0.0
        %v1489 = vmax.f32 %v1479, 0.0
        %v1490 = vmax.f32 %v1481, 0.0
        %v1491 = vmax.f32 %v1440, 0.0
        %v1492 = vmax.f32 %v1442, 0.0
        %v1493 = vmax.f32 %v1483, 0.0
        %v1494 = vmax.f32 %v1485, 0.0
        %1495 = vst [vmem:[#allocation2 + $0x8] sm:$0xff] %v1487
        %1496 = vst [vmem:[#allocation2 + $0x10] sm:$0xff] %v1488
        %1497 = vst [vmem:[#allocation2 + $0x28] sm:$0xff] %v1491
        %1498 = vst [vmem:[#allocation2 + $0x30] sm:$0xff] %v1492
        %v1499 = vld [vmem:[#allocation2] sm:$0xff]
        %v1500 = vld [vmem:[#allocation2 + $0x8] sm:$0xff]
        %v1501 = vld [vmem:[#allocation2 + $0x10] sm:$0xff]
        %v1502 = vld [vmem:[#allocation2 + $0x20] sm:$0xff]
        %v1503 = vld [vmem:[#allocation2 + $0x28] sm:$0xff]
        %v1504 = vld [vmem:[#allocation2 + $0x30] sm:$0xff]
        %v1505 = vmul.f32 %v1499, %v294
        %v1506 = vmul.f32 %v1500, %v298
        %v1507 = vmul.f32 %v1501, %v296
        %v1508 = vmul.f32 %v1502, %v294
        %v1509 = vmul.f32 %v1503, %v298
        %v1510 = vmul.f32 %v1504, %v296
        %v1511 = vpack.c.bf16 %v1508, %v1505
        %v1512 = vpack.c.bf16 %v1509, %v1506
        %v1513 = vpack.c.bf16 %v1510, %v1507
        %v1517 = vunpack.c.l.b16 %v1511
        %v1518 = vunpack.c.l.b16 %v1512
        %v1519 = vunpack.c.l.b16 %v1513
        %v1520 = vunpack.c.h.b16 %v1511
        %v1521 = vunpack.c.h.b16 %v1512
        %v1522 = vunpack.c.h.b16 %v1513
        %v1523 = vpack.c.b16 %v1518, %v1517
        %v1524 = vpack.c.b16 %v1519, %v1519
        %v1525 = vpack.c.b16 %v1521, %v1520
        %v1526 = vpack.c.b16 %v1522, %v1522
        %1527 = vrot.lane.b32.xlu0 %v1523, 17
        %v1528 = vpop.permute.xlu0 %1527
        %1529 = vrot.lane.b32.xlu0 %v1524, 17
        %v1530 = vpop.permute.xlu0 %1529
        %1531 = vrot.lane.b32.xlu0 %v1525, 17
        %v1532 = vpop.permute.xlu0 %1531
        %1533 = vrot.lane.b32.xlu0 %v1526, 17
        %v1534 = vpop.permute.xlu0 %1533
        %v1535 = vrot.slane %v1528, 4
        %v1536 = vrot.slane %v1530, 4
        %v1537 = vrot.slane %v1532, 4
        %v1538 = vrot.slane %v1534, 4
        %v1539 = vsel %vm336, %v1535, %v1536
        %v1540 = vsel %vm338, %v1528, %v1539
        %v1541 = vsel %vm336, %v1537, %v1538
        %v1542 = vsel %vm338, %v1532, %v1541
        %1545 = vst [vmem:[#allocation3] sm:$0xff] %v1540
        %1546 = vst [vmem:[#allocation3 + $0x10] sm:$0xff] %v1542
        %v1547 = vld [vmem:[#allocation2] sm:$0xff]
        %v1548 = vld [vmem:[#allocation2 + $0x8] sm:$0xff]
        %v1549 = vld [vmem:[#allocation2 + $0x10] sm:$0xff]
        %v1550 = vld [vmem:[#allocation2 + $0x20] sm:$0xff]
        %v1551 = vld [vmem:[#allocation2 + $0x28] sm:$0xff]
        %v1552 = vld [vmem:[#allocation2 + $0x30] sm:$0xff]
        %v1553 = vpack.c.bf16 %v1550, %v1547
        %v1554 = vpack.c.bf16 %v1551, %v1548
        %v1555 = vpack.c.bf16 %v1552, %v1549
        %v1559 = vunpack.c.l.b16 %v1553
        %v1560 = vunpack.c.l.b16 %v1554
        %v1561 = vunpack.c.l.b16 %v1555
        %v1562 = vunpack.c.h.b16 %v1553
        %v1563 = vunpack.c.h.b16 %v1554
        %v1564 = vunpack.c.h.b16 %v1555
        %v1565 = vpack.c.b16 %v1560, %v1559
        %v1566 = vpack.c.b16 %v1561, %v1561
        %v1567 = vpack.c.b16 %v1563, %v1562
        %v1568 = vpack.c.b16 %v1564, %v1564
        %1569 = vrot.lane.b32.xlu0 %v1565, 16
        %v1570 = vpop.permute.xlu0 %1569
        %1571 = vrot.lane.b32.xlu0 %v1566, 16
        %v1572 = vpop.permute.xlu0 %1571
        %1573 = vrot.lane.b32.xlu0 %v1567, 16
        %v1574 = vpop.permute.xlu0 %1573
        %1575 = vrot.lane.b32.xlu0 %v1568, 16
        %v1576 = vpop.permute.xlu0 %1575
        %v1577 = vrot.slane %v1570, 4
        %v1578 = vrot.slane %v1572, 4
        %v1579 = vrot.slane %v1574, 4
        %v1580 = vrot.slane %v1576, 4
        %v1581 = vsel %vm336, %v1577, %v1578
        %v1582 = vsel %vm381, %v1570, %v1581
        %v1583 = vsel %vm336, %v1579, %v1580
        %v1584 = vsel %vm381, %v1574, %v1583
        %1587 = vst [vmem:[#allocation3 + $0x20] sm:$0xff] %v1582
        %1588 = vst [vmem:[#allocation3 + $0x30] sm:$0xff] %v1584
        %v1589 = vld [vmem:[#allocation2] sm:$0xff]
        %v1590 = vld [vmem:[#allocation2 + $0x8] sm:$0xff]
        %v1591 = vld [vmem:[#allocation2 + $0x10] sm:$0xff]
        %v1592 = vld [vmem:[#allocation2 + $0x20] sm:$0xff]
        %v1593 = vld [vmem:[#allocation2 + $0x28] sm:$0xff]
        %v1594 = vld [vmem:[#allocation2 + $0x30] sm:$0xff]
        %v1595 = vmul.f32 %v1589, %v405
        %v1596 = vmul.f32 %v1590, %v409
        %v1597 = vmul.f32 %v1591, %v407
        %v1598 = vmul.f32 %v1592, %v405
        %v1599 = vmul.f32 %v1593, %v409
        %v1600 = vmul.f32 %v1594, %v407
        %v1601 = vpack.c.bf16 %v1598, %v1595
        %v1602 = vpack.c.bf16 %v1599, %v1596
        %v1603 = vpack.c.bf16 %v1600, %v1597
        %v1607 = vunpack.c.l.b16 %v1601
        %v1608 = vunpack.c.l.b16 %v1602
        %v1609 = vunpack.c.l.b16 %v1603
        %v1610 = vunpack.c.h.b16 %v1601
        %v1611 = vunpack.c.h.b16 %v1602
        %v1612 = vunpack.c.h.b16 %v1603
        %v1613 = vpack.c.b16 %v1608, %v1607
        %v1614 = vpack.c.b16 %v1609, %v1609
        %v1615 = vpack.c.b16 %v1611, %v1610
        %v1616 = vpack.c.b16 %v1612, %v1612
        %1617 = vrot.lane.b32.xlu0 %v1613, 15
        %v1618 = vpop.permute.xlu0 %1617
        %1619 = vrot.lane.b32.xlu0 %v1614, 15
        %v1620 = vpop.permute.xlu0 %1619
        %1621 = vrot.lane.b32.xlu0 %v1615, 15
        %v1622 = vpop.permute.xlu0 %1621
        %1623 = vrot.lane.b32.xlu0 %v1616, 15
        %v1624 = vpop.permute.xlu0 %1623
        %v1625 = vrot.slane %v1618, 4
        %v1626 = vrot.slane %v1620, 4
        %v1627 = vrot.slane %v1622, 4
        %v1628 = vrot.slane %v1624, 4
        %v1629 = vsel %vm336, %v1625, %v1626
        %v1630 = vsel %vm448, %v1618, %v1629
        %v1631 = vsel %vm336, %v1627, %v1628
        %v1632 = vsel %vm448, %v1622, %v1631
        %1635 = vst [vmem:[#allocation3 + $0x40] sm:$0xff] %v1630
        %1636 = vst [vmem:[#allocation3 + $0x50] sm:$0xff] %v1632
        %v1637 = vld [vmem:[#allocation2] sm:$0xff]
        %v1638 = vld [vmem:[#allocation2 + $0x8] sm:$0xff]
        %v1639 = vld [vmem:[#allocation2 + $0x10] sm:$0xff]
        %v1640 = vld [vmem:[#allocation2 + $0x20] sm:$0xff]
        %v1641 = vld [vmem:[#allocation2 + $0x28] sm:$0xff]
        %v1642 = vld [vmem:[#allocation2 + $0x30] sm:$0xff]
        %v1643 = vmul.f32 %v1637, %v463
        %v1644 = vmul.f32 %v1638, %v467
        %v1645 = vmul.f32 %v1639, %v465
        %v1646 = vmul.f32 %v1640, %v463
        %v1647 = vmul.f32 %v1641, %v467
        %v1648 = vmul.f32 %v1642, %v465
        %v1649 = vpack.c.bf16 %v1646, %v1643
        %v1650 = vpack.c.bf16 %v1647, %v1644
        %v1651 = vpack.c.bf16 %v1648, %v1645
        %v1655 = vunpack.c.l.b16 %v1649
        %v1656 = vunpack.c.l.b16 %v1650
        %v1657 = vunpack.c.l.b16 %v1651
        %v1658 = vunpack.c.h.b16 %v1649
        %v1659 = vunpack.c.h.b16 %v1650
        %v1660 = vunpack.c.h.b16 %v1651
        %v1661 = vpack.c.b16 %v1656, %v1655
        %v1662 = vpack.c.b16 %v1657, %v1657
        %v1663 = vpack.c.b16 %v1659, %v1658
        %v1664 = vpack.c.b16 %v1660, %v1660
        %1665 = vrot.lane.b32.xlu0 %v1661, 1
        %v1666 = vpop.permute.xlu0 %1665
        %1667 = vrot.lane.b32.xlu0 %v1662, 1
        %v1668 = vpop.permute.xlu0 %1667
        %1669 = vrot.lane.b32.xlu0 %v1663, 1
        %v1670 = vpop.permute.xlu0 %1669
        %1671 = vrot.lane.b32.xlu0 %v1664, 1
        %v1672 = vpop.permute.xlu0 %1671
        %v1673 = vrot.slane %v1666, 4
        %v1674 = vrot.slane %v1668, 4
        %v1675 = vrot.slane %v1670, 4
        %v1676 = vrot.slane %v1672, 4
        %v1677 = vsel %vm336, %v1673, %v1674
        %v1678 = vsel %vm506, %v1666, %v1677
        %v1679 = vsel %vm336, %v1675, %v1676
        %v1680 = vsel %vm506, %v1670, %v1679
        %1683 = vst [vmem:[#allocation3 + $0x60] sm:$0xff] %v1678
        %1684 = vst [vmem:[#allocation3 + $0x70] sm:$0xff] %v1680
        %v1685 = vld [vmem:[#allocation2 + $0x8] sm:$0xff]
        %v1686 = vld [vmem:[#allocation2 + $0x10] sm:$0xff]
        %v1687 = vld [vmem:[#allocation2 + $0x28] sm:$0xff]
        %v1688 = vld [vmem:[#allocation2 + $0x30] sm:$0xff]
        %v1689 = vpack.c.bf16 %v1687, %v1685
        %v1690 = vpack.c.bf16 %v1688, %v1686
        %v1693 = vunpack.c.l.b16 %v1689
        %v1694 = vunpack.c.l.b16 %v1690
        %v1695 = vunpack.c.h.b16 %v1689
        %v1696 = vunpack.c.h.b16 %v1690
        %v1697 = vpack.c.b16 %v1694, %v1693
        %v1698 = vpack.c.b16 %v1696, %v1695
        %1701 = vst [vmem:[#allocation3 + $0x80] sm:$0xff] %v1697
        %1702 = vst [vmem:[#allocation3 + $0x90] sm:$0xff] %v1698
        %v1703 = vld [vmem:[#allocation2 + $0x8] sm:$0xff]
        %v1704 = vld [vmem:[#allocation2 + $0x10] sm:$0xff]
        %v1705 = vld [vmem:[#allocation2 + $0x18] sm:$0xff]
        %v1706 = vld [vmem:[#allocation2 + $0x28] sm:$0xff]
        %v1707 = vld [vmem:[#allocation2 + $0x30] sm:$0xff]
        %v1708 = vld [vmem:[#allocation2 + $0x38] sm:$0xff]
        %v1709 = vmul.f32 %v1703, %v539
        %v1710 = vmul.f32 %v1704, %v543
        %v1711 = vmul.f32 %v1705, %v541
        %v1712 = vmul.f32 %v1706, %v539
        %v1713 = vmul.f32 %v1707, %v543
        %v1714 = vmul.f32 %v1708, %v541
        %v1715 = vpack.c.bf16 %v1712, %v1709
        %v1716 = vpack.c.bf16 %v1713, %v1710
        %v1717 = vpack.c.bf16 %v1714, %v1711
        %v1721 = vunpack.c.l.b16 %v1715
        %v1722 = vunpack.c.l.b16 %v1716
        %v1723 = vunpack.c.l.b16 %v1717
        %v1724 = vunpack.c.h.b16 %v1715
        %v1725 = vunpack.c.h.b16 %v1716
        %v1726 = vunpack.c.h.b16 %v1717
        %v1727 = vpack.c.b16 %v1722, %v1721
        %v1728 = vpack.c.b16 %v1723, %v1723
        %v1729 = vpack.c.b16 %v1725, %v1724
        %v1730 = vpack.c.b16 %v1726, %v1726
        %1731 = vrot.lane.b32.xlu0 %v1727, 127
        %v1732 = vpop.permute.xlu0 %1731
        %1733 = vrot.lane.b32.xlu0 %v1728, 127
        %v1734 = vpop.permute.xlu0 %1733
        %1735 = vrot.lane.b32.xlu0 %v1729, 127
        %v1736 = vpop.permute.xlu0 %1735
        %1737 = vrot.lane.b32.xlu0 %v1730, 127
        %v1738 = vpop.permute.xlu0 %1737
        %v1739 = vrot.slane %v1732, 4
        %v1740 = vrot.slane %v1734, 4
        %v1741 = vrot.slane %v1736, 4
        %v1742 = vrot.slane %v1738, 4
        %v1743 = vsel %vm336, %v1739, %v1740
        %v1744 = vsel %vm582, %v1732, %v1743
        %v1745 = vsel %vm336, %v1741, %v1742
        %v1746 = vsel %vm582, %v1736, %v1745
        %1749 = vst [vmem:[#allocation3 + $0xa0] sm:$0xff] %v1744
        %1750 = vst [vmem:[#allocation3 + $0xb0] sm:$0xff] %v1746
        %v1751 = vld [vmem:[#allocation2 + $0x8] sm:$0xff]
        %v1752 = vld [vmem:[#allocation2 + $0x10] sm:$0xff]
        %v1753 = vld [vmem:[#allocation2 + $0x18] sm:$0xff]
        %v1754 = vld [vmem:[#allocation2 + $0x28] sm:$0xff]
        %v1755 = vld [vmem:[#allocation2 + $0x30] sm:$0xff]
        %v1756 = vld [vmem:[#allocation2 + $0x38] sm:$0xff]
        %v1757 = vmul.f32 %v1751, %v597
        %v1758 = vmul.f32 %v1752, %v601
        %v1759 = vmul.f32 %v1753, %v599
        %v1760 = vmul.f32 %v1754, %v597
        %v1761 = vmul.f32 %v1755, %v601
        %v1762 = vmul.f32 %v1756, %v599
        %v1763 = vpack.c.bf16 %v1760, %v1757
        %v1764 = vpack.c.bf16 %v1761, %v1758
        %v1765 = vpack.c.bf16 %v1762, %v1759
        %v1769 = vunpack.c.l.b16 %v1763
        %v1770 = vunpack.c.l.b16 %v1764
        %v1771 = vunpack.c.l.b16 %v1765
        %v1772 = vunpack.c.h.b16 %v1763
        %v1773 = vunpack.c.h.b16 %v1764
        %v1774 = vunpack.c.h.b16 %v1765
        %v1775 = vpack.c.b16 %v1770, %v1769
        %v1776 = vpack.c.b16 %v1771, %v1771
        %v1777 = vpack.c.b16 %v1773, %v1772
        %v1778 = vpack.c.b16 %v1774, %v1774
        %1779 = vrot.lane.b32.xlu0 %v1775, 113
        %v1780 = vpop.permute.xlu0 %1779
        %1781 = vrot.lane.b32.xlu0 %v1776, 113
        %v1782 = vpop.permute.xlu0 %1781
        %1783 = vrot.lane.b32.xlu0 %v1777, 113
        %v1784 = vpop.permute.xlu0 %1783
        %1785 = vrot.lane.b32.xlu0 %v1778, 113
        %v1786 = vpop.permute.xlu0 %1785
        %v1787 = vrot.slane %v1780, 4
        %v1788 = vrot.slane %v1782, 4
        %v1789 = vrot.slane %v1784, 4
        %v1790 = vrot.slane %v1786, 4
        %v1791 = vsel %vm336, %v1787, %v1788
        %v1792 = vsel %vm640, %v1780, %v1791
        %v1793 = vsel %vm336, %v1789, %v1790
        %v1794 = vsel %vm640, %v1784, %v1793
        %1797 = vst [vmem:[#allocation3 + $0xc0] sm:$0xff] %v1792
        %1798 = vst [vmem:[#allocation3 + $0xd0] sm:$0xff] %v1794
        %v1799 = vld [vmem:[#allocation2 + $0x8] sm:$0xff]
        %v1800 = vld [vmem:[#allocation2 + $0x10] sm:$0xff]
        %v1801 = vld [vmem:[#allocation2 + $0x18] sm:$0xff]
        %v1802 = vld [vmem:[#allocation2 + $0x28] sm:$0xff]
        %v1803 = vld [vmem:[#allocation2 + $0x30] sm:$0xff]
        %v1804 = vld [vmem:[#allocation2 + $0x38] sm:$0xff]
        %v1805 = vpack.c.bf16 %v1802, %v1799
        %v1806 = vpack.c.bf16 %v1803, %v1800
        %v1807 = vpack.c.bf16 %v1804, %v1801
        %v1811 = vunpack.c.l.b16 %v1805
        %v1812 = vunpack.c.l.b16 %v1806
        %v1813 = vunpack.c.l.b16 %v1807
        %v1814 = vunpack.c.h.b16 %v1805
        %v1815 = vunpack.c.h.b16 %v1806
        %v1816 = vunpack.c.h.b16 %v1807
        %v1817 = vpack.c.b16 %v1812, %v1811
        %v1818 = vpack.c.b16 %v1813, %v1813
        %v1819 = vpack.c.b16 %v1815, %v1814
        %v1820 = vpack.c.b16 %v1816, %v1816
        %1821 = vrot.lane.b32.xlu0 %v1817, 112
        %v1822 = vpop.permute.xlu0 %1821
        %1823 = vrot.lane.b32.xlu0 %v1818, 112
        %v1824 = vpop.permute.xlu0 %1823
        %1825 = vrot.lane.b32.xlu0 %v1819, 112
        %v1826 = vpop.permute.xlu0 %1825
        %1827 = vrot.lane.b32.xlu0 %v1820, 112
        %v1828 = vpop.permute.xlu0 %1827
        %v1829 = vrot.slane %v1822, 4
        %v1830 = vrot.slane %v1824, 4
        %v1831 = vrot.slane %v1826, 4
        %v1832 = vrot.slane %v1828, 4
        %v1833 = vsel %vm336, %v1829, %v1830
        %v1834 = vsel %vm683, %v1822, %v1833
        %v1835 = vsel %vm336, %v1831, %v1832
        %v1836 = vsel %vm683, %v1826, %v1835
        %1839 = vst [vmem:[#allocation3 + $0xe0] sm:$0xff] %v1834
        %1840 = vst [vmem:[#allocation3 + $0xf0] sm:$0xff] %v1836
        %v1841 = vld [vmem:[#allocation2 + $0x8] sm:$0xff]
        %v1842 = vld [vmem:[#allocation2 + $0x10] sm:$0xff]
        %v1843 = vld [vmem:[#allocation2 + $0x18] sm:$0xff]
        %v1844 = vld [vmem:[#allocation2 + $0x28] sm:$0xff]
        %v1845 = vld [vmem:[#allocation2 + $0x30] sm:$0xff]
        %v1846 = vld [vmem:[#allocation2 + $0x38] sm:$0xff]
        %v1847 = vmul.f32 %v1841, %v698
        %v1848 = vmul.f32 %v1842, %v702
        %v1849 = vmul.f32 %v1843, %v700
        %v1850 = vmul.f32 %v1844, %v698
        %v1851 = vmul.f32 %v1845, %v702
        %v1852 = vmul.f32 %v1846, %v700
        %v1853 = vpack.c.bf16 %v1850, %v1847
        %v1854 = vpack.c.bf16 %v1851, %v1848
        %v1855 = vpack.c.bf16 %v1852, %v1849
        %v1859 = vunpack.c.l.b16 %v1853
        %v1860 = vunpack.c.l.b16 %v1854
        %v1861 = vunpack.c.l.b16 %v1855
        %v1862 = vunpack.c.h.b16 %v1853
        %v1863 = vunpack.c.h.b16 %v1854
        %v1864 = vunpack.c.h.b16 %v1855
        %v1865 = vpack.c.b16 %v1860, %v1859
        %v1866 = vpack.c.b16 %v1861, %v1861
        %v1867 = vpack.c.b16 %v1863, %v1862
        %v1868 = vpack.c.b16 %v1864, %v1864
        %1869 = vrot.lane.b32.xlu0 %v1865, 111
        %v1870 = vpop.permute.xlu0 %1869
        %1871 = vrot.lane.b32.xlu0 %v1866, 111
        %v1872 = vpop.permute.xlu0 %1871
        %1873 = vrot.lane.b32.xlu0 %v1867, 111
        %v1874 = vpop.permute.xlu0 %1873
        %1875 = vrot.lane.b32.xlu0 %v1868, 111
        %v1876 = vpop.permute.xlu0 %1875
        %v1877 = vrot.slane %v1870, 4
        %v1878 = vrot.slane %v1872, 4
        %v1879 = vrot.slane %v1874, 4
        %v1880 = vrot.slane %v1876, 4
        %v1881 = vsel %vm336, %v1877, %v1878
        %v1882 = vsel %vm741, %v1870, %v1881
        %v1883 = vsel %vm336, %v1879, %v1880
        %v1884 = vsel %vm741, %v1874, %v1883
        %1887 = vst [vmem:[#allocation3 + $0x100] sm:$0xff] %v1882
        %1888 = vst [vmem:[#allocation3 + $0x110] sm:$0xff] %v1884
        %1889 = vst [vmem:[#allocation2 + $0x8] sm:$0xff] %v1489
        %1890 = vst [vmem:[#allocation2 + $0x10] sm:$0xff] %v1490
        %1891 = vst [vmem:[#allocation2 + $0x28] sm:$0xff] %v1493
        %1892 = vst [vmem:[#allocation2 + $0x30] sm:$0xff] %v1494
        %v1893 = vld [vmem:[#allocation2] sm:$0xff]
        %v1894 = vld [vmem:[#allocation2 + $0x8] sm:$0xff]
        %v1895 = vld [vmem:[#allocation2 + $0x10] sm:$0xff]
        %v1896 = vld [vmem:[#allocation2 + $0x20] sm:$0xff]
        %v1897 = vld [vmem:[#allocation2 + $0x28] sm:$0xff]
        %v1898 = vld [vmem:[#allocation2 + $0x30] sm:$0xff]
        %v1899 = vmul.f32 %v1893, %v294
        %v1900 = vmul.f32 %v1894, %v298
        %v1901 = vmul.f32 %v1895, %v296
        %v1902 = vmul.f32 %v1896, %v294
        %v1903 = vmul.f32 %v1897, %v298
        %v1904 = vmul.f32 %v1898, %v296
        %v1905 = vpack.c.bf16 %v1902, %v1899
        %v1906 = vpack.c.bf16 %v1903, %v1900
        %v1907 = vpack.c.bf16 %v1904, %v1901
        %v1911 = vunpack.c.l.b16 %v1905
        %v1912 = vunpack.c.l.b16 %v1906
        %v1913 = vunpack.c.l.b16 %v1907
        %v1914 = vunpack.c.h.b16 %v1905
        %v1915 = vunpack.c.h.b16 %v1906
        %v1916 = vunpack.c.h.b16 %v1907
        %v1917 = vpack.c.b16 %v1912, %v1911
        %v1918 = vpack.c.b16 %v1913, %v1913
        %v1919 = vpack.c.b16 %v1915, %v1914
        %v1920 = vpack.c.b16 %v1916, %v1916
        %1921 = vrot.lane.b32.xlu0 %v1917, 17
        %v1922 = vpop.permute.xlu0 %1921
        %1923 = vrot.lane.b32.xlu0 %v1918, 17
        %v1924 = vpop.permute.xlu0 %1923
        %1925 = vrot.lane.b32.xlu0 %v1919, 17
        %v1926 = vpop.permute.xlu0 %1925
        %1927 = vrot.lane.b32.xlu0 %v1920, 17
        %v1928 = vpop.permute.xlu0 %1927
        %v1929 = vrot.slane %v1922, 4
        %v1930 = vrot.slane %v1924, 4
        %v1931 = vrot.slane %v1926, 4
        %v1932 = vrot.slane %v1928, 4
        %v1933 = vsel %vm336, %v1929, %v1930
        %v1934 = vsel %vm338, %v1922, %v1933
        %v1935 = vsel %vm336, %v1931, %v1932
        %v1936 = vsel %vm338, %v1926, %v1935
        %1939 = vst [vmem:[#allocation3 + $0x8] sm:$0xff] %v1934
        %1940 = vst [vmem:[#allocation3 + $0x18] sm:$0xff] %v1936
        %v1941 = vld [vmem:[#allocation2] sm:$0xff]
        %v1942 = vld [vmem:[#allocation2 + $0x8] sm:$0xff]
        %v1943 = vld [vmem:[#allocation2 + $0x10] sm:$0xff]
        %v1944 = vld [vmem:[#allocation2 + $0x20] sm:$0xff]
        %v1945 = vld [vmem:[#allocation2 + $0x28] sm:$0xff]
        %v1946 = vld [vmem:[#allocation2 + $0x30] sm:$0xff]
        %v1947 = vpack.c.bf16 %v1944, %v1941
        %v1948 = vpack.c.bf16 %v1945, %v1942
        %v1949 = vpack.c.bf16 %v1946, %v1943
        %v1953 = vunpack.c.l.b16 %v1947
        %v1954 = vunpack.c.l.b16 %v1948
        %v1955 = vunpack.c.l.b16 %v1949
        %v1956 = vunpack.c.h.b16 %v1947
        %v1957 = vunpack.c.h.b16 %v1948
        %v1958 = vunpack.c.h.b16 %v1949
        %v1959 = vpack.c.b16 %v1954, %v1953
        %v1960 = vpack.c.b16 %v1955, %v1955
        %v1961 = vpack.c.b16 %v1957, %v1956
        %v1962 = vpack.c.b16 %v1958, %v1958
        %1963 = vrot.lane.b32.xlu0 %v1959, 16
        %v1964 = vpop.permute.xlu0 %1963
        %1965 = vrot.lane.b32.xlu0 %v1960, 16
        %v1966 = vpop.permute.xlu0 %1965
        %1967 = vrot.lane.b32.xlu0 %v1961, 16
        %v1968 = vpop.permute.xlu0 %1967
        %1969 = vrot.lane.b32.xlu0 %v1962, 16
        %v1970 = vpop.permute.xlu0 %1969
        %v1971 = vrot.slane %v1964, 4
        %v1972 = vrot.slane %v1966, 4
        %v1973 = vrot.slane %v1968, 4
        %v1974 = vrot.slane %v1970, 4
        %v1975 = vsel %vm336, %v1971, %v1972
        %v1976 = vsel %vm381, %v1964, %v1975
        %v1977 = vsel %vm336, %v1973, %v1974
        %v1978 = vsel %vm381, %v1968, %v1977
        %1981 = vst [vmem:[#allocation3 + $0x28] sm:$0xff] %v1976
        %1982 = vst [vmem:[#allocation3 + $0x38] sm:$0xff] %v1978
        %v1983 = vld [vmem:[#allocation2] sm:$0xff]
        %v1984 = vld [vmem:[#allocation2 + $0x8] sm:$0xff]
        %v1985 = vld [vmem:[#allocation2 + $0x10] sm:$0xff]
        %v1986 = vld [vmem:[#allocation2 + $0x20] sm:$0xff]
        %v1987 = vld [vmem:[#allocation2 + $0x28] sm:$0xff]
        %v1988 = vld [vmem:[#allocation2 + $0x30] sm:$0xff]
        %v1989 = vmul.f32 %v1983, %v405
        %v1990 = vmul.f32 %v1984, %v409
        %v1991 = vmul.f32 %v1985, %v407
        %v1992 = vmul.f32 %v1986, %v405
        %v1993 = vmul.f32 %v1987, %v409
        %v1994 = vmul.f32 %v1988, %v407
        %v1995 = vpack.c.bf16 %v1992, %v1989
        %v1996 = vpack.c.bf16 %v1993, %v1990
        %v1997 = vpack.c.bf16 %v1994, %v1991
        %v2001 = vunpack.c.l.b16 %v1995
        %v2002 = vunpack.c.l.b16 %v1996
        %v2003 = vunpack.c.l.b16 %v1997
        %v2004 = vunpack.c.h.b16 %v1995
        %v2005 = vunpack.c.h.b16 %v1996
        %v2006 = vunpack.c.h.b16 %v1997
        %v2007 = vpack.c.b16 %v2002, %v2001
        %v2008 = vpack.c.b16 %v2003, %v2003
        %v2009 = vpack.c.b16 %v2005, %v2004
        %v2010 = vpack.c.b16 %v2006, %v2006
        %2011 = vrot.lane.b32.xlu0 %v2007, 15
        %v2012 = vpop.permute.xlu0 %2011
        %2013 = vrot.lane.b32.xlu0 %v2008, 15
        %v2014 = vpop.permute.xlu0 %2013
        %2015 = vrot.lane.b32.xlu0 %v2009, 15
        %v2016 = vpop.permute.xlu0 %2015
        %2017 = vrot.lane.b32.xlu0 %v2010, 15
        %v2018 = vpop.permute.xlu0 %2017
        %v2019 = vrot.slane %v2012, 4
        %v2020 = vrot.slane %v2014, 4
        %v2021 = vrot.slane %v2016, 4
        %v2022 = vrot.slane %v2018, 4
        %v2023 = vsel %vm336, %v2019, %v2020
        %v2024 = vsel %vm448, %v2012, %v2023
        %v2025 = vsel %vm336, %v2021, %v2022
        %v2026 = vsel %vm448, %v2016, %v2025
        %2029 = vst [vmem:[#allocation3 + $0x48] sm:$0xff] %v2024
        %2030 = vst [vmem:[#allocation3 + $0x58] sm:$0xff] %v2026
        %v2031 = vld [vmem:[#allocation2] sm:$0xff]
        %v2032 = vld [vmem:[#allocation2 + $0x8] sm:$0xff]
        %v2033 = vld [vmem:[#allocation2 + $0x10] sm:$0xff]
        %v2034 = vld [vmem:[#allocation2 + $0x20] sm:$0xff]
        %v2035 = vld [vmem:[#allocation2 + $0x28] sm:$0xff]
        %v2036 = vld [vmem:[#allocation2 + $0x30] sm:$0xff]
        %v2037 = vmul.f32 %v2031, %v463
        %v2038 = vmul.f32 %v2032, %v467
        %v2039 = vmul.f32 %v2033, %v465
        %v2040 = vmul.f32 %v2034, %v463
        %v2041 = vmul.f32 %v2035, %v467
        %v2042 = vmul.f32 %v2036, %v465
        %v2043 = vpack.c.bf16 %v2040, %v2037
        %v2044 = vpack.c.bf16 %v2041, %v2038
        %v2045 = vpack.c.bf16 %v2042, %v2039
        %v2049 = vunpack.c.l.b16 %v2043
        %v2050 = vunpack.c.l.b16 %v2044
        %v2051 = vunpack.c.l.b16 %v2045
        %v2052 = vunpack.c.h.b16 %v2043
        %v2053 = vunpack.c.h.b16 %v2044
        %v2054 = vunpack.c.h.b16 %v2045
        %v2055 = vpack.c.b16 %v2050, %v2049
        %v2056 = vpack.c.b16 %v2051, %v2051
        %v2057 = vpack.c.b16 %v2053, %v2052
        %v2058 = vpack.c.b16 %v2054, %v2054
        %2059 = vrot.lane.b32.xlu0 %v2055, 1
        %v2060 = vpop.permute.xlu0 %2059
        %2061 = vrot.lane.b32.xlu0 %v2056, 1
        %v2062 = vpop.permute.xlu0 %2061
        %2063 = vrot.lane.b32.xlu0 %v2057, 1
        %v2064 = vpop.permute.xlu0 %2063
        %2065 = vrot.lane.b32.xlu0 %v2058, 1
        %v2066 = vpop.permute.xlu0 %2065
        %v2067 = vrot.slane %v2060, 4
        %v2068 = vrot.slane %v2062, 4
        %v2069 = vrot.slane %v2064, 4
        %v2070 = vrot.slane %v2066, 4
        %v2071 = vsel %vm336, %v2067, %v2068
        %v2072 = vsel %vm506, %v2060, %v2071
        %v2073 = vsel %vm336, %v2069, %v2070
        %v2074 = vsel %vm506, %v2064, %v2073
        %2077 = vst [vmem:[#allocation3 + $0x68] sm:$0xff] %v2072
        %2078 = vst [vmem:[#allocation3 + $0x78] sm:$0xff] %v2074
        %v2079 = vld [vmem:[#allocation2 + $0x8] sm:$0xff]
        %v2080 = vld [vmem:[#allocation2 + $0x10] sm:$0xff]
        %v2081 = vld [vmem:[#allocation2 + $0x28] sm:$0xff]
        %v2082 = vld [vmem:[#allocation2 + $0x30] sm:$0xff]
        %v2083 = vpack.c.bf16 %v2081, %v2079
        %v2084 = vpack.c.bf16 %v2082, %v2080
        %v2087 = vunpack.c.l.b16 %v2083
        %v2088 = vunpack.c.l.b16 %v2084
        %v2089 = vunpack.c.h.b16 %v2083
        %v2090 = vunpack.c.h.b16 %v2084
        %v2091 = vpack.c.b16 %v2088, %v2087
        %v2092 = vpack.c.b16 %v2090, %v2089
        %2095 = vst [vmem:[#allocation3 + $0x88] sm:$0xff] %v2091
        %2096 = vst [vmem:[#allocation3 + $0x98] sm:$0xff] %v2092
        %v2097 = vld [vmem:[#allocation2 + $0x8] sm:$0xff]
        %v2098 = vld [vmem:[#allocation2 + $0x10] sm:$0xff]
        %v2099 = vld [vmem:[#allocation2 + $0x18] sm:$0xff]
        %v2100 = vld [vmem:[#allocation2 + $0x28] sm:$0xff]
        %v2101 = vld [vmem:[#allocation2 + $0x30] sm:$0xff]
        %v2102 = vld [vmem:[#allocation2 + $0x38] sm:$0xff]
        %v2103 = vmul.f32 %v2097, %v539
        %v2104 = vmul.f32 %v2098, %v543
        %v2105 = vmul.f32 %v2099, %v541
        %v2106 = vmul.f32 %v2100, %v539
        %v2107 = vmul.f32 %v2101, %v543
        %v2108 = vmul.f32 %v2102, %v541
        %v2109 = vpack.c.bf16 %v2106, %v2103
        %v2110 = vpack.c.bf16 %v2107, %v2104
        %v2111 = vpack.c.bf16 %v2108, %v2105
        %v2115 = vunpack.c.l.b16 %v2109
        %v2116 = vunpack.c.l.b16 %v2110
        %v2117 = vunpack.c.l.b16 %v2111
        %v2118 = vunpack.c.h.b16 %v2109
        %v2119 = vunpack.c.h.b16 %v2110
        %v2120 = vunpack.c.h.b16 %v2111
        %v2121 = vpack.c.b16 %v2116, %v2115
        %v2122 = vpack.c.b16 %v2117, %v2117
        %v2123 = vpack.c.b16 %v2119, %v2118
        %v2124 = vpack.c.b16 %v2120, %v2120
        %2125 = vrot.lane.b32.xlu0 %v2121, 127
        %v2126 = vpop.permute.xlu0 %2125
        %2127 = vrot.lane.b32.xlu0 %v2122, 127
        %v2128 = vpop.permute.xlu0 %2127
        %2129 = vrot.lane.b32.xlu0 %v2123, 127
        %v2130 = vpop.permute.xlu0 %2129
        %2131 = vrot.lane.b32.xlu0 %v2124, 127
        %v2132 = vpop.permute.xlu0 %2131
        %v2133 = vrot.slane %v2126, 4
        %v2134 = vrot.slane %v2128, 4
        %v2135 = vrot.slane %v2130, 4
        %v2136 = vrot.slane %v2132, 4
        %v2137 = vsel %vm336, %v2133, %v2134
        %v2138 = vsel %vm582, %v2126, %v2137
        %v2139 = vsel %vm336, %v2135, %v2136
        %v2140 = vsel %vm582, %v2130, %v2139
        %2143 = vst [vmem:[#allocation3 + $0xa8] sm:$0xff] %v2138
        %2144 = vst [vmem:[#allocation3 + $0xb8] sm:$0xff] %v2140
        %v2145 = vld [vmem:[#allocation2 + $0x8] sm:$0xff]
        %v2146 = vld [vmem:[#allocation2 + $0x10] sm:$0xff]
        %v2147 = vld [vmem:[#allocation2 + $0x18] sm:$0xff]
        %v2148 = vld [vmem:[#allocation2 + $0x28] sm:$0xff]
        %v2149 = vld [vmem:[#allocation2 + $0x30] sm:$0xff]
        %v2150 = vld [vmem:[#allocation2 + $0x38] sm:$0xff]
        %v2151 = vmul.f32 %v2145, %v597
        %v2152 = vmul.f32 %v2146, %v601
        %v2153 = vmul.f32 %v2147, %v599
        %v2154 = vmul.f32 %v2148, %v597
        %v2155 = vmul.f32 %v2149, %v601
        %v2156 = vmul.f32 %v2150, %v599
        %v2157 = vpack.c.bf16 %v2154, %v2151
        %v2158 = vpack.c.bf16 %v2155, %v2152
        %v2159 = vpack.c.bf16 %v2156, %v2153
        %v2163 = vunpack.c.l.b16 %v2157
        %v2164 = vunpack.c.l.b16 %v2158
        %v2165 = vunpack.c.l.b16 %v2159
        %v2166 = vunpack.c.h.b16 %v2157
        %v2167 = vunpack.c.h.b16 %v2158
        %v2168 = vunpack.c.h.b16 %v2159
        %v2169 = vpack.c.b16 %v2164, %v2163
        %v2170 = vpack.c.b16 %v2165, %v2165
        %v2171 = vpack.c.b16 %v2167, %v2166
        %v2172 = vpack.c.b16 %v2168, %v2168
        %2173 = vrot.lane.b32.xlu0 %v2169, 113
        %v2174 = vpop.permute.xlu0 %2173
        %2175 = vrot.lane.b32.xlu0 %v2170, 113
        %v2176 = vpop.permute.xlu0 %2175
        %2177 = vrot.lane.b32.xlu0 %v2171, 113
        %v2178 = vpop.permute.xlu0 %2177
        %2179 = vrot.lane.b32.xlu0 %v2172, 113
        %v2180 = vpop.permute.xlu0 %2179
        %v2181 = vrot.slane %v2174, 4
        %v2182 = vrot.slane %v2176, 4
        %v2183 = vrot.slane %v2178, 4
        %v2184 = vrot.slane %v2180, 4
        %v2185 = vsel %vm336, %v2181, %v2182
        %v2186 = vsel %vm640, %v2174, %v2185
        %v2187 = vsel %vm336, %v2183, %v2184
        %v2188 = vsel %vm640, %v2178, %v2187
        %2191 = vst [vmem:[#allocation3 + $0xc8] sm:$0xff] %v2186
        %2192 = vst [vmem:[#allocation3 + $0xd8] sm:$0xff] %v2188
        %v2193 = vld [vmem:[#allocation2 + $0x8] sm:$0xff]
        %v2194 = vld [vmem:[#allocation2 + $0x10] sm:$0xff]
        %v2195 = vld [vmem:[#allocation2 + $0x18] sm:$0xff]
        %v2196 = vld [vmem:[#allocation2 + $0x28] sm:$0xff]
        %v2197 = vld [vmem:[#allocation2 + $0x30] sm:$0xff]
        %v2198 = vld [vmem:[#allocation2 + $0x38] sm:$0xff]
        %v2199 = vpack.c.bf16 %v2196, %v2193
        %v2200 = vpack.c.bf16 %v2197, %v2194
        %v2201 = vpack.c.bf16 %v2198, %v2195
        %v2205 = vunpack.c.l.b16 %v2199
        %v2206 = vunpack.c.l.b16 %v2200
        %v2207 = vunpack.c.l.b16 %v2201
        %v2208 = vunpack.c.h.b16 %v2199
        %v2209 = vunpack.c.h.b16 %v2200
        %v2210 = vunpack.c.h.b16 %v2201
        %v2211 = vpack.c.b16 %v2206, %v2205
        %v2212 = vpack.c.b16 %v2207, %v2207
        %v2213 = vpack.c.b16 %v2209, %v2208
        %v2214 = vpack.c.b16 %v2210, %v2210
        %2215 = vrot.lane.b32.xlu0 %v2211, 112
        %v2216 = vpop.permute.xlu0 %2215
        %2217 = vrot.lane.b32.xlu0 %v2212, 112
        %v2218 = vpop.permute.xlu0 %2217
        %2219 = vrot.lane.b32.xlu0 %v2213, 112
        %v2220 = vpop.permute.xlu0 %2219
        %2221 = vrot.lane.b32.xlu0 %v2214, 112
        %v2222 = vpop.permute.xlu0 %2221
        %v2223 = vrot.slane %v2216, 4
        %v2224 = vrot.slane %v2218, 4
        %v2225 = vrot.slane %v2220, 4
        %v2226 = vrot.slane %v2222, 4
        %v2227 = vsel %vm336, %v2223, %v2224
        %v2228 = vsel %vm683, %v2216, %v2227
        %v2229 = vsel %vm336, %v2225, %v2226
        %v2230 = vsel %vm683, %v2220, %v2229
        %2233 = vst [vmem:[#allocation3 + $0xe8] sm:$0xff] %v2228
        %2234 = vst [vmem:[#allocation3 + $0xf8] sm:$0xff] %v2230
        %v2235 = vld [vmem:[#allocation2 + $0x8] sm:$0xff]
        %v2236 = vld [vmem:[#allocation2 + $0x10] sm:$0xff]
        %v2237 = vld [vmem:[#allocation2 + $0x18] sm:$0xff]
        %v2238 = vld [vmem:[#allocation2 + $0x28] sm:$0xff]
        %v2239 = vld [vmem:[#allocation2 + $0x30] sm:$0xff]
        %v2240 = vld [vmem:[#allocation2 + $0x38] sm:$0xff]
        %v2241 = vmul.f32 %v2235, %v698
        %v2242 = vmul.f32 %v2236, %v702
        %v2243 = vmul.f32 %v2237, %v700
        %v2244 = vmul.f32 %v2238, %v698
        %v2245 = vmul.f32 %v2239, %v702
        %v2246 = vmul.f32 %v2240, %v700
        %v2247 = vpack.c.bf16 %v2244, %v2241
        %v2248 = vpack.c.bf16 %v2245, %v2242
        %v2249 = vpack.c.bf16 %v2246, %v2243
        %v2253 = vunpack.c.l.b16 %v2247
        %v2254 = vunpack.c.l.b16 %v2248
        %v2255 = vunpack.c.l.b16 %v2249
        %v2256 = vunpack.c.h.b16 %v2247
        %v2257 = vunpack.c.h.b16 %v2248
        %v2258 = vunpack.c.h.b16 %v2249
        %v2259 = vpack.c.b16 %v2254, %v2253
        %v2260 = vpack.c.b16 %v2255, %v2255
        %v2261 = vpack.c.b16 %v2257, %v2256
        %v2262 = vpack.c.b16 %v2258, %v2258
        %2263 = vrot.lane.b32.xlu0 %v2259, 111
        %v2264 = vpop.permute.xlu0 %2263
        %2265 = vrot.lane.b32.xlu0 %v2260, 111
        %v2266 = vpop.permute.xlu0 %2265
        %2267 = vrot.lane.b32.xlu0 %v2261, 111
        %v2268 = vpop.permute.xlu0 %2267
        %2269 = vrot.lane.b32.xlu0 %v2262, 111
        %v2270 = vpop.permute.xlu0 %2269
        %v2271 = vrot.slane %v2264, 4
        %v2272 = vrot.slane %v2266, 4
        %v2273 = vrot.slane %v2268, 4
        %v2274 = vrot.slane %v2270, 4
        %v2275 = vsel %vm336, %v2271, %v2272
        %v2276 = vsel %vm741, %v2264, %v2275
        %v2277 = vsel %vm336, %v2273, %v2274
        %v2278 = vsel %vm741, %v2268, %v2277
        %2281 = vst [vmem:[#allocation3 + $0x108] sm:$0xff] %v2276
        %2282 = vst [vmem:[#allocation3 + $0x118] sm:$0xff] %v2278
        %s2283 = scalar_lea.vmem %s1, 16
        %v2284 = vld [vmem:[%s2283] sm:$0xff]
        %v2285 = vld [vmem:[%s2283 + $0x8] sm:$0xff]
        %v2286 = vld [vmem:[#allocation3] sm:$0xff]
        %v2287 = vld [vmem:[#allocation3 + $0x8] sm:$0xff]
        %v2288 = vld [vmem:[#allocation3 + $0x10] sm:$0xff]
        %v2289 = vld [vmem:[#allocation3 + $0x18] sm:$0xff]
        %v2290 = vld [vmem:[#allocation3 + $0x20] sm:$0xff]
        %v2291 = vld [vmem:[#allocation3 + $0x28] sm:$0xff]
        %v2292 = vld [vmem:[#allocation3 + $0x30] sm:$0xff]
        %v2293 = vld [vmem:[#allocation3 + $0x38] sm:$0xff]
        %v2294 = vld [vmem:[#allocation3 + $0x40] sm:$0xff]
        %v2295 = vld [vmem:[#allocation3 + $0x48] sm:$0xff]
        %v2296 = vld [vmem:[#allocation3 + $0x50] sm:$0xff]
        %v2297 = vld [vmem:[#allocation3 + $0x58] sm:$0xff]
        %v2298 = vld [vmem:[#allocation3 + $0x60] sm:$0xff]
        %v2299 = vld [vmem:[#allocation3 + $0x68] sm:$0xff]
        %v2300 = vld [vmem:[#allocation3 + $0x70] sm:$0xff]
        %v2301 = vld [vmem:[#allocation3 + $0x78] sm:$0xff]
        %v2302 = vld [vmem:[#allocation3 + $0x80] sm:$0xff]
        %v2303 = vld [vmem:[#allocation3 + $0x88] sm:$0xff]
        %v2304 = vld [vmem:[#allocation3 + $0x90] sm:$0xff]
        %v2305 = vld [vmem:[#allocation3 + $0x98] sm:$0xff]
        %v2306 = vld [vmem:[#allocation3 + $0xa0] sm:$0xff]
        %v2307 = vld [vmem:[#allocation3 + $0xa8] sm:$0xff]
        %v2308 = vld [vmem:[#allocation3 + $0xb0] sm:$0xff]
        %v2309 = vld [vmem:[#allocation3 + $0xb8] sm:$0xff]
        %v2310 = vld [vmem:[#allocation3 + $0xc0] sm:$0xff]
        %v2311 = vld [vmem:[#allocation3 + $0xc8] sm:$0xff]
        %v2312 = vld [vmem:[#allocation3 + $0xd0] sm:$0xff]
        %v2313 = vld [vmem:[#allocation3 + $0xd8] sm:$0xff]
        %v2314 = vld [vmem:[#allocation3 + $0xe0] sm:$0xff]
        %v2315 = vld [vmem:[#allocation3 + $0xe8] sm:$0xff]
        %v2316 = vld [vmem:[#allocation3 + $0xf0] sm:$0xff]
        %v2317 = vld [vmem:[#allocation3 + $0xf8] sm:$0xff]
        %v2318 = vld [vmem:[#allocation3 + $0x100] sm:$0xff]
        %v2319 = vld [vmem:[#allocation3 + $0x108] sm:$0xff]
        %v2320 = vld [vmem:[#allocation3 + $0x110] sm:$0xff]
        %v2321 = vld [vmem:[#allocation3 + $0x118] sm:$0xff]
        %2323 = vset.pattern.permute.xlu0 0
        %2324 = vperm.xlu0 %2323, %v236
        %v2325 = vpop.permute.xlu0 %2324
        %2328 = vset.pattern.permute.xlu0 0
        %2329 = vperm.xlu0 %2328, %v237
        %v2330 = vpop.permute.xlu0 %2329
        %v2334 = vunpack.c.l.b16 %v2284
        %v2335 = vunpack.c.h.b16 %v2284
        %v2336 = vunpack.c.l.b16 %v2285
        %v2337 = vunpack.c.h.b16 %v2285
        %v2338 = vpack.c.b16 %v2336, %v2334
        %v2339 = vpack.c.b16 %v2337, %v2335
        %v2377 = vunpack.c.l.b16 %v2286
        %v2378 = vunpack.c.h.b16 %v2286
        %v2379 = vunpack.c.l.b16 %v2287
        %v2380 = vunpack.c.h.b16 %v2287
        %v2381 = vunpack.c.l.b16 %v2288
        %v2382 = vunpack.c.h.b16 %v2288
        %v2383 = vunpack.c.l.b16 %v2289
        %v2384 = vunpack.c.h.b16 %v2289
        %v2385 = vunpack.c.l.b16 %v2290
        %v2386 = vunpack.c.h.b16 %v2290
        %v2387 = vunpack.c.l.b16 %v2291
        %v2388 = vunpack.c.h.b16 %v2291
        %v2389 = vunpack.c.l.b16 %v2292
        %v2390 = vunpack.c.h.b16 %v2292
        %v2391 = vunpack.c.l.b16 %v2293
        %v2392 = vunpack.c.h.b16 %v2293
        %v2393 = vunpack.c.l.b16 %v2294
        %v2394 = vunpack.c.h.b16 %v2294
        %v2395 = vunpack.c.l.b16 %v2295
        %v2396 = vunpack.c.h.b16 %v2295
        %v2397 = vunpack.c.l.b16 %v2296
        %v2398 = vunpack.c.h.b16 %v2296
        %v2399 = vunpack.c.l.b16 %v2297
        %v2400 = vunpack.c.h.b16 %v2297
        %v2401 = vunpack.c.l.b16 %v2298
        %v2402 = vunpack.c.h.b16 %v2298
        %v2403 = vunpack.c.l.b16 %v2299
        %v2404 = vunpack.c.h.b16 %v2299
        %v2405 = vunpack.c.l.b16 %v2300
        %v2406 = vunpack.c.h.b16 %v2300
        %v2407 = vunpack.c.l.b16 %v2301
        %v2408 = vunpack.c.h.b16 %v2301
        %v2409 = vunpack.c.l.b16 %v2302
        %v2410 = vunpack.c.h.b16 %v2302
        %v2411 = vunpack.c.l.b16 %v2303
        %v2412 = vunpack.c.h.b16 %v2303
        %v2413 = vunpack.c.l.b16 %v2304
        %v2414 = vunpack.c.h.b16 %v2304
        %v2415 = vunpack.c.l.b16 %v2305
        %v2416 = vunpack.c.h.b16 %v2305
        %v2417 = vunpack.c.l.b16 %v2306
        %v2418 = vunpack.c.h.b16 %v2306
        %v2419 = vunpack.c.l.b16 %v2307
        %v2420 = vunpack.c.h.b16 %v2307
        %v2421 = vunpack.c.l.b16 %v2308
        %v2422 = vunpack.c.h.b16 %v2308
        %v2423 = vunpack.c.l.b16 %v2309
        %v2424 = vunpack.c.h.b16 %v2309
        %v2425 = vunpack.c.l.b16 %v2310
        %v2426 = vunpack.c.h.b16 %v2310
        %v2427 = vunpack.c.l.b16 %v2311
        %v2428 = vunpack.c.h.b16 %v2311
        %v2429 = vunpack.c.l.b16 %v2312
        %v2430 = vunpack.c.h.b16 %v2312
        %v2431 = vunpack.c.l.b16 %v2313
        %v2432 = vunpack.c.h.b16 %v2313
        %v2433 = vunpack.c.l.b16 %v2314
        %v2434 = vunpack.c.h.b16 %v2314
        %v2435 = vunpack.c.l.b16 %v2315
        %v2436 = vunpack.c.h.b16 %v2315
        %v2437 = vunpack.c.l.b16 %v2316
        %v2438 = vunpack.c.h.b16 %v2316
        %v2439 = vunpack.c.l.b16 %v2317
        %v2440 = vunpack.c.h.b16 %v2317
        %v2441 = vunpack.c.l.b16 %v2318
        %v2442 = vunpack.c.h.b16 %v2318
        %v2443 = vunpack.c.l.b16 %v2319
        %v2444 = vunpack.c.h.b16 %v2319
        %v2445 = vunpack.c.l.b16 %v2320
        %v2446 = vunpack.c.h.b16 %v2320
        %v2447 = vunpack.c.l.b16 %v2321
        %v2448 = vunpack.c.h.b16 %v2321
        %v2449 = vpack.c.b16 %v2381, %v2377
        %v2450 = vpack.c.b16 %v2382, %v2378
        %v2451 = vpack.c.b16 %v2383, %v2379
        %v2452 = vpack.c.b16 %v2384, %v2380
        %v2453 = vpack.c.b16 %v2389, %v2385
        %v2454 = vpack.c.b16 %v2390, %v2386
        %v2455 = vpack.c.b16 %v2391, %v2387
        %v2456 = vpack.c.b16 %v2392, %v2388
        %v2457 = vpack.c.b16 %v2397, %v2393
        %v2458 = vpack.c.b16 %v2398, %v2394
        %v2459 = vpack.c.b16 %v2399, %v2395
        %v2460 = vpack.c.b16 %v2400, %v2396
        %v2461 = vpack.c.b16 %v2405, %v2401
        %v2462 = vpack.c.b16 %v2406, %v2402
        %v2463 = vpack.c.b16 %v2407, %v2403
        %v2464 = vpack.c.b16 %v2408, %v2404
        %v2465 = vpack.c.b16 %v2413, %v2409
        %v2466 = vpack.c.b16 %v2414, %v2410
        %v2467 = vpack.c.b16 %v2415, %v2411
        %v2468 = vpack.c.b16 %v2416, %v2412
        %v2469 = vpack.c.b16 %v2421, %v2417
        %v2470 = vpack.c.b16 %v2422, %v2418
        %v2471 = vpack.c.b16 %v2423, %v2419
        %v2472 = vpack.c.b16 %v2424, %v2420
        %v2473 = vpack.c.b16 %v2429, %v2425
        %v2474 = vpack.c.b16 %v2430, %v2426
        %v2475 = vpack.c.b16 %v2431, %v2427
        %v2476 = vpack.c.b16 %v2432, %v2428
        %v2477 = vpack.c.b16 %v2437, %v2433
        %v2478 = vpack.c.b16 %v2438, %v2434
        %v2479 = vpack.c.b16 %v2439, %v2435
        %v2480 = vpack.c.b16 %v2440, %v2436
        %v2481 = vpack.c.b16 %v2445, %v2441
        %v2482 = vpack.c.b16 %v2446, %v2442
        %v2483 = vpack.c.b16 %v2447, %v2443
        %v2484 = vpack.c.b16 %v2448, %v2444
        %v2522 = vsel %vm1397, %v2339, 0
        %2524 = vmatprep.subr.bf16.mxu0 %v2478
        %2525 = vmatpush1.bf16.msra.mxu0 %v2477
        %2526 = vmatprep.subr.bf16.mxu0 %v2474
        %2527 = vmatpush1.bf16.msra.mxu0 %v2473
        %2528 = vmatprep.subr.bf16.mxu0 %v2470
        %2529 = vmatpush1.bf16.msra.mxu0 %v2469
        %2530 = vmatprep.subr.bf16.mxu0 %v2466
        %2531 = vmatpush1.bf16.msra.mxu0 %v2465
        %2532 = vmatprep.subr.bf16.mxu0 %v2462
        %2533 = vmatpush1.bf16.msra.mxu0 %v2461
        %2534 = vmatprep.subr.bf16.mxu0 %v2458
        %2535 = vmatpush1.bf16.msra.mxu0 %v2457
        %2536 = vmatprep.subr.bf16.mxu0 %v2454
        %2537 = vmatpush1.bf16.msra.mxu0 %v2453
        %2538 = vmatprep.subr.bf16.mxu0 %v2450
        %2539 = vmatpush1.bf16.msra.mxu0 %v2449
        %2540 = vmatprep.subr.bf16.mxu0 0
        %2541 = vmatpush2.bf16.msra.mxu0 0
        %2542 = vmatprep.subr.bf16.mxu0 0
        %2543 = vmatpush2.bf16.msra.mxu0 0
        %2544 = vmatprep.subr.bf16.mxu0 0
        %2545 = vmatpush2.bf16.msra.mxu0 0
        %2546 = vmatprep.subr.bf16.mxu0 0
        %2547 = vmatpush2.bf16.msra.mxu0 0
        %2548 = vmatprep.subr.bf16.mxu0 0
        %2549 = vmatpush2.bf16.msra.mxu0 0
        %2550 = vmatprep.subr.bf16.mxu0 0
        %2551 = vmatpush2.bf16.msra.mxu0 0
        %2552 = vmatprep.subr.bf16.mxu0 0
        %2553 = vmatpush2.bf16.msra.mxu0 0
        %2554 = vmatprep.subr.bf16.mxu0 %v2482
        %2555 = vmatpush2.bf16.msra.mxu0 %v2481
        %2556 = vmatprep.mubr.bf16.mxu0 %v2522
        %2557 = vmatmul.mubr.bf16.gmra.mxu0 %v2338
        %v2558 = vpop.f32.mrf.mxu0
        %v2559 = vadd.f32 %v2325, %v2558
        %v2560 = vpop.f32.mrf.mxu0
        %v2561 = vadd.f32 %v2325, %v2560
        %v2562 = vpop.f32.mrf.mxu0
        %v2563 = vadd.f32 %v2330, %v2562
        %v2564 = vpop.f32.mrf.mxu0
        %v2565 = vadd.f32 %v2330, %v2564
        %2566 = vdwg.mxu0
        %2567 = vmatprep.subr.bf16.mxu0 %v2480
        %2568 = vmatpush1.bf16.msra.mxu0 %v2479
        %2569 = vmatprep.subr.bf16.mxu0 %v2476
        %2570 = vmatpush1.bf16.msra.mxu0 %v2475
        %2571 = vmatprep.subr.bf16.mxu0 %v2472
        %2572 = vmatpush1.bf16.msra.mxu0 %v2471
        %2573 = vmatprep.subr.bf16.mxu0 %v2468
        %2574 = vmatpush1.bf16.msra.mxu0 %v2467
        %2575 = vmatprep.subr.bf16.mxu0 %v2464
        %2576 = vmatpush1.bf16.msra.mxu0 %v2463
        %2577 = vmatprep.subr.bf16.mxu0 %v2460
        %2578 = vmatpush1.bf16.msra.mxu0 %v2459
        %2579 = vmatprep.subr.bf16.mxu0 %v2456
        %2580 = vmatpush1.bf16.msra.mxu0 %v2455
        %2581 = vmatprep.subr.bf16.mxu0 %v2452
        %2582 = vmatpush1.bf16.msra.mxu0 %v2451
        %2583 = vmatprep.subr.bf16.mxu0 0
        %2584 = vmatpush2.bf16.msra.mxu0 0
        %2585 = vmatprep.subr.bf16.mxu0 0
        %2586 = vmatpush2.bf16.msra.mxu0 0
        %2587 = vmatprep.subr.bf16.mxu0 0
        %2588 = vmatpush2.bf16.msra.mxu0 0
        %2589 = vmatprep.subr.bf16.mxu0 0
        %2590 = vmatpush2.bf16.msra.mxu0 0
        %2591 = vmatprep.subr.bf16.mxu0 0
        %2592 = vmatpush2.bf16.msra.mxu0 0
        %2593 = vmatprep.subr.bf16.mxu0 0
        %2594 = vmatpush2.bf16.msra.mxu0 0
        %2595 = vmatprep.subr.bf16.mxu0 0
        %2596 = vmatpush2.bf16.msra.mxu0 0
        %2597 = vmatprep.subr.bf16.mxu0 %v2484
        %2598 = vmatpush2.bf16.msra.mxu0 %v2483
        %2599 = vmatprep.mubr.bf16.mxu0 %v2522
        %2600 = vmatmul.mubr.bf16.gmra.mxu0 %v2338
        %v2601 = vpop.f32.mrf.mxu0
        %v2602 = vadd.f32 %v2325, %v2601
        %v2603 = vpop.f32.mrf.mxu0
        %v2604 = vadd.f32 %v2325, %v2603
        %v2605 = vpop.f32.mrf.mxu0
        %v2606 = vadd.f32 %v2330, %v2605
        %v2607 = vpop.f32.mrf.mxu0
        %v2608 = vadd.f32 %v2330, %v2607
        %2609 = vdwg.mxu0
        %v2610 = vld [vmem:[%s192] sm:$0xff]
        %v2611 = vld [vmem:[%s192 + $0x8] sm:$0xff]
        %v2612 = vld [vmem:[%s192 + $0x10] sm:$0xff]
        %v2613 = vld [vmem:[%s192 + $0x18] sm:$0xff]
        %v2614 = vadd.f32 %v2610, %v2559
        %v2615 = vadd.f32 %v2611, %v2561
        %v2616 = vadd.f32 %v2612, %v2563
        %v2617 = vadd.f32 %v2613, %v2565
        %2618 = vst [vmem:[%s216] sm:$0xff] %v2614
        %2619 = vst [vmem:[%s216 + $0x8] sm:$0xff] %v2615
        %2620 = vst [vmem:[%s216 + $0x10] sm:$0xff] %v2616
        %2621 = vst [vmem:[%s216 + $0x18] sm:$0xff] %v2617
        %v2622 = vld [vmem:[%s749] sm:$0xff]
        %v2623 = vld [vmem:[%s749 + $0x8] sm:$0xff]
        %v2624 = vld [vmem:[%s749 + $0x10] sm:$0xff]
        %v2625 = vld [vmem:[%s749 + $0x18] sm:$0xff]
        %v2626 = vadd.f32 %v2622, %v2602
        %v2627 = vadd.f32 %v2623, %v2604
        %v2628 = vadd.f32 %v2624, %v2606
        %v2629 = vadd.f32 %v2625, %v2608
        %s2630 = scalar_lea.vmem %s216, 32 [#allocation7]
        %2631 = vst [vmem:[%s2630] sm:$0xff] %v2626
        %2632 = vst [vmem:[%s2630 + $0x8] sm:$0xff] %v2627
        %2633 = vst [vmem:[%s2630 + $0x10] sm:$0xff] %v2628
        %2634 = vst [vmem:[%s2630 + $0x18] sm:$0xff] %v2629
        %s2635 = sand.u32 %s118, 1
        %s2636 = scalar_lea.sflag [#allocation6], %s2635
        %s2637 = sand.u32 %s118, 1
        %s2638 = smul.addr %s2637, 64
        %s2639 = scalar_lea.vmem [#allocation7], %s2638
        // Predicated region
        $region41: #{tpu_custom_call.1} parent=35 // pred_check
          %p2640 = pneg %p128
        $region42: #{tpu_custom_call.1} parent=35 // pred_check_branch
          %2642 = sbr.rel (%p2640) target = $region44
        $region43: #{tpu_custom_call.1} parent=35 // pred_region
          %s2643 = smul.u32 2, %s21
          %s2645 = ssub.s32 1024, 1024
          %2646 = vsyncadd %s2636, %s2645
          %s2647 = smul.addr %s2643, 4
          %s2648 = smul.addr %s2647, 128
          %s2649 = scalar_lea.hbm %s4, %s2648
          %s2650 = sshll.u32 %s2639, 4
          %s2651 = int_to_ptr.vmem [resolvable:$true] %s2650
          %2656 = dma.vmem_to_hbm [thread:$0]  %s2651, 1024, %s2649, %s2636, 256, 256, 16
        $region44: #{tpu_custom_call.1} parent=35 // pred_fallthru
          _
      $region36: #{tpu_custom_call.1} parent=5 // pred_fallthru
        _
      %p2657 = scmp.le.s32.totalorder 2, %s16
      // Predicated region
      $region45: #{tpu_custom_call.1} parent=5 // pred_check
        %p2658 = pneg %p2657
      $region46: #{tpu_custom_call.1} parent=5 // pred_check_branch
        %2660 = sbr.rel (%p2658) target = $region48
      $region47: #{tpu_custom_call.1} parent=5 // pred_region
        %s2661 = ssub.s32 %s16, 2
        // Predicated region
        $region49: #{tpu_custom_call.1} parent=47 // pred_check
          %p2662 = pneg %p134
        $region50: #{tpu_custom_call.1} parent=47 // pred_check_branch
          %2664 = sbr.rel (%p2662) target = $region52
        $region51: #{tpu_custom_call.1} parent=47 // pred_region
          %s2665 = sand.u32 %s119, 1
          %s2666 = scalar_lea.sflag [#allocation6], %s2665
          %s2667 = sand.u32 %s119, 1
          %s2668 = smul.addr %s2667, 64
          %s2669 = scalar_lea.vmem [#allocation7], %s2668
          %2670 = dma.done %s2666, 1024
        $region52: #{tpu_custom_call.1} parent=47 // pred_fallthru
          _
      $region48: #{tpu_custom_call.1} parent=5 // pred_fallthru
        _
    $region6: #{tpu_custom_call.1} parent=1 // loop_footer
      %s20 = sadd.s32 1, %s16
    $region7: #{tpu_custom_call.1} parent=1 // loop_footer_branch
      %15 = sbr.rel target = $region3
    $region8: #{tpu_custom_call.1} parent=1 // loop_exit
      _
    %2671 = vsyncpa [#allocation5], 1
    %s2672 = scalar_lea.sflag [#allocation5], 1
    %2673 = vsyncpa %s2672, 1
    %2674 = vsyncpa [#allocation6], 1
    %s2675 = scalar_lea.sflag [#allocation6], 1
    %2676 = vsyncpa %s2675, 1

</llo_original>
